<compile_context>
chip_gen: v6e
topology: v6e:2x2x1
jax: 0.10.0
libtpu: 0.0.40
codegen_flags: <defaults>
</compile_context>

<pallas_src>
import functools

import jax
import jax.numpy as jnp
from jax import lax
from jax.experimental import pallas as pl
from jax.experimental.pallas import tpu as pltpu

EPS = 1e-5                     # nn.BatchNorm2d default eps
LANE = 128
_VMEM_LIMIT = 48 * 1024 * 1024


def _round_up(x, m):
    return (x + m - 1) // m * m


def _images_per_block(n_imgs, bytes_per_img, budget=4 << 20):
    """Largest k dividing n_imgs with k * bytes_per_img <= budget (k >= 1)."""
    k = max(1, min(n_imgs, budget // max(1, bytes_per_img)))
    while n_imgs % k:
        k -= 1
    return int(k)


# ----------------------------- Pallas kernel bodies --------------------------

def _stats_kernel(x_ref, o_ref, s_ref, q_ref):
    """Accumulate per-column sum / sum-of-squares across image blocks."""
    i = pl.program_id(0)

    @pl.when(i == 0)
    def _():
        s_ref[...] = jnp.zeros_like(s_ref)
        q_ref[...] = jnp.zeros_like(q_ref)

    x = x_ref[...]                                     # (k, Hrow, Kc)
    s_ref[...] += jnp.sum(jnp.sum(x, axis=0), axis=0, keepdims=True)
    q_ref[...] += jnp.sum(jnp.sum(x * x, axis=0), axis=0, keepdims=True)

    @pl.when(i == pl.num_programs(0) - 1)
    def _():
        o_ref[0:1, :] = s_ref[...]
        o_ref[1:2, :] = q_ref[...]


def _make_bn_pool_kernel(C, Wh):
    """Fused BN + ReLU + 2x2 avg-pool of (relu(bn(x)), x) -> packed 2C output."""

    def kernel(x_ref, sc_ref, sh_ref, o_ref):
        x3 = x_ref[...]                                # (tr, 2*Wh, 2*C)
        y3 = jnp.maximum(x3 * sc_ref[...] + sh_ref[...], 0.0)

        def pool(t):
            th = t[:, :Wh, :] + t[:, Wh:, :]           # sum over h-parity
            return (th[:, :, :C] + th[:, :, C:]) * 0.25  # sum over w-parity

        o_ref[:, :, :C] = pool(y3)                     # pooled relu(bn(x))
        o_ref[:, :, C:] = pool(x3)                     # pooled raw x

    return kernel


def _make_conv_kernel(H, Wp2, Cin, cdt, apply_bn):
    """3x3 conv (stride 1, pad 1) via a VMEM im2col and ONE K=9*Cin MXU dot.

    Input is one spatially pre-padded flattened image (Lp, Cin).  When
    apply_bn=True, BN scale/shift + ReLU are applied first and the interior
    mask re-zeroes the halo so conv zero-padding stays zero.
    """
    L = H * Wp2
    offs = tuple(kh * Wp2 + kw for kh in range(3) for kw in range(3))

    def _im2col(src_ref, col_ref):
        for k, off in enumerate(offs):
            col_ref[:, k * Cin:(k + 1) * Cin] = src_ref[off:off + L, :].astype(cdt)

    if apply_bn:
        def kernel(x_ref, sc_ref, sh_ref, m_ref, w_ref, o_ref, y_ref, col_ref):
            y_ref[...] = (jnp.maximum(x_ref[...] * sc_ref[...] + sh_ref[...], 0.0)
                          * m_ref[...])
            _im2col(y_ref, col_ref)
            o_ref[...] = jnp.dot(col_ref[...], w_ref[...],
                                 preferred_element_type=jnp.float32)
    else:
        def kernel(x_ref, w_ref, o_ref, col_ref):
            _im2col(x_ref, col_ref)
            o_ref[...] = jnp.dot(col_ref[...], w_ref[...],
                                 preferred_element_type=jnp.float32)
    return kernel


# ------------------------------ kernel wrappers -------------------------------

def batch_stats(x3, n_valid, C):
    """Per-channel batch mean / biased variance from a (N, Hrow, Kc) view.

    Rows may contain zero padding (it does not change the sums); n_valid is the
    true element count per channel.
    """
    N, Hrow, Kc = x3.shape
    k = _images_per_block(N, Hrow * Kc * 4)
    sums = pl.pallas_call(
        _stats_kernel,
        out_shape=jax.ShapeDtypeStruct((2, Kc), jnp.float32),
        grid=(N // k,),
        in_specs=[pl.BlockSpec((k, Hrow, Kc), lambda i: (i, 0, 0))],
        out_specs=pl.BlockSpec((2, Kc), lambda i: (0, 0)),
        scratch_shapes=[pltpu.VMEM((1, Kc), jnp.float32),
                        pltpu.VMEM((1, Kc), jnp.float32)],
        compiler_params=pltpu.CompilerParams(
            dimension_semantics=("arbitrary",),
            vmem_limit_bytes=_VMEM_LIMIT),
    )(x3)
    per_c = sums.reshape(2, Kc // C, C).sum(axis=1)    # fold column replicas
    mean = per_c[0] / n_valid
    var = per_c[1] / n_valid - mean * mean             # biased var (train BN)
    return mean, var


def bn_relu_pool_pair(x_nhwc, scale, shift):
    """Returns (N*H/2, W/2, 2C): [pool2(relu(bn(x))) | pool2(x)] per channel."""
    N, H, W, C = x_nhwc.shape
    assert H % 2 == 0 and W % 2 == 0, "AvgPool2d(2,2) path needs even H and W"
    Hh, Wh = H // 2, W // 2
    R = N * Hh
    x3 = x_nhwc.reshape(R, 2 * Wh, 2 * C)              # free metadata reshape
    sc = jnp.tile(scale.astype(jnp.float32), 2).reshape(1, 1, 2 * C)
    sh = jnp.tile(shift.astype(jnp.float32), 2).reshape(1, 1, 2 * C)
    k = _images_per_block(N, Hh * 2 * Wh * 2 * C * 4)
    tr = k * Hh
    return pl.pallas_call(
        _make_bn_pool_kernel(C, Wh),
        out_shape=jax.ShapeDtypeStruct((R, Wh, 2 * C), jnp.float32),
        grid=(N // k,),
        in_specs=[pl.BlockSpec((tr, 2 * Wh, 2 * C), lambda i: (i, 0, 0)),
                  pl.BlockSpec((1, 1, 2 * C), lambda i: (0, 0, 0)),
                  pl.BlockSpec((1, 1, 2 * C), lambda i: (0, 0, 0))],
        out_specs=pl.BlockSpec((tr, Wh, 2 * C), lambda i: (i, 0, 0)),
        compiler_params=pltpu.CompilerParams(
            dimension_semantics=("parallel",),
            vmem_limit_bytes=_VMEM_LIMIT),
    )(x3, sc, sh)


def _conv_call(kern, inputs, in_specs, scratch, N, L, Cout_pad):
    return pl.pallas_call(
        kern,
        out_shape=jax.ShapeDtypeStruct((N, L, Cout_pad), jnp.float32),
        grid=(N,),
        in_specs=in_specs,
        out_specs=pl.BlockSpec((None, L, Cout_pad), lambda n: (n, 0, 0)),
        scratch_shapes=scratch,
        compiler_params=pltpu.CompilerParams(
            dimension_semantics=("parallel",),
            vmem_limit_bytes=_VMEM_LIMIT),
    )(*inputs)


def conv3x3_bn_relu(xp_flat, scale, shift, mask, w9, H, Wp2, Cout_pad, cdt):
    """Fused BN+ReLU -> 3x3 conv.  xp_flat: (N, Lp, C) padded flat images."""
    N, Lp, C = xp_flat.shape
    L = H * Wp2
    kern = _make_conv_kernel(H, Wp2, C, cdt, apply_bn=True)
    in_specs = [pl.BlockSpec((None, Lp, C), lambda n: (n, 0, 0)),
                pl.BlockSpec((1, C), lambda n: (0, 0)),
                pl.BlockSpec((1, C), lambda n: (0, 0)),
                pl.BlockSpec((Lp, 1), lambda n: (0, 0)),
                pl.BlockSpec((9 * C, Cout_pad), lambda n: (0, 0))]
    scratch = [pltpu.VMEM((Lp, C), jnp.float32),        # BN+ReLU result
               pltpu.VMEM((L, 9 * C), cdt)]             # im2col columns
    return _conv_call(kern, (xp_flat, scale, shift, mask, w9),
                      in_specs, scratch, N, L, Cout_pad)


def conv3x3_pair(abp_flat, wst, H, Wp2, Cout_pad, cdt):
    """conv3x3(a, w_main) + conv3x3(b, w_short) with a/b packed along channels."""
    N, Lp, Cin = abp_flat.shape
    L = H * Wp2
    kern = _make_conv_kernel(H, Wp2, Cin, cdt, apply_bn=False)
    in_specs = [pl.BlockSpec((None, Lp, Cin), lambda n: (n, 0, 0)),
                pl.BlockSpec((9 * Cin, Cout_pad), lambda n: (0, 0))]
    scratch = [pltpu.VMEM((L, 9 * Cin), cdt)]
    return _conv_call(kern, (abp_flat, wst), in_specs, scratch, N, L, Cout_pad)


# --------------------------------- JAX glue -----------------------------------

def _prep_weights(w_hwio, Cout_pad, cdt):
    KH, KW, Cin, Cout = w_hwio.shape
    wp = jnp.pad(w_hwio, ((0, 0), (0, 0), (0, 0), (0, Cout_pad - Cout)))
    return wp.reshape(KH * KW * Cin, Cout_pad).astype(cdt)


def _interior_mask(H, W, Hp, Wp2):
    m = jnp.zeros((Hp, Wp2), jnp.float32).at[1:H + 1, 1:W + 1].set(1.0)
    return m.reshape(Hp * Wp2, 1)


@functools.partial(jax.jit, static_argnums=(2, 3))
def basic_block_forward(x_nchw, params, pool, compute_dtype=jnp.float32):
    """Matches BasicBlock.forward (PyTorch NCHW in / out, train-mode BN)."""
    gamma, beta, w_main, w_short = params
    x = jnp.transpose(x_nchw, (0, 2, 3, 1)).astype(jnp.float32)   # NCHW -> NHWC
    N, H, W, C = x.shape
    Cout = w_main.shape[-1]
    Cout_pad = _round_up(Cout, LANE)
    gamma = gamma.astype(jnp.float32)
    beta = beta.astype(jnp.float32)

    if not pool:
        Wp2 = _round_up(W + 2, 8)                      # aligned padded width
        Hp = H + 3
        # transpose + pad fuse into one XLA pass; this is the only activation
        # copy materialized in HBM (stats read the same buffer).
        xp = jnp.pad(x, ((0, 0), (1, 2), (1, Wp2 - W - 1), (0, 0)))
        mean, var = batch_stats(xp.reshape(N, Hp, Wp2 * C), N * H * W, C)
        scale = gamma * lax.rsqrt(var + EPS)
        shift = beta - mean * scale
        out = conv3x3_bn_relu(
            xp.reshape(N, Hp * Wp2, C),
            scale.reshape(1, C), shift.reshape(1, C),
            _interior_mask(H, W, Hp, Wp2),
            _prep_weights(w_main, Cout_pad, compute_dtype),
            H, Wp2, Cout_pad, compute_dtype)
        out = out.reshape(N, H, Wp2, Cout_pad)[:, :, :W, :Cout]
    else:
        mean, var = batch_stats(x.reshape(N, H, W * C), N * H * W, C)
        scale = gamma * lax.rsqrt(var + EPS)
        shift = beta - mean * scale
        ab = bn_relu_pool_pair(x, scale, shift)        # (N*Hh, Wh, 2C)
        Hh, Wh = H // 2, W // 2
        Wq2 = _round_up(Wh + 2, 8)
        Hq = Hh + 3
        abp = jnp.pad(ab.reshape(N, Hh, Wh, 2 * C),
                      ((0, 0), (1, 2), (1, Wq2 - Wh - 1), (0, 0)))
        wst = _prep_weights(jnp.concatenate([w_main, w_short], axis=2),
                            Cout_pad, compute_dtype)   # (18C, Cout_pad)
        out = conv3x3_pair(abp.reshape(N, Hq * Wq2, 2 * C), wst,
                           Hh, Wq2, Cout_pad, compute_dtype)
        out = out.reshape(N, Hh, Wq2, Cout_pad)[:, :, :Wh, :Cout]

    return jnp.transpose(out, (0, 3, 1, 2))            # NHWC -> NCHW


# ------------------------------ pure-JAX reference ----------------------------

def reference_forward(x_nchw, params, pool):
    gamma, beta, w_main, w_shortcut = params
    x = jnp.transpose(x_nchw, (0, 2, 3, 1))
    mean = jnp.mean(x, axis=(0, 1, 2), keepdims=True)
    var = jnp.mean((x - mean) ** 2, axis=(0, 1, 2), keepdims=True)
    y = jnp.maximum((x - mean) / jnp.sqrt(var + EPS) * gamma + beta, 0.0)

    def conv(z, w):
        return lax.conv_general_dilated(
            z, w, window_strides=(1, 1), padding=((1, 1), (1, 1)),
            dimension_numbers=('NHWC', 'HWIO', 'NHWC'))

    def pool2(z):
        N, H, W, C = z.shape
        return z.reshape(N, H // 2, 2, W // 2, 2, C).mean(axis=(2, 4))

    if not pool:
        out = conv(y, w_main)
    else:
        out = conv(pool2(y), w_main) + conv(pool2(x), w_shortcut)
    return jnp.transpose(out, (0, 3, 1, 2))


# ------------------------------------ main ------------------------------------

if __name__ == "__main__":
    key = jax.random.PRNGKey(0)
    k_x, k_w1, k_w2 = jax.random.split(key, 3)

    N, Cin, H, W, Cout = 2, 4, 16, 16, 8
    x = jax.random.normal(k_x, (N, Cin, H, W), jnp.float32)

    # BatchNorm2d defaults: gamma=1, beta=0; conv weights scaled normal, no bias.
    gamma = jnp.ones((Cin,), jnp.float32)
    beta = jnp.zeros((Cin,), jnp.float32)
    w_main = 0.1 * jax.random.normal(k_w1, (3, 3, Cin, Cout), jnp.float32)
    w_shortcut = 0.1 * jax.random.normal(k_w2, (3, 3, Cin, Cout), jnp.float32)
    params = (gamma, beta, w_main, w_shortcut)

    for pool in (False, True):
        ref = reference_forward(x, params, pool)

        # f32 MXU feed: tight tolerance.
        out = jax.block_until_ready(
            basic_block_forward(x, params, pool, jnp.float32))
        assert out.shape == ref.shape, (out.shape, ref.shape)
        err = float(jnp.max(jnp.abs(out - ref)))
        if not err < 1e-4:
            raise AssertionError(f"f32 mismatch (pool={pool}): max |err| = {err}")

        # bf16 MXU feed (f32 accumulation): looser tolerance.
        out_bf = jax.block_until_ready(
            basic_block_forward(x, params, pool, jnp.bfloat16))
        err_bf = float(jnp.max(jnp.abs(out_bf - ref)))
        if not err_bf < 5e-2:
            raise AssertionError(
                f"bf16 mismatch (pool={pool}): max |err| = {err_bf}")

    print("KERNEL_OK")
</pallas_src>

<mosaic_0001>
module attributes {stable_mosaic.version = 11 : i64} {
  func.func @_stats_kernel(%arg0: i32, %arg1: memref<2x19x96xf32, #tpu.memory_space<vmem>>, %arg2: memref<2x96xf32, #tpu.memory_space<vmem>>, %arg3: memref<1x96xf32, #tpu.memory_space<vmem>>, %arg4: memref<1x96xf32, #tpu.memory_space<vmem>>) attributes {dimension_semantics = [#tpu.dimension_semantics<arbitrary>], iteration_bounds = array<i64: 1>, scalar_prefetch = 0 : i64, scratch_operands = 2 : i64, tpu.core_type = #tpu.core_type<tc>, window_params = [{transform_indices = @transform_0, window_bounds = array<i64: 2, 19, 96>}, {pipeline_mode = #tpu.pipeline_mode<synchronous>, transform_indices = @transform_1, window_bounds = array<i64: 2, 96>}]} {
    %c0_i32 = arith.constant 0 : i32
    %0 = arith.cmpi eq, %arg0, %c0_i32 : i32
    %1 = arith.extui %0 : i1 to i32
    %c0_i32_0 = arith.constant 0 : i32
    %2 = arith.cmpi ne, %1, %c0_i32_0 : i32
    scf.if %2 {
      %cst_16 = arith.constant 0.000000e+00 : f32
      %20 = vector.broadcast %cst_16 : f32 to vector<1x96xf32>
      %c0_17 = arith.constant 0 : index
      %c0_18 = arith.constant 0 : index
      %21 = vector.load %arg3[%c0_17, %c0_18] : memref<1x96xf32, #tpu.memory_space<vmem>>, vector<1x96xf32>
      tpu.vector_store %arg3[%c0_17, %c0_18], %20 {strides = array<i32>} : memref<1x96xf32, #tpu.memory_space<vmem>>, vector<1x96xf32>,
      %cst_19 = arith.constant 0.000000e+00 : f32
      %22 = vector.broadcast %cst_19 : f32 to vector<1x96xf32>
      %c0_20 = arith.constant 0 : index
      %c0_21 = arith.constant 0 : index
      %23 = vector.load %arg4[%c0_20, %c0_21] : memref<1x96xf32, #tpu.memory_space<vmem>>, vector<1x96xf32>
      tpu.vector_store %arg4[%c0_20, %c0_21], %22 {strides = array<i32>} : memref<1x96xf32, #tpu.memory_space<vmem>>, vector<1x96xf32>,
    } else {
    }
    %c0 = arith.constant 0 : index
    %c0_1 = arith.constant 0 : index
    %c0_2 = arith.constant 0 : index
    %3 = vector.load %arg1[%c0, %c0_1, %c0_2] : memref<2x19x96xf32, #tpu.memory_space<vmem>>, vector<2x19x96xf32>
    %c0_3 = arith.constant 0 : index
    %c0_4 = arith.constant 0 : index
    %4 = vector.load %arg3[%c0_3, %c0_4] : memref<1x96xf32, #tpu.memory_space<vmem>>, vector<1x96xf32>
    %cst = arith.constant dense<0.000000e+00> : vector<19x96xf32>
    %5 = vector.multi_reduction <add>, %3, %cst [0] : vector<2x19x96xf32> to vector<19x96xf32>
    %cst_5 = arith.constant dense<0.000000e+00> : vector<96xf32>
    %6 = vector.multi_reduction <add>, %5, %cst_5 [0] : vector<19x96xf32> to vector<96xf32>
    %7 = vector.shape_cast %6 : vector<96xf32> to vector<1x96xf32>
    %8 = arith.addf %4, %7 : vector<1x96xf32>
    %c0_6 = arith.constant 0 : index
    %c0_7 = arith.constant 0 : index
    %9 = vector.load %arg3[%c0_6, %c0_7] : memref<1x96xf32, #tpu.memory_space<vmem>>, vector<1x96xf32>
    tpu.vector_store %arg3[%c0_6, %c0_7], %8 {strides = array<i32>} : memref<1x96xf32, #tpu.memory_space<vmem>>, vector<1x96xf32>,
    %c0_8 = arith.constant 0 : index
    %c0_9 = arith.constant 0 : index
    %10 = vector.load %arg4[%c0_8, %c0_9] : memref<1x96xf32, #tpu.memory_space<vmem>>, vector<1x96xf32>
    %11 = arith.mulf %3, %3 : vector<2x19x96xf32>
    %cst_10 = arith.constant dense<0.000000e+00> : vector<19x96xf32>
    %12 = vector.multi_reduction <add>, %11, %cst_10 [0] : vector<2x19x96xf32> to vector<19x96xf32>
    %cst_11 = arith.constant dense<0.000000e+00> : vector<96xf32>
    %13 = vector.multi_reduction <add>, %12, %cst_11 [0] : vector<19x96xf32> to vector<96xf32>
    %14 = vector.shape_cast %13 : vector<96xf32> to vector<1x96xf32>
    %15 = arith.addf %10, %14 : vector<1x96xf32>
    %c0_12 = arith.constant 0 : index
    %c0_13 = arith.constant 0 : index
    %16 = vector.load %arg4[%c0_12, %c0_13] : memref<1x96xf32, #tpu.memory_space<vmem>>, vector<1x96xf32>
    tpu.vector_store %arg4[%c0_12, %c0_13], %15 {strides = array<i32>} : memref<1x96xf32, #tpu.memory_space<vmem>>, vector<1x96xf32>,
    %c0_i32_14 = arith.constant 0 : i32
    %17 = arith.cmpi eq, %arg0, %c0_i32_14 : i32
    %18 = arith.extui %17 : i1 to i32
    %c0_i32_15 = arith.constant 0 : i32
    %19 = arith.cmpi ne, %18, %c0_i32_15 : i32
    scf.if %19 {
      %c0_16 = arith.constant 0 : index
      %c0_17 = arith.constant 0 : index
      %20 = vector.load %arg3[%c0_16, %c0_17] : memref<1x96xf32, #tpu.memory_space<vmem>>, vector<1x96xf32>
      %c0_18 = arith.constant 0 : index
      %c0_19 = arith.constant 0 : index
      %21 = vector.load %arg2[%c0_18, %c0_19] : memref<2x96xf32, #tpu.memory_space<vmem>>, vector<1x96xf32>
      tpu.vector_store %arg2[%c0_18, %c0_19], %20 {strides = array<i32>} : memref<2x96xf32, #tpu.memory_space<vmem>>, vector<1x96xf32>,
      %c0_20 = arith.constant 0 : index
      %c0_21 = arith.constant 0 : index
      %22 = vector.load %arg4[%c0_20, %c0_21] : memref<1x96xf32, #tpu.memory_space<vmem>>, vector<1x96xf32>
      %c1 = arith.constant 1 : index
      %c0_22 = arith.constant 0 : index
      %23 = vector.load %arg2[%c1, %c0_22] : memref<2x96xf32, #tpu.memory_space<vmem>>, vector<1x96xf32>
      tpu.vector_store %arg2[%c1, %c0_22], %22 {strides = array<i32>} : memref<2x96xf32, #tpu.memory_space<vmem>>, vector<1x96xf32>,
    } else {
    }
    return
  }
  func.func @transform_0(%arg0: i32) -> (i32, i32, i32) {
    %c0_i32 = arith.constant 0 : i32
    %c0_i32_0 = arith.constant 0 : i32
    %c0_i32_1 = arith.constant 0 : i32
    return %arg0, %c0_i32, %c0_i32_0 : i32, i32, i32
  }
  func.func @transform_1(%arg0: i32) -> (i32, i32) {
    %c0_i32 = arith.constant 0 : i32
    %c0_i32_0 = arith.constant 0 : i32
    %c0_i32_1 = arith.constant 0 : i32
    return %c0_i32, %c0_i32_0 : i32, i32
  }
}

module attributes {stable_mosaic.version = 11 : i64} {
  func.func @kernel(%arg0: i32, %arg1: memref<1x456x4xf32, #tpu.memory_space<vmem>>, %arg2: memref<1x4xf32, #tpu.memory_space<vmem>>, %arg3: memref<1x4xf32, #tpu.memory_space<vmem>>, %arg4: memref<456x1xf32, #tpu.memory_space<vmem>>, %arg5: memref<36x128xf32, #tpu.memory_space<vmem>>, %arg6: memref<1x384x128xf32, #tpu.memory_space<vmem>>, %arg7: memref<456x4xf32, #tpu.memory_space<vmem>>, %arg8: memref<384x36xf32, #tpu.memory_space<vmem>>) attributes {dimension_semantics = [#tpu.dimension_semantics<parallel>], iteration_bounds = array<i64: 2>, scalar_prefetch = 0 : i64, scratch_operands = 2 : i64, tpu.core_type = #tpu.core_type<tc>, window_params = [{transform_indices = @transform_0, window_bounds = array<i64: 1, 456, 4>}, {pipeline_mode = #tpu.pipeline_mode<synchronous>, transform_indices = @transform_1, window_bounds = array<i64: 1, 4>}, {pipeline_mode = #tpu.pipeline_mode<synchronous>, transform_indices = @transform_2, window_bounds = array<i64: 1, 4>}, {pipeline_mode = #tpu.pipeline_mode<synchronous>, transform_indices = @transform_3, window_bounds = array<i64: 456, 1>}, {pipeline_mode = #tpu.pipeline_mode<synchronous>, transform_indices = @transform_4, window_bounds = array<i64: 36, 128>}, {transform_indices = @transform_5, window_bounds = array<i64: 1, 384, 128>}]} {
    %c0 = arith.constant 0 : index
    %c0_0 = arith.constant 0 : index
    %c0_1 = arith.constant 0 : index
    %0 = vector.load %arg1[%c0, %c0_0, %c0_1] : memref<1x456x4xf32, #tpu.memory_space<vmem>>, vector<1x456x4xf32>
    %1 = vector.shape_cast %0 : vector<1x456x4xf32> to vector<456x4xf32>
    %c0_2 = arith.constant 0 : index
    %c0_3 = arith.constant 0 : index
    %2 = vector.load %arg2[%c0_2, %c0_3] : memref<1x4xf32, #tpu.memory_space<vmem>>, vector<1x4xf32>
    %3 = vector.broadcast %2 : vector<1x4xf32> to vector<456x4xf32>
    %4 = arith.mulf %1, %3 : vector<456x4xf32>
    %c0_4 = arith.constant 0 : index
    %c0_5 = arith.constant 0 : index
    %5 = vector.load %arg3[%c0_4, %c0_5] : memref<1x4xf32, #tpu.memory_space<vmem>>, vector<1x4xf32>
    %6 = vector.broadcast %5 : vector<1x4xf32> to vector<456x4xf32>
    %7 = arith.addf %4, %6 : vector<456x4xf32>
    %cst = arith.constant 0.000000e+00 : f32
    %8 = vector.broadcast %cst : f32 to vector<456x4xf32>
    %9 = arith.maximumf %7, %8 : vector<456x4xf32>
    %c0_6 = arith.constant 0 : index
    %c0_7 = arith.constant 0 : index
    %10 = vector.load %arg4[%c0_6, %c0_7] : memref<456x1xf32, #tpu.memory_space<vmem>>, vector<456x1xf32>
    %11 = vector.broadcast %10 : vector<456x1xf32> to vector<456x4xf32>
    %12 = arith.mulf %9, %11 : vector<456x4xf32>
    %c0_8 = arith.constant 0 : index
    %c0_9 = arith.constant 0 : index
    %13 = vector.load %arg7[%c0_8, %c0_9] : memref<456x4xf32, #tpu.memory_space<vmem>>, vector<456x4xf32>
    tpu.vector_store %arg7[%c0_8, %c0_9], %12 {strides = array<i32>} : memref<456x4xf32, #tpu.memory_space<vmem>>, vector<456x4xf32>,
    %c0_10 = arith.constant 0 : index
    %c0_11 = arith.constant 0 : index
    %14 = vector.load %arg7[%c0_10, %c0_11] : memref<456x4xf32, #tpu.memory_space<vmem>>, vector<384x4xf32>
    %c0_12 = arith.constant 0 : index
    %c0_13 = arith.constant 0 : index
    %15 = vector.load %arg8[%c0_12, %c0_13] : memref<384x36xf32, #tpu.memory_space<vmem>>, vector<384x4xf32>
    tpu.vector_store %arg8[%c0_12, %c0_13], %14 {strides = array<i32>} : memref<384x36xf32, #tpu.memory_space<vmem>>, vector<384x4xf32>,
    %c1 = arith.constant 1 : index
    %c0_14 = arith.constant 0 : index
    %16 = vector.load %arg7[%c1, %c0_14] : memref<456x4xf32, #tpu.memory_space<vmem>>, vector<384x4xf32>
    %c0_15 = arith.constant 0 : index
    %c4 = arith.constant 4 : index
    %17 = vector.load %arg8[%c0_15, %c4] : memref<384x36xf32, #tpu.memory_space<vmem>>, vector<384x4xf32>
    tpu.vector_store %arg8[%c0_15, %c4], %16 {strides = array<i32>} : memref<384x36xf32, #tpu.memory_space<vmem>>, vector<384x4xf32>,
    %c2 = arith.constant 2 : index
    %c0_16 = arith.constant 0 : index
    %18 = vector.load %arg7[%c2, %c0_16] : memref<456x4xf32, #tpu.memory_space<vmem>>, vector<384x4xf32>
    %c0_17 = arith.constant 0 : index
    %c8 = arith.constant 8 : index
    %19 = vector.load %arg8[%c0_17, %c8] : memref<384x36xf32, #tpu.memory_space<vmem>>, vector<384x4xf32>
    tpu.vector_store %arg8[%c0_17, %c8], %18 {strides = array<i32>} : memref<384x36xf32, #tpu.memory_space<vmem>>, vector<384x4xf32>,
    %c24 = arith.constant 24 : index
    %c0_18 = arith.constant 0 : index
    %20 = vector.load %arg7[%c24, %c0_18] : memref<456x4xf32, #tpu.memory_space<vmem>>, vector<384x4xf32>
    %c0_19 = arith.constant 0 : index
    %c12 = arith.constant 12 : index
    %21 = vector.load %arg8[%c0_19, %c12] : memref<384x36xf32, #tpu.memory_space<vmem>>, vector<384x4xf32>
    tpu.vector_store %arg8[%c0_19, %c12], %20 {strides = array<i32>} : memref<384x36xf32, #tpu.memory_space<vmem>>, vector<384x4xf32>,
    %c25 = arith.constant 25 : index
    %c0_20 = arith.constant 0 : index
    %22 = vector.load %arg7[%c25, %c0_20] : memref<456x4xf32, #tpu.memory_space<vmem>>, vector<384x4xf32>
    %c0_21 = arith.constant 0 : index
    %c16 = arith.constant 16 : index
    %23 = vector.load %arg8[%c0_21, %c16] : memref<384x36xf32, #tpu.memory_space<vmem>>, vector<384x4xf32>
    tpu.vector_store %arg8[%c0_21, %c16], %22 {strides = array<i32>} : memref<384x36xf32, #tpu.memory_space<vmem>>, vector<384x4xf32>,
    %c26 = arith.constant 26 : index
    %c0_22 = arith.constant 0 : index
    %24 = vector.load %arg7[%c26, %c0_22] : memref<456x4xf32, #tpu.memory_space<vmem>>, vector<384x4xf32>
    %c0_23 = arith.constant 0 : index
    %c20 = arith.constant 20 : index
    %25 = vector.load %arg8[%c0_23, %c20] : memref<384x36xf32, #tpu.memory_space<vmem>>, vector<384x4xf32>
    tpu.vector_store %arg8[%c0_23, %c20], %24 {strides = array<i32>} : memref<384x36xf32, #tpu.memory_space<vmem>>, vector<384x4xf32>,
    %c48 = arith.constant 48 : index
    %c0_24 = arith.constant 0 : index
    %26 = vector.load %arg7[%c48, %c0_24] : memref<456x4xf32, #tpu.memory_space<vmem>>, vector<384x4xf32>
    %c0_25 = arith.constant 0 : index
    %c24_26 = arith.constant 24 : index
    %27 = vector.load %arg8[%c0_25, %c24_26] : memref<384x36xf32, #tpu.memory_space<vmem>>, vector<384x4xf32>
    tpu.vector_store %arg8[%c0_25, %c24_26], %26 {strides = array<i32>} : memref<384x36xf32, #tpu.memory_space<vmem>>, vector<384x4xf32>,
    %c49 = arith.constant 49 : index
    %c0_27 = arith.constant 0 : index
    %28 = vector.load %arg7[%c49, %c0_27] : memref<456x4xf32, #tpu.memory_space<vmem>>, vector<384x4xf32>
    %c0_28 = arith.constant 0 : index
    %c28 = arith.constant 28 : index
    %29 = vector.load %arg8[%c0_28, %c28] : memref<384x36xf32, #tpu.memory_space<vmem>>, vector<384x4xf32>
    tpu.vector_store %arg8[%c0_28, %c28], %28 {strides = array<i32>} : memref<384x36xf32, #tpu.memory_space<vmem>>, vector<384x4xf32>,
    %c50 = arith.constant 50 : index
    %c0_29 = arith.constant 0 : index
    %30 = vector.load %arg7[%c50, %c0_29] : memref<456x4xf32, #tpu.memory_space<vmem>>, vector<384x4xf32>
    %c0_30 = arith.constant 0 : index
    %c32 = arith.constant 32 : index
    %31 = vector.load %arg8[%c0_30, %c32] : memref<384x36xf32, #tpu.memory_space<vmem>>, vector<384x4xf32>
    tpu.vector_store %arg8[%c0_30, %c32], %30 {strides = array<i32>} : memref<384x36xf32, #tpu.memory_space<vmem>>, vector<384x4xf32>,
    %c0_31 = arith.constant 0 : index
    %c0_32 = arith.constant 0 : index
    %32 = vector.load %arg8[%c0_31, %c0_32] : memref<384x36xf32, #tpu.memory_space<vmem>>, vector<384x36xf32>
    %c0_33 = arith.constant 0 : index
    %c0_34 = arith.constant 0 : index
    %33 = vector.load %arg5[%c0_33, %c0_34] : memref<36x128xf32, #tpu.memory_space<vmem>>, vector<36x128xf32>
    %cst_35 = arith.constant dense<0.000000e+00> : vector<384x128xf32>
    %34 = tpu.matmul %32, %33, %cst_35 {dimension_numbers = #tpu.dot_dimension_numbers<[1], [0], [0], [1], [0, 0, 1, 1], [], []>} : vector<384x36xf32>, vector<36x128xf32>, vector<384x128xf32> -> vector<384x128xf32>
    %c0_36 = arith.constant 0 : index
    %c0_37 = arith.constant 0 : index
    %c0_38 = arith.constant 0 : index
    %35 = vector.load %arg6[%c0_36, %c0_37, %c0_38] : memref<1x384x128xf32, #tpu.memory_space<vmem>>, vector<1x384x128xf32>
    %36 = vector.shape_cast %35 : vector<1x384x128xf32> to vector<384x128xf32>
    %37 = vector.shape_cast %34 : vector<384x128xf32> to vector<1x384x128xf32>
    tpu.vector_store %arg6[%c0_36, %c0_37, %c0_38], %37 {strides = array<i32>} : memref<1x384x128xf32, #tpu.memory_space<vmem>>, vector<1x384x128xf32>,
    return
  }
  func.func @transform_0(%arg0: i32) -> (i32, i32, i32) {
    %c0_i32 = arith.constant 0 : i32
    %c0_i32_0 = arith.constant 0 : i32
    %c0_i32_1 = arith.constant 0 : i32
    return %arg0, %c0_i32, %c0_i32_0 : i32, i32, i32
  }
  func.func @transform_1(%arg0: i32) -> (i32, i32) {
    %c0_i32 = arith.constant 0 : i32
    %c0_i32_0 = arith.constant 0 : i32
    %c0_i32_1 = arith.constant 0 : i32
    return %c0_i32, %c0_i32_0 : i32, i32
  }
  func.func @transform_2(%arg0: i32) -> (i32, i32) {
    %c0_i32 = arith.constant 0 : i32
    %c0_i32_0 = arith.constant 0 : i32
    %c0_i32_1 = arith.constant 0 : i32
    return %c0_i32, %c0_i32_0 : i32, i32
  }
  func.func @transform_3(%arg0: i32) -> (i32, i32) {
    %c0_i32 = arith.constant 0 : i32
    %c0_i32_0 = arith.constant 0 : i32
    %c0_i32_1 = arith.constant 0 : i32
    return %c0_i32, %c0_i32_0 : i32, i32
  }
  func.func @transform_4(%arg0: i32) -> (i32, i32) {
    %c0_i32 = arith.constant 0 : i32
    %c0_i32_0 = arith.constant 0 : i32
    %c0_i32_1 = arith.constant 0 : i32
    return %c0_i32, %c0_i32_0 : i32, i32
  }
  func.func @transform_5(%arg0: i32) -> (i32, i32, i32) {
    %c0_i32 = arith.constant 0 : i32
    %c0_i32_0 = arith.constant 0 : i32
    %c0_i32_1 = arith.constant 0 : i32
    return %arg0, %c0_i32, %c0_i32_0 : i32, i32, i32
  }
}

</mosaic_0001>

<llo_original>
// kernel: basic_block_forward.2
$region0: #{basic_block_forward.2}
  #allocation0 [shape = 'u32[]', space=smem, size = 0x4, offset = 0x4, fixed_abs, tag = 'smem constant byte address 0x4 - core index']
  #allocation1 [shape = 'u32[144,128]{1,0:T(1,128)}', space=vmem, size = 0x12000, scoped, tag = 'internal scratch']
  #allocation2 [shape = 'f32[1,96]{1,0:T(1,128)}', space=vmem, size = 0x200, scoped, tag = 'scratch operand']
  #allocation3 [shape = 'f32[1,96]{1,0:T(1,128)}', space=vmem, size = 0x200, scoped, tag = 'scratch operand']
  %s0 = inlined_call_operand.vmem [shape: f32[2,19,96], index: 0, kind: input, shape index: {}]
  %s1 = inlined_call_operand.vmem [shape: f32[2,96], index: 1, kind: output, shape index: {}]
  %s2 = sld [smem:[#allocation0]]
  $region22: #{basic_block_forward.2} parent=0
    _
  %s4 = ssub.s32 1, %s2
  %s5 = scalar_select 0, %s4, %s2
  // Predicated region
  $region2: #{basic_block_forward.2} parent=0 // pred_check
    _
  $region3: #{basic_block_forward.2} parent=0 // pred_check_branch
    %7 = sbr.rel (0) target = $region5
  $region4: #{basic_block_forward.2} parent=0 // pred_region
    _
  $region5: #{basic_block_forward.2} parent=0 // pred_fallthru
    _
  %p8 = scmp.eq.s32.totalorder 0, 0
  // Predicated region
  $region6: #{basic_block_forward.2} parent=0 // pred_check
    %p9 = pneg %p8
  $region7: #{basic_block_forward.2} parent=0 // pred_check_branch
    %11 = sbr.rel (%p9) target = $region9
  $region8: #{basic_block_forward.2} parent=0 // pred_region
    %vm12 = vcmask 778240
    %13 = vst.msk [vmem:[#allocation2] sm:$0x1] %vm12, 0.0
    %14 = vst.msk [vmem:[#allocation3] sm:$0x1] %vm12, 0.0
  $region9: #{basic_block_forward.2} parent=0 // pred_fallthru
    _
  %v15 = vld [vmem:[%s0] sm:$0xff]
  %v16 = vld [vmem:[%s0 + $0x8] sm:$0xff]
  %v17 = vld [vmem:[%s0 + $0x10] sm:$0x7]
  %v18 = vld [vmem:[%s0 + $0x18] sm:$0xff]
  %v19 = vld [vmem:[%s0 + $0x20] sm:$0xff]
  %v20 = vld [vmem:[%s0 + $0x28] sm:$0x7]
  %v21 = vld [vmem:[#allocation2] sm:$0x1]
  %vm22 = vcmask 785408
  %v23 = vsel %vm22, %v15, 0.0
  %v24 = vsel %vm22, %v18, 0.0
  %v25 = vadd.f32 %v23, %v24
  %v26 = vsel %vm22, %v16, 0.0
  %v27 = vsel %vm22, %v19, 0.0
  %v28 = vadd.f32 %v26, %v27
  %vm29 = vcmask 780288
  %v30 = vsel %vm29, %v17, 0.0
  %v31 = vsel %vm29, %v20, 0.0
  %v32 = vadd.f32 %v30, %v31
  %v33 = vsel %vm22, %v25, 0.0
  %v34 = vsel %vm22, %v28, 0.0
  %v35 = vadd.f32 %v33, %v34
  %v36 = vsel %vm29, %v32, 0.0
  %v37 = vadd.f32 %v35, %v36
  %v38 = vrot.slane %v37, 4
  %v39 = vadd.f32 %v37, %v38
  %v40 = vrot.slane %v39, 2
  %v41 = vadd.f32 %v39, %v40
  %v42 = vrot.slane %v41, 1
  %v43 = vadd.f32 %v41, %v42
  %v44 = vadd.f32 %v21, %v43
  %vm45 = vcmask 778240
  %46 = vst.msk [vmem:[#allocation2] sm:$0x1] %vm45, %v44
  %v47 = vld [vmem:[#allocation3] sm:$0x1]
  %v48 = vmul.f32 %v15, %v15
  %v49 = vmul.f32 %v16, %v16
  %v50 = vmul.f32 %v17, %v17
  %v51 = vmul.f32 %v18, %v18
  %v52 = vmul.f32 %v19, %v19
  %v53 = vmul.f32 %v20, %v20
  %v54 = vsel %vm22, %v48, 0.0
  %v55 = vsel %vm22, %v51, 0.0
  %v56 = vadd.f32 %v54, %v55
  %v57 = vsel %vm22, %v49, 0.0
  %v58 = vsel %vm22, %v52, 0.0
  %v59 = vadd.f32 %v57, %v58
  %v60 = vsel %vm29, %v50, 0.0
  %v61 = vsel %vm29, %v53, 0.0
  %v62 = vadd.f32 %v60, %v61
  %v63 = vsel %vm22, %v56, 0.0
  %v64 = vsel %vm22, %v59, 0.0
  %v65 = vadd.f32 %v63, %v64
  %v66 = vsel %vm29, %v62, 0.0
  %v67 = vadd.f32 %v65, %v66
  %v68 = vrot.slane %v67, 4
  %v69 = vadd.f32 %v67, %v68
  %v70 = vrot.slane %v69, 2
  %v71 = vadd.f32 %v69, %v70
  %v72 = vrot.slane %v71, 1
  %v73 = vadd.f32 %v71, %v72
  %v74 = vadd.f32 %v47, %v73
  %75 = vst.msk [vmem:[#allocation3] sm:$0x1] %vm45, %v74
  // Predicated region
  $region10: #{basic_block_forward.2} parent=0 // pred_check
    %p76 = pneg %p8
  $region11: #{basic_block_forward.2} parent=0 // pred_check_branch
    %78 = sbr.rel (%p76) target = $region13
  $region12: #{basic_block_forward.2} parent=0 // pred_region
    %v79 = vld [vmem:[#allocation2] sm:$0x1]
    %80 = vst.msk [vmem:[%s1] sm:$0x1] %vm45, %v79
    %v81 = vld [vmem:[#allocation3] sm:$0x1]
    %82 = vst.msk [vmem:[%s1 + $0x1] sm:$0x1] %vm45, %v81
  $region13: #{basic_block_forward.2} parent=0 // pred_fallthru
    _
  // Predicated region
  $region14: #{basic_block_forward.2} parent=0 // pred_check
    _
  $region15: #{basic_block_forward.2} parent=0 // pred_check_branch
    %84 = sbr.rel (0) target = $region17
  $region16: #{basic_block_forward.2} parent=0 // pred_region
    _
  $region17: #{basic_block_forward.2} parent=0 // pred_fallthru
    _
  // Predicated region
  $region18: #{basic_block_forward.2} parent=0 // pred_check
    _
  $region19: #{basic_block_forward.2} parent=0 // pred_check_branch
    %86 = sbr.rel (0) target = $region21
  $region20: #{basic_block_forward.2} parent=0 // pred_region
    _
  $region21: #{basic_block_forward.2} parent=0 // pred_fallthru
    _

// kernel: basic_block_forward.3
$region0: #{basic_block_forward.3}
  #allocation0 [shape = 'u32[]', space=smem, size = 0x4, offset = 0x4, fixed_abs, tag = 'smem constant byte address 0x4 - core index']
  #allocation1 [shape = 'u32[144,128]{1,0:T(1,128)}', space=vmem, size = 0x12000, scoped, tag = 'internal scratch']
  #allocation2 [shape = 'f32[456,4]{1,0:T(8,128)}', space=vmem, size = 0x39000, scoped, tag = 'scratch operand']
  #allocation3 [shape = 'f32[384,36]{1,0:T(8,128)}', space=vmem, size = 0x30000, scoped, tag = 'scratch operand']
  %s0 = inlined_call_operand.vmem [shape: f32[2,456,4], index: 0, kind: input, shape index: {}]
  %s1 = inlined_call_operand.vmem [shape: f32[1,4], index: 1, kind: input, shape index: {}]
  %s2 = inlined_call_operand.vmem [shape: f32[1,4], index: 2, kind: input, shape index: {}]
  %s3 = inlined_call_operand.vmem [shape: f32[456,1], index: 3, kind: input, shape index: {}]
  %s4 = inlined_call_operand.vmem [shape: f32[36,128], index: 4, kind: input, shape index: {}]
  %s5 = inlined_call_operand.vmem [shape: f32[2,384,128], index: 5, kind: output, shape index: {}]
  %s6 = sld [smem:[#allocation0]]
  $region53: #{basic_block_forward.3} parent=0
    _
  %s8 = ssub.s32 1, %s6
  %s9 = scalar_select 0, %s8, %s6
  loop: start=0, step=1, limit=4
  $region2: #{basic_block_forward.3} parent=0 // loop_pre_header
    _
  $region3: #{basic_block_forward.3} parent=0 // loop_header
    %s11 = sphi 0, %s15
    %p12 = scmp.ge.s32.totalorder %s11, 4
    %s21 = sphi 0, %s23
    %s24 = sphi 0, %s21
    %s25 = sphi 0, %s24
    %s41 = sphi 0, %s25
    %s45 = sphi 0, %s45
    %s47 = sphi 0, %s45
    %s48 = sphi 0, %s47
    %s62 = sphi 0, %s48
    %s66 = sphi 0, %s66
    %s68 = sphi 0, %s66
    %s69 = sphi 0, %s68
    %s83 = sphi 0, %s69
    %s87 = sphi 0, %s87
    %s89 = sphi 0, %s87
    %s90 = sphi 0, %s89
    %s104 = sphi 0, %s90
    %s108 = sphi 0, %s108
    %s110 = sphi 0, %s108
    %s111 = sphi 0, %s110
    %s125 = sphi 0, %s111
    %s131 = sphi 0, %s133
    %s134 = sphi 0, %s131
    %s135 = sphi 0, %s134
    %s151 = sphi 0, %s135
  $region4: #{basic_block_forward.3} parent=0 // loop_header_branch
    %14 = sbr.rel (%p12) target = $region8
  $region5: #{basic_block_forward.3} parent=0 // loop_body
    %s16 = ssub.s32 %s11, 1
    %s17 = ssub.s32 %s11, 2
    %s18 = sadd.s32 %s11, 1
    %s19 = ssub.s32 %s11, %s18
    %p20 = scmp.eq.s32.totalorder %s19, 0
    %s22 = sadd.s32 %s21, 1
    %s23 = scalar_select %p20, %s21, %s22
    %p26 = pneg %p20
    %p27 = scmp.eq.s32.totalorder %s11, 1
    %p28 = por %p26, %p27
    %p29 = scmp.ne.s32.totalorder %s21, %s24
    %p30 = scmp.eq.s32.totalorder %s11, 0
    %p31 = por %p29, %p30
    %p32 = scmp.ne.s32.totalorder %s21, %s24
    %p33 = scmp.eq.s32.totalorder %s16, 1
    %p34 = por %p32, %p33
    %p35 = scmp.ne.s32.totalorder %s24, %s25
    %p36 = scmp.eq.s32.totalorder %s16, 0
    %p37 = por %p35, %p36
    %p38 = scmp.ne.s32.totalorder %s24, %s25
    %p39 = scmp.eq.s32.totalorder %s17, 1
    %p40 = por %p38, %p39
    %p42 = scmp.ne.s32.totalorder %s25, %s41
    %p43 = scmp.eq.s32.totalorder %s17, 0
    %p44 = por %p42, %p43
    %s46 = sadd.s32 %s45, 1
    %p49 = scmp.eq.s32.totalorder %s11, 1
    %p50 = scmp.ne.s32.totalorder %s45, %s47
    %p51 = scmp.eq.s32.totalorder %s11, 0
    %p52 = por %p50, %p51
    %p53 = scmp.ne.s32.totalorder %s45, %s47
    %p54 = scmp.eq.s32.totalorder %s16, 1
    %p55 = por %p53, %p54
    %p56 = scmp.ne.s32.totalorder %s47, %s48
    %p57 = scmp.eq.s32.totalorder %s16, 0
    %p58 = por %p56, %p57
    %p59 = scmp.ne.s32.totalorder %s47, %s48
    %p60 = scmp.eq.s32.totalorder %s17, 1
    %p61 = por %p59, %p60
    %p63 = scmp.ne.s32.totalorder %s48, %s62
    %p64 = scmp.eq.s32.totalorder %s17, 0
    %p65 = por %p63, %p64
    %s67 = sadd.s32 %s66, 1
    %p70 = scmp.eq.s32.totalorder %s11, 1
    %p71 = scmp.ne.s32.totalorder %s66, %s68
    %p72 = scmp.eq.s32.totalorder %s11, 0
    %p73 = por %p71, %p72
    %p74 = scmp.ne.s32.totalorder %s66, %s68
    %p75 = scmp.eq.s32.totalorder %s16, 1
    %p76 = por %p74, %p75
    %p77 = scmp.ne.s32.totalorder %s68, %s69
    %p78 = scmp.eq.s32.totalorder %s16, 0
    %p79 = por %p77, %p78
    %p80 = scmp.ne.s32.totalorder %s68, %s69
    %p81 = scmp.eq.s32.totalorder %s17, 1
    %p82 = por %p80, %p81
    %p84 = scmp.ne.s32.totalorder %s69, %s83
    %p85 = scmp.eq.s32.totalorder %s17, 0
    %p86 = por %p84, %p85
    %s88 = sadd.s32 %s87, 1
    %p91 = scmp.eq.s32.totalorder %s11, 1
    %p92 = scmp.ne.s32.totalorder %s87, %s89
    %p93 = scmp.eq.s32.totalorder %s11, 0
    %p94 = por %p92, %p93
    %p95 = scmp.ne.s32.totalorder %s87, %s89
    %p96 = scmp.eq.s32.totalorder %s16, 1
    %p97 = por %p95, %p96
    %p98 = scmp.ne.s32.totalorder %s89, %s90
    %p99 = scmp.eq.s32.totalorder %s16, 0
    %p100 = por %p98, %p99
    %p101 = scmp.ne.s32.totalorder %s89, %s90
    %p102 = scmp.eq.s32.totalorder %s17, 1
    %p103 = por %p101, %p102
    %p105 = scmp.ne.s32.totalorder %s90, %s104
    %p106 = scmp.eq.s32.totalorder %s17, 0
    %p107 = por %p105, %p106
    %s109 = sadd.s32 %s108, 1
    %p112 = scmp.eq.s32.totalorder %s11, 1
    %p113 = scmp.ne.s32.totalorder %s108, %s110
    %p114 = scmp.eq.s32.totalorder %s11, 0
    %p115 = por %p113, %p114
    %p116 = scmp.ne.s32.totalorder %s108, %s110
    %p117 = scmp.eq.s32.totalorder %s16, 1
    %p118 = por %p116, %p117
    %p119 = scmp.ne.s32.totalorder %s110, %s111
    %p120 = scmp.eq.s32.totalorder %s16, 0
    %p121 = por %p119, %p120
    %p122 = scmp.ne.s32.totalorder %s110, %s111
    %p123 = scmp.eq.s32.totalorder %s17, 1
    %p124 = por %p122, %p123
    %p126 = scmp.ne.s32.totalorder %s111, %s125
    %p127 = scmp.eq.s32.totalorder %s17, 0
    %p128 = por %p126, %p127
    %s129 = ssub.s32 %s11, %s18
    %p130 = scmp.eq.s32.totalorder %s129, 0
    %s132 = sadd.s32 %s131, 1
    %s133 = scalar_select %p130, %s131, %s132
    %p136 = pneg %p130
    %p137 = scmp.eq.s32.totalorder %s11, 1
    %p138 = por %p136, %p137
    %p139 = scmp.ne.s32.totalorder %s131, %s134
    %p140 = scmp.eq.s32.totalorder %s11, 0
    %p141 = por %p139, %p140
    %p142 = scmp.ne.s32.totalorder %s131, %s134
    %p143 = scmp.eq.s32.totalorder %s16, 1
    %p144 = por %p142, %p143
    %p145 = scmp.ne.s32.totalorder %s134, %s135
    %p146 = scmp.eq.s32.totalorder %s16, 0
    %p147 = por %p145, %p146
    %p148 = scmp.ne.s32.totalorder %s134, %s135
    %p149 = scmp.eq.s32.totalorder %s17, 1
    %p150 = por %p148, %p149
    %p152 = scmp.ne.s32.totalorder %s135, %s151
    %p153 = scmp.eq.s32.totalorder %s17, 0
    %p154 = por %p152, %p153
    %p155 = scmp.le.s32.totalorder 1, %s11
    %p156 = scmp.lt.s32.totalorder %s11, 3
    %p157 = pnand %p155, %p156
    %p158 = pneg %p157
    // Predicated region
    $region9: #{basic_block_forward.3} parent=5 // pred_check
      _
    $region10: #{basic_block_forward.3} parent=5 // pred_check_branch
      %160 = sbr.rel (%p157) target = $region12
    $region11: #{basic_block_forward.3} parent=5 // pred_region
      %s161 = ssub.s32 %s11, 1
      // Predicated region
      $region13: #{basic_block_forward.3} parent=11 // pred_check
        %p162 = pneg %p58
      $region14: #{basic_block_forward.3} parent=11 // pred_check_branch
        %164 = sbr.rel (%p162) target = $region16
      $region15: #{basic_block_forward.3} parent=11 // pred_region
        _
      $region16: #{basic_block_forward.3} parent=11 // pred_fallthru
        _
      // Predicated region
      $region17: #{basic_block_forward.3} parent=11 // pred_check
        %p165 = pneg %p79
      $region18: #{basic_block_forward.3} parent=11 // pred_check_branch
        %167 = sbr.rel (%p165) target = $region20
      $region19: #{basic_block_forward.3} parent=11 // pred_region
        _
      $region20: #{basic_block_forward.3} parent=11 // pred_fallthru
        _
      // Predicated region
      $region21: #{basic_block_forward.3} parent=11 // pred_check
        %p168 = pneg %p100
      $region22: #{basic_block_forward.3} parent=11 // pred_check_branch
        %170 = sbr.rel (%p168) target = $region24
      $region23: #{basic_block_forward.3} parent=11 // pred_region
        _
      $region24: #{basic_block_forward.3} parent=11 // pred_fallthru
        _
      // Predicated region
      $region25: #{basic_block_forward.3} parent=11 // pred_check
        %p171 = pneg %p121
      $region26: #{basic_block_forward.3} parent=11 // pred_check_branch
        %173 = sbr.rel (%p171) target = $region28
      $region27: #{basic_block_forward.3} parent=11 // pred_region
        _
      $region28: #{basic_block_forward.3} parent=11 // pred_fallthru
        _
    $region12: #{basic_block_forward.3} parent=5 // pred_fallthru
      _
    %p174 = scmp.lt.s32.totalorder %s11, 2
    // Predicated region
    $region29: #{basic_block_forward.3} parent=5 // pred_check
      %p175 = pneg %p174
    $region30: #{basic_block_forward.3} parent=5 // pred_check_branch
      %177 = sbr.rel (%p175) target = $region32
    $region31: #{basic_block_forward.3} parent=5 // pred_region
      // Predicated region
      $region33: #{basic_block_forward.3} parent=31 // pred_check
        %p178 = pneg %p31
      $region34: #{basic_block_forward.3} parent=31 // pred_check_branch
        %180 = sbr.rel (%p178) target = $region36
      $region35: #{basic_block_forward.3} parent=31 // pred_region
        %p181 = scmp.lt.s32.totalorder %s11, 1
        %s182 = scalar_select %p181, %s11, 1
        %s183 = smul.addr %s182, 57
        %s184 = smul.addr %s183, 8
        %s185 = scalar_lea.vmem %s0, %s184
      $region36: #{basic_block_forward.3} parent=31 // pred_fallthru
        _
    $region32: #{basic_block_forward.3} parent=5 // pred_fallthru
      _
    %p186 = scmp.le.s32.totalorder 1, %s11
    %p187 = scmp.lt.s32.totalorder %s11, 3
    %p188 = pnand %p186, %p187
    %p189 = pneg %p188
    // Predicated region
    $region37: #{basic_block_forward.3} parent=5 // pred_check
      _
    $region38: #{basic_block_forward.3} parent=5 // pred_check_branch
      %191 = sbr.rel (%p188) target = $region40
    $region39: #{basic_block_forward.3} parent=5 // pred_region
      %s192 = ssub.s32 %s11, 1
      %p193 = scmp.lt.s32.totalorder %s16, 1
      %s194 = scalar_select %p193, %s16, 1
      %s195 = smul.addr %s194, 57
      %s196 = smul.addr %s195, 8
      %s197 = scalar_lea.vmem %s0, %s196
      %p198 = pneg %p37
      %p199 = pneg %p34
      %p200 = pneg %p58
      %p201 = pneg %p55
      %p202 = pneg %p79
      %p203 = pneg %p76
      %p204 = pneg %p100
      %p205 = pneg %p97
      %p206 = pneg %p121
      %p207 = pneg %p118
      %p208 = pneg %p147
      %p209 = pneg %p144
      %p210 = scmp.lt.s32.totalorder %s16, 1
      %s211 = scalar_select %p210, %s16, 1
      %s212 = smul.addr %s211, 48
      %s213 = smul.addr %s212, 8
      %s214 = scalar_lea.vmem %s5, %s213
      %p215 = scmp.lt.s32.totalorder %s16, 1
      %s216 = scalar_select %p215, %s16, 1
      %s217 = smul.addr %s216, 57
      %s218 = smul.addr %s217, 8
      %s219 = scalar_lea.vmem %s0, %s218
      %p220 = scmp.lt.s32.totalorder %s16, 1
      %s221 = scalar_select %p220, %s16, 1
      %s222 = smul.addr %s221, 48
      %s223 = smul.addr %s222, 8
      %s224 = scalar_lea.vmem %s5, %s223
      %v225 = vld [vmem:[%s219] sm:$0xff]
      %v226 = vld [vmem:[%s219 + $0x8] sm:$0xff]
      %v227 = vld [vmem:[%s219 + $0x10] sm:$0xff]
      %v228 = vld [vmem:[%s219 + $0x18] sm:$0xff]
      %v229 = vld [vmem:[%s219 + $0x20] sm:$0xff]
      %v230 = vld [vmem:[%s219 + $0x28] sm:$0xff]
      %v231 = vld [vmem:[%s219 + $0x30] sm:$0xff]
      %v232 = vld [vmem:[%s219 + $0x38] sm:$0xff]
      %v233 = vld [vmem:[%s219 + $0x40] sm:$0xff]
      %v234 = vld [vmem:[%s219 + $0x48] sm:$0xff]
      %v235 = vld [vmem:[%s219 + $0x50] sm:$0xff]
      %v236 = vld [vmem:[%s219 + $0x58] sm:$0xff]
      %v237 = vld [vmem:[%s219 + $0x60] sm:$0xff]
      %v238 = vld [vmem:[%s219 + $0x68] sm:$0xff]
      %v239 = vld [vmem:[%s219 + $0x70] sm:$0xff]
      %v240 = vld [vmem:[%s219 + $0x78] sm:$0xff]
      %v241 = vld [vmem:[%s219 + $0x80] sm:$0xff]
      %v242 = vld [vmem:[%s219 + $0x88] sm:$0xff]
      %v243 = vld [vmem:[%s219 + $0x90] sm:$0xff]
      %v244 = vld [vmem:[%s219 + $0x98] sm:$0xff]
      %v245 = vld [vmem:[%s219 + $0xa0] sm:$0xff]
      %v246 = vld [vmem:[%s219 + $0xa8] sm:$0xff]
      %v247 = vld [vmem:[%s219 + $0xb0] sm:$0xff]
      %v248 = vld [vmem:[%s219 + $0xb8] sm:$0xff]
      %v249 = vld [vmem:[%s219 + $0xc0] sm:$0xff]
      %v250 = vld [vmem:[%s219 + $0xc8] sm:$0xff]
      %v251 = vld [vmem:[%s219 + $0xd0] sm:$0xff]
      %v252 = vld [vmem:[%s219 + $0xd8] sm:$0xff]
      %v253 = vld [vmem:[%s219 + $0xe0] sm:$0xff]
      %v254 = vld [vmem:[%s219 + $0xe8] sm:$0xff]
      %v255 = vld [vmem:[%s219 + $0xf0] sm:$0xff]
      %v256 = vld [vmem:[%s219 + $0xf8] sm:$0xff]
      %v257 = vld [vmem:[%s219 + $0x100] sm:$0xff]
      %v258 = vld [vmem:[%s219 + $0x108] sm:$0xff]
      %v259 = vld [vmem:[%s219 + $0x110] sm:$0xff]
      %v260 = vld [vmem:[%s219 + $0x118] sm:$0xff]
      %v261 = vld [vmem:[%s219 + $0x120] sm:$0xff]
      %v262 = vld [vmem:[%s219 + $0x128] sm:$0xff]
      %v263 = vld [vmem:[%s219 + $0x130] sm:$0xff]
      %v264 = vld [vmem:[%s219 + $0x138] sm:$0xff]
      %v265 = vld [vmem:[%s219 + $0x140] sm:$0xff]
      %v266 = vld [vmem:[%s219 + $0x148] sm:$0xff]
      %v267 = vld [vmem:[%s219 + $0x150] sm:$0xff]
      %v268 = vld [vmem:[%s219 + $0x158] sm:$0xff]
      %v269 = vld [vmem:[%s219 + $0x160] sm:$0xff]
      %v270 = vld [vmem:[%s219 + $0x168] sm:$0xff]
      %v271 = vld [vmem:[%s219 + $0x170] sm:$0xff]
      %v272 = vld [vmem:[%s219 + $0x178] sm:$0xff]
      %v273 = vld [vmem:[%s219 + $0x180] sm:$0xff]
      %v274 = vld [vmem:[%s219 + $0x188] sm:$0xff]
      %v275 = vld [vmem:[%s219 + $0x190] sm:$0xff]
      %v276 = vld [vmem:[%s219 + $0x198] sm:$0xff]
      %v277 = vld [vmem:[%s219 + $0x1a0] sm:$0xff]
      %v278 = vld [vmem:[%s219 + $0x1a8] sm:$0xff]
      %v279 = vld [vmem:[%s219 + $0x1b0] sm:$0xff]
      %v280 = vld [vmem:[%s219 + $0x1b8] sm:$0xff]
      %v281 = vld [vmem:[%s219 + $0x1c0] sm:$0xff]
      %v282 = vld [vmem:[%s1] sm:$0x1]
      %v284 = vlaneseq
      %v285 = vshrl.u32 %v284, 7
      %v286 = vsub.s32 0, %v285
      %v287 = vrot.slane %v282, %v286
      %v289 = vmul.f32 %v225, %v287
      %v290 = vmul.f32 %v226, %v287
      %v291 = vmul.f32 %v227, %v287
      %v292 = vmul.f32 %v228, %v287
      %v293 = vmul.f32 %v229, %v287
      %v294 = vmul.f32 %v230, %v287
      %v295 = vmul.f32 %v231, %v287
      %v296 = vmul.f32 %v232, %v287
      %v297 = vmul.f32 %v233, %v287
      %v298 = vmul.f32 %v234, %v287
      %v299 = vmul.f32 %v235, %v287
      %v300 = vmul.f32 %v236, %v287
      %v301 = vmul.f32 %v237, %v287
      %v302 = vmul.f32 %v238, %v287
      %v303 = vmul.f32 %v239, %v287
      %v304 = vmul.f32 %v240, %v287
      %v305 = vmul.f32 %v241, %v287
      %v306 = vmul.f32 %v242, %v287
      %v307 = vmul.f32 %v243, %v287
      %v308 = vmul.f32 %v244, %v287
      %v309 = vmul.f32 %v245, %v287
      %v310 = vmul.f32 %v246, %v287
      %v311 = vmul.f32 %v247, %v287
      %v312 = vmul.f32 %v248, %v287
      %v313 = vmul.f32 %v249, %v287
      %v314 = vmul.f32 %v250, %v287
      %v315 = vmul.f32 %v251, %v287
      %v316 = vmul.f32 %v252, %v287
      %v317 = vmul.f32 %v253, %v287
      %v318 = vmul.f32 %v254, %v287
      %v319 = vmul.f32 %v255, %v287
      %v320 = vmul.f32 %v256, %v287
      %v321 = vmul.f32 %v257, %v287
      %v322 = vmul.f32 %v258, %v287
      %v323 = vmul.f32 %v259, %v287
      %v324 = vmul.f32 %v260, %v287
      %v325 = vmul.f32 %v261, %v287
      %v326 = vmul.f32 %v262, %v287
      %v327 = vmul.f32 %v263, %v287
      %v328 = vmul.f32 %v264, %v287
      %v329 = vmul.f32 %v265, %v287
      %v330 = vmul.f32 %v266, %v287
      %v331 = vmul.f32 %v267, %v287
      %v332 = vmul.f32 %v268, %v287
      %v333 = vmul.f32 %v269, %v287
      %v334 = vmul.f32 %v270, %v287
      %v335 = vmul.f32 %v271, %v287
      %v336 = vmul.f32 %v272, %v287
      %v337 = vmul.f32 %v273, %v287
      %v338 = vmul.f32 %v274, %v287
      %v339 = vmul.f32 %v275, %v287
      %v340 = vmul.f32 %v276, %v287
      %v341 = vmul.f32 %v277, %v287
      %v342 = vmul.f32 %v278, %v287
      %v343 = vmul.f32 %v279, %v287
      %v344 = vmul.f32 %v280, %v287
      %v345 = vmul.f32 %v281, %v287
      %v346 = vld [vmem:[%s2] sm:$0x1]
      %v348 = vlaneseq
      %v349 = vshrl.u32 %v348, 7
      %v350 = vsub.s32 0, %v349
      %v351 = vrot.slane %v346, %v350
      %v353 = vadd.f32 %v289, %v351
      %v354 = vadd.f32 %v290, %v351
      %v355 = vadd.f32 %v291, %v351
      %v356 = vadd.f32 %v292, %v351
      %v357 = vadd.f32 %v293, %v351
      %v358 = vadd.f32 %v294, %v351
      %v359 = vadd.f32 %v295, %v351
      %v360 = vadd.f32 %v296, %v351
      %v361 = vadd.f32 %v297, %v351
      %v362 = vadd.f32 %v298, %v351
      %v363 = vadd.f32 %v299, %v351
      %v364 = vadd.f32 %v300, %v351
      %v365 = vadd.f32 %v301, %v351
      %v366 = vadd.f32 %v302, %v351
      %v367 = vadd.f32 %v303, %v351
      %v368 = vadd.f32 %v304, %v351
      %v369 = vadd.f32 %v305, %v351
      %v370 = vadd.f32 %v306, %v351
      %v371 = vadd.f32 %v307, %v351
      %v372 = vadd.f32 %v308, %v351
      %v373 = vadd.f32 %v309, %v351
      %v374 = vadd.f32 %v310, %v351
      %v375 = vadd.f32 %v311, %v351
      %v376 = vadd.f32 %v312, %v351
      %v377 = vadd.f32 %v313, %v351
      %v378 = vadd.f32 %v314, %v351
      %v379 = vadd.f32 %v315, %v351
      %v380 = vadd.f32 %v316, %v351
      %v381 = vadd.f32 %v317, %v351
      %v382 = vadd.f32 %v318, %v351
      %v383 = vadd.f32 %v319, %v351
      %v384 = vadd.f32 %v320, %v351
      %v385 = vadd.f32 %v321, %v351
      %v386 = vadd.f32 %v322, %v351
      %v387 = vadd.f32 %v323, %v351
      %v388 = vadd.f32 %v324, %v351
      %v389 = vadd.f32 %v325, %v351
      %v390 = vadd.f32 %v326, %v351
      %v391 = vadd.f32 %v327, %v351
      %v392 = vadd.f32 %v328, %v351
      %v393 = vadd.f32 %v329, %v351
      %v394 = vadd.f32 %v330, %v351
      %v395 = vadd.f32 %v331, %v351
      %v396 = vadd.f32 %v332, %v351
      %v397 = vadd.f32 %v333, %v351
      %v398 = vadd.f32 %v334, %v351
      %v399 = vadd.f32 %v335, %v351
      %v400 = vadd.f32 %v336, %v351
      %v401 = vadd.f32 %v337, %v351
      %v402 = vadd.f32 %v338, %v351
      %v403 = vadd.f32 %v339, %v351
      %v404 = vadd.f32 %v340, %v351
      %v405 = vadd.f32 %v341, %v351
      %v406 = vadd.f32 %v342, %v351
      %v407 = vadd.f32 %v343, %v351
      %v408 = vadd.f32 %v344, %v351
      %v409 = vadd.f32 %v345, %v351
      %v410 = vmax.f32 %v353, 0.0
      %v411 = vmax.f32 %v354, 0.0
      %v412 = vmax.f32 %v355, 0.0
      %v413 = vmax.f32 %v356, 0.0
      %v414 = vmax.f32 %v357, 0.0
      %v415 = vmax.f32 %v358, 0.0
      %v416 = vmax.f32 %v359, 0.0
      %v417 = vmax.f32 %v360, 0.0
      %v418 = vmax.f32 %v361, 0.0
      %v419 = vmax.f32 %v362, 0.0
      %v420 = vmax.f32 %v363, 0.0
      %v421 = vmax.f32 %v364, 0.0
      %v422 = vmax.f32 %v365, 0.0
      %v423 = vmax.f32 %v366, 0.0
      %v424 = vmax.f32 %v367, 0.0
      %v425 = vmax.f32 %v368, 0.0
      %v426 = vmax.f32 %v369, 0.0
      %v427 = vmax.f32 %v370, 0.0
      %v428 = vmax.f32 %v371, 0.0
      %v429 = vmax.f32 %v372, 0.0
      %v430 = vmax.f32 %v373, 0.0
      %v431 = vmax.f32 %v374, 0.0
      %v432 = vmax.f32 %v375, 0.0
      %v433 = vmax.f32 %v376, 0.0
      %v434 = vmax.f32 %v377, 0.0
      %v435 = vmax.f32 %v378, 0.0
      %v436 = vmax.f32 %v379, 0.0
      %v437 = vmax.f32 %v380, 0.0
      %v438 = vmax.f32 %v381, 0.0
      %v439 = vmax.f32 %v382, 0.0
      %v440 = vmax.f32 %v383, 0.0
      %v441 = vmax.f32 %v384, 0.0
      %v442 = vmax.f32 %v385, 0.0
      %v443 = vmax.f32 %v386, 0.0
      %v444 = vmax.f32 %v387, 0.0
      %v445 = vmax.f32 %v388, 0.0
      %v446 = vmax.f32 %v389, 0.0
      %v447 = vmax.f32 %v390, 0.0
      %v448 = vmax.f32 %v391, 0.0
      %v449 = vmax.f32 %v392, 0.0
      %v450 = vmax.f32 %v393, 0.0
      %v451 = vmax.f32 %v394, 0.0
      %v452 = vmax.f32 %v395, 0.0
      %v453 = vmax.f32 %v396, 0.0
      %v454 = vmax.f32 %v397, 0.0
      %v455 = vmax.f32 %v398, 0.0
      %v456 = vmax.f32 %v399, 0.0
      %v457 = vmax.f32 %v400, 0.0
      %v458 = vmax.f32 %v401, 0.0
      %v459 = vmax.f32 %v402, 0.0
      %v460 = vmax.f32 %v403, 0.0
      %v461 = vmax.f32 %v404, 0.0
      %v462 = vmax.f32 %v405, 0.0
      %v463 = vmax.f32 %v406, 0.0
      %v464 = vmax.f32 %v407, 0.0
      %v465 = vmax.f32 %v408, 0.0
      %v466 = vmax.f32 %v409, 0.0
      %v467 = vld [vmem:[%s3] sm:$0xff]
      %v468 = vld [vmem:[%s3 + $0x8] sm:$0xff]
      %v469 = vld [vmem:[%s3 + $0x10] sm:$0xff]
      %v470 = vld [vmem:[%s3 + $0x18] sm:$0xff]
      %v471 = vld [vmem:[%s3 + $0x20] sm:$0xff]
      %v472 = vld [vmem:[%s3 + $0x28] sm:$0xff]
      %v473 = vld [vmem:[%s3 + $0x30] sm:$0xff]
      %v474 = vld [vmem:[%s3 + $0x38] sm:$0xff]
      %v475 = vld [vmem:[%s3 + $0x40] sm:$0xff]
      %v476 = vld [vmem:[%s3 + $0x48] sm:$0xff]
      %v477 = vld [vmem:[%s3 + $0x50] sm:$0xff]
      %v478 = vld [vmem:[%s3 + $0x58] sm:$0xff]
      %v479 = vld [vmem:[%s3 + $0x60] sm:$0xff]
      %v480 = vld [vmem:[%s3 + $0x68] sm:$0xff]
      %v481 = vld [vmem:[%s3 + $0x70] sm:$0xff]
      %v482 = vld [vmem:[%s3 + $0x78] sm:$0xff]
      %v483 = vld [vmem:[%s3 + $0x80] sm:$0xff]
      %v484 = vld [vmem:[%s3 + $0x88] sm:$0xff]
      %v485 = vld [vmem:[%s3 + $0x90] sm:$0xff]
      %v486 = vld [vmem:[%s3 + $0x98] sm:$0xff]
      %v487 = vld [vmem:[%s3 + $0xa0] sm:$0xff]
      %v488 = vld [vmem:[%s3 + $0xa8] sm:$0xff]
      %v489 = vld [vmem:[%s3 + $0xb0] sm:$0xff]
      %v490 = vld [vmem:[%s3 + $0xb8] sm:$0xff]
      %v491 = vld [vmem:[%s3 + $0xc0] sm:$0xff]
      %v492 = vld [vmem:[%s3 + $0xc8] sm:$0xff]
      %v493 = vld [vmem:[%s3 + $0xd0] sm:$0xff]
      %v494 = vld [vmem:[%s3 + $0xd8] sm:$0xff]
      %v495 = vld [vmem:[%s3 + $0xe0] sm:$0xff]
      %v496 = vld [vmem:[%s3 + $0xe8] sm:$0xff]
      %v497 = vld [vmem:[%s3 + $0xf0] sm:$0xff]
      %v498 = vld [vmem:[%s3 + $0xf8] sm:$0xff]
      %v499 = vld [vmem:[%s3 + $0x100] sm:$0xff]
      %v500 = vld [vmem:[%s3 + $0x108] sm:$0xff]
      %v501 = vld [vmem:[%s3 + $0x110] sm:$0xff]
      %v502 = vld [vmem:[%s3 + $0x118] sm:$0xff]
      %v503 = vld [vmem:[%s3 + $0x120] sm:$0xff]
      %v504 = vld [vmem:[%s3 + $0x128] sm:$0xff]
      %v505 = vld [vmem:[%s3 + $0x130] sm:$0xff]
      %v506 = vld [vmem:[%s3 + $0x138] sm:$0xff]
      %v507 = vld [vmem:[%s3 + $0x140] sm:$0xff]
      %v508 = vld [vmem:[%s3 + $0x148] sm:$0xff]
      %v509 = vld [vmem:[%s3 + $0x150] sm:$0xff]
      %v510 = vld [vmem:[%s3 + $0x158] sm:$0xff]
      %v511 = vld [vmem:[%s3 + $0x160] sm:$0xff]
      %v512 = vld [vmem:[%s3 + $0x168] sm:$0xff]
      %v513 = vld [vmem:[%s3 + $0x170] sm:$0xff]
      %v514 = vld [vmem:[%s3 + $0x178] sm:$0xff]
      %v515 = vld [vmem:[%s3 + $0x180] sm:$0xff]
      %v516 = vld [vmem:[%s3 + $0x188] sm:$0xff]
      %v517 = vld [vmem:[%s3 + $0x190] sm:$0xff]
      %v518 = vld [vmem:[%s3 + $0x198] sm:$0xff]
      %v519 = vld [vmem:[%s3 + $0x1a0] sm:$0xff]
      %v520 = vld [vmem:[%s3 + $0x1a8] sm:$0xff]
      %v521 = vld [vmem:[%s3 + $0x1b0] sm:$0xff]
      %v522 = vld [vmem:[%s3 + $0x1b8] sm:$0xff]
      %v523 = vld [vmem:[%s3 + $0x1c0] sm:$0xff]
      %525 = vset.pattern.permute.xlu0 0
      %526 = vperm.xlu0 %525, %v467
      %v527 = vpop.permute.xlu0 %526
      %530 = vset.pattern.permute.xlu0 0
      %531 = vperm.xlu0 %530, %v468
      %v532 = vpop.permute.xlu0 %531
      %535 = vset.pattern.permute.xlu0 0
      %536 = vperm.xlu0 %535, %v469
      %v537 = vpop.permute.xlu0 %536
      %540 = vset.pattern.permute.xlu0 0
      %541 = vperm.xlu0 %540, %v470
      %v542 = vpop.permute.xlu0 %541
      %545 = vset.pattern.permute.xlu0 0
      %546 = vperm.xlu0 %545, %v471
      %v547 = vpop.permute.xlu0 %546
      %550 = vset.pattern.permute.xlu0 0
      %551 = vperm.xlu0 %550, %v472
      %v552 = vpop.permute.xlu0 %551
      %555 = vset.pattern.permute.xlu0 0
      %556 = vperm.xlu0 %555, %v473
      %v557 = vpop.permute.xlu0 %556
      %560 = vset.pattern.permute.xlu0 0
      %561 = vperm.xlu0 %560, %v474
      %v562 = vpop.permute.xlu0 %561
      %565 = vset.pattern.permute.xlu0 0
      %566 = vperm.xlu0 %565, %v475
      %v567 = vpop.permute.xlu0 %566
      %570 = vset.pattern.permute.xlu0 0
      %571 = vperm.xlu0 %570, %v476
      %v572 = vpop.permute.xlu0 %571
      %575 = vset.pattern.permute.xlu0 0
      %576 = vperm.xlu0 %575, %v477
      %v577 = vpop.permute.xlu0 %576
      %580 = vset.pattern.permute.xlu0 0
      %581 = vperm.xlu0 %580, %v478
      %v582 = vpop.permute.xlu0 %581
      %585 = vset.pattern.permute.xlu0 0
      %586 = vperm.xlu0 %585, %v479
      %v587 = vpop.permute.xlu0 %586
      %590 = vset.pattern.permute.xlu0 0
      %591 = vperm.xlu0 %590, %v480
      %v592 = vpop.permute.xlu0 %591
      %595 = vset.pattern.permute.xlu0 0
      %596 = vperm.xlu0 %595, %v481
      %v597 = vpop.permute.xlu0 %596
      %600 = vset.pattern.permute.xlu0 0
      %601 = vperm.xlu0 %600, %v482
      %v602 = vpop.permute.xlu0 %601
      %605 = vset.pattern.permute.xlu0 0
      %606 = vperm.xlu0 %605, %v483
      %v607 = vpop.permute.xlu0 %606
      %610 = vset.pattern.permute.xlu0 0
      %611 = vperm.xlu0 %610, %v484
      %v612 = vpop.permute.xlu0 %611
      %615 = vset.pattern.permute.xlu0 0
      %616 = vperm.xlu0 %615, %v485
      %v617 = vpop.permute.xlu0 %616
      %620 = vset.pattern.permute.xlu0 0
      %621 = vperm.xlu0 %620, %v486
      %v622 = vpop.permute.xlu0 %621
      %625 = vset.pattern.permute.xlu0 0
      %626 = vperm.xlu0 %625, %v487
      %v627 = vpop.permute.xlu0 %626
      %630 = vset.pattern.permute.xlu0 0
      %631 = vperm.xlu0 %630, %v488
      %v632 = vpop.permute.xlu0 %631
      %635 = vset.pattern.permute.xlu0 0
      %636 = vperm.xlu0 %635, %v489
      %v637 = vpop.permute.xlu0 %636
      %640 = vset.pattern.permute.xlu0 0
      %641 = vperm.xlu0 %640, %v490
      %v642 = vpop.permute.xlu0 %641
      %645 = vset.pattern.permute.xlu0 0
      %646 = vperm.xlu0 %645, %v491
      %v647 = vpop.permute.xlu0 %646
      %650 = vset.pattern.permute.xlu0 0
      %651 = vperm.xlu0 %650, %v492
      %v652 = vpop.permute.xlu0 %651
      %655 = vset.pattern.permute.xlu0 0
      %656 = vperm.xlu0 %655, %v493
      %v657 = vpop.permute.xlu0 %656
      %660 = vset.pattern.permute.xlu0 0
      %661 = vperm.xlu0 %660, %v494
      %v662 = vpop.permute.xlu0 %661
      %665 = vset.pattern.permute.xlu0 0
      %666 = vperm.xlu0 %665, %v495
      %v667 = vpop.permute.xlu0 %666
      %670 = vset.pattern.permute.xlu0 0
      %671 = vperm.xlu0 %670, %v496
      %v672 = vpop.permute.xlu0 %671
      %675 = vset.pattern.permute.xlu0 0
      %676 = vperm.xlu0 %675, %v497
      %v677 = vpop.permute.xlu0 %676
      %680 = vset.pattern.permute.xlu0 0
      %681 = vperm.xlu0 %680, %v498
      %v682 = vpop.permute.xlu0 %681
      %685 = vset.pattern.permute.xlu0 0
      %686 = vperm.xlu0 %685, %v499
      %v687 = vpop.permute.xlu0 %686
      %690 = vset.pattern.permute.xlu0 0
      %691 = vperm.xlu0 %690, %v500
      %v692 = vpop.permute.xlu0 %691
      %695 = vset.pattern.permute.xlu0 0
      %696 = vperm.xlu0 %695, %v501
      %v697 = vpop.permute.xlu0 %696
      %700 = vset.pattern.permute.xlu0 0
      %701 = vperm.xlu0 %700, %v502
      %v702 = vpop.permute.xlu0 %701
      %705 = vset.pattern.permute.xlu0 0
      %706 = vperm.xlu0 %705, %v503
      %v707 = vpop.permute.xlu0 %706
      %710 = vset.pattern.permute.xlu0 0
      %711 = vperm.xlu0 %710, %v504
      %v712 = vpop.permute.xlu0 %711
      %715 = vset.pattern.permute.xlu0 0
      %716 = vperm.xlu0 %715, %v505
      %v717 = vpop.permute.xlu0 %716
      %720 = vset.pattern.permute.xlu0 0
      %721 = vperm.xlu0 %720, %v506
      %v722 = vpop.permute.xlu0 %721
      %725 = vset.pattern.permute.xlu0 0
      %726 = vperm.xlu0 %725, %v507
      %v727 = vpop.permute.xlu0 %726
      %730 = vset.pattern.permute.xlu0 0
      %731 = vperm.xlu0 %730, %v508
      %v732 = vpop.permute.xlu0 %731
      %735 = vset.pattern.permute.xlu0 0
      %736 = vperm.xlu0 %735, %v509
      %v737 = vpop.permute.xlu0 %736
      %740 = vset.pattern.permute.xlu0 0
      %741 = vperm.xlu0 %740, %v510
      %v742 = vpop.permute.xlu0 %741
      %745 = vset.pattern.permute.xlu0 0
      %746 = vperm.xlu0 %745, %v511
      %v747 = vpop.permute.xlu0 %746
      %750 = vset.pattern.permute.xlu0 0
      %751 = vperm.xlu0 %750, %v512
      %v752 = vpop.permute.xlu0 %751
      %755 = vset.pattern.permute.xlu0 0
      %756 = vperm.xlu0 %755, %v513
      %v757 = vpop.permute.xlu0 %756
      %760 = vset.pattern.permute.xlu0 0
      %761 = vperm.xlu0 %760, %v514
      %v762 = vpop.permute.xlu0 %761
      %765 = vset.pattern.permute.xlu0 0
      %766 = vperm.xlu0 %765, %v515
      %v767 = vpop.permute.xlu0 %766
      %770 = vset.pattern.permute.xlu0 0
      %771 = vperm.xlu0 %770, %v516
      %v772 = vpop.permute.xlu0 %771
      %775 = vset.pattern.permute.xlu0 0
      %776 = vperm.xlu0 %775, %v517
      %v777 = vpop.permute.xlu0 %776
      %780 = vset.pattern.permute.xlu0 0
      %781 = vperm.xlu0 %780, %v518
      %v782 = vpop.permute.xlu0 %781
      %785 = vset.pattern.permute.xlu0 0
      %786 = vperm.xlu0 %785, %v519
      %v787 = vpop.permute.xlu0 %786
      %790 = vset.pattern.permute.xlu0 0
      %791 = vperm.xlu0 %790, %v520
      %v792 = vpop.permute.xlu0 %791
      %795 = vset.pattern.permute.xlu0 0
      %796 = vperm.xlu0 %795, %v521
      %v797 = vpop.permute.xlu0 %796
      %800 = vset.pattern.permute.xlu0 0
      %801 = vperm.xlu0 %800, %v522
      %v802 = vpop.permute.xlu0 %801
      %805 = vset.pattern.permute.xlu0 0
      %806 = vperm.xlu0 %805, %v523
      %v807 = vpop.permute.xlu0 %806
      %v809 = vmul.f32 %v410, %v527
      %v810 = vmul.f32 %v411, %v532
      %v811 = vmul.f32 %v412, %v537
      %v812 = vmul.f32 %v413, %v542
      %v813 = vmul.f32 %v414, %v547
      %v814 = vmul.f32 %v415, %v552
      %v815 = vmul.f32 %v416, %v557
      %v816 = vmul.f32 %v417, %v562
      %v817 = vmul.f32 %v418, %v567
      %v818 = vmul.f32 %v419, %v572
      %v819 = vmul.f32 %v420, %v577
      %v820 = vmul.f32 %v421, %v582
      %v821 = vmul.f32 %v422, %v587
      %v822 = vmul.f32 %v423, %v592
      %v823 = vmul.f32 %v424, %v597
      %v824 = vmul.f32 %v425, %v602
      %v825 = vmul.f32 %v426, %v607
      %v826 = vmul.f32 %v427, %v612
      %v827 = vmul.f32 %v428, %v617
      %v828 = vmul.f32 %v429, %v622
      %v829 = vmul.f32 %v430, %v627
      %v830 = vmul.f32 %v431, %v632
      %v831 = vmul.f32 %v432, %v637
      %v832 = vmul.f32 %v433, %v642
      %v833 = vmul.f32 %v434, %v647
      %v834 = vmul.f32 %v435, %v652
      %v835 = vmul.f32 %v436, %v657
      %v836 = vmul.f32 %v437, %v662
      %v837 = vmul.f32 %v438, %v667
      %v838 = vmul.f32 %v439, %v672
      %v839 = vmul.f32 %v440, %v677
      %v840 = vmul.f32 %v441, %v682
      %v841 = vmul.f32 %v442, %v687
      %v842 = vmul.f32 %v443, %v692
      %v843 = vmul.f32 %v444, %v697
      %v844 = vmul.f32 %v445, %v702
      %v845 = vmul.f32 %v446, %v707
      %v846 = vmul.f32 %v447, %v712
      %v847 = vmul.f32 %v448, %v717
      %v848 = vmul.f32 %v449, %v722
      %v849 = vmul.f32 %v450, %v727
      %v850 = vmul.f32 %v451, %v732
      %v851 = vmul.f32 %v452, %v737
      %v852 = vmul.f32 %v453, %v742
      %v853 = vmul.f32 %v454, %v747
      %v854 = vmul.f32 %v455, %v752
      %v855 = vmul.f32 %v456, %v757
      %v856 = vmul.f32 %v457, %v762
      %v857 = vmul.f32 %v458, %v767
      %v858 = vmul.f32 %v459, %v772
      %v859 = vmul.f32 %v460, %v777
      %v860 = vmul.f32 %v461, %v782
      %v861 = vmul.f32 %v462, %v787
      %v862 = vmul.f32 %v463, %v792
      %v863 = vmul.f32 %v464, %v797
      %v864 = vmul.f32 %v465, %v802
      %v865 = vmul.f32 %v466, %v807
      %vm866 = vcmask 31744
      %867 = vst.msk [vmem:[#allocation2] sm:$0xff] %vm866, %v809
      %868 = vst.msk [vmem:[#allocation2 + $0x8] sm:$0xff] %vm866, %v810
      %869 = vst.msk [vmem:[#allocation2 + $0x10] sm:$0xff] %vm866, %v811
      %870 = vst.msk [vmem:[#allocation2 + $0x18] sm:$0xff] %vm866, %v812
      %871 = vst.msk [vmem:[#allocation2 + $0x20] sm:$0xff] %vm866, %v813
      %872 = vst.msk [vmem:[#allocation2 + $0x28] sm:$0xff] %vm866, %v814
      %873 = vst.msk [vmem:[#allocation2 + $0x30] sm:$0xff] %vm866, %v815
      %874 = vst.msk [vmem:[#allocation2 + $0x38] sm:$0xff] %vm866, %v816
      %875 = vst.msk [vmem:[#allocation2 + $0x40] sm:$0xff] %vm866, %v817
      %876 = vst.msk [vmem:[#allocation2 + $0x48] sm:$0xff] %vm866, %v818
      %877 = vst.msk [vmem:[#allocation2 + $0x50] sm:$0xff] %vm866, %v819
      %878 = vst.msk [vmem:[#allocation2 + $0x58] sm:$0xff] %vm866, %v820
      %879 = vst.msk [vmem:[#allocation2 + $0x60] sm:$0xff] %vm866, %v821
      %880 = vst.msk [vmem:[#allocation2 + $0x68] sm:$0xff] %vm866, %v822
      %881 = vst.msk [vmem:[#allocation2 + $0x70] sm:$0xff] %vm866, %v823
      %882 = vst.msk [vmem:[#allocation2 + $0x78] sm:$0xff] %vm866, %v824
      %883 = vst.msk [vmem:[#allocation2 + $0x80] sm:$0xff] %vm866, %v825
      %884 = vst.msk [vmem:[#allocation2 + $0x88] sm:$0xff] %vm866, %v826
      %885 = vst.msk [vmem:[#allocation2 + $0x90] sm:$0xff] %vm866, %v827
      %886 = vst.msk [vmem:[#allocation2 + $0x98] sm:$0xff] %vm866, %v828
      %887 = vst.msk [vmem:[#allocation2 + $0xa0] sm:$0xff] %vm866, %v829
      %888 = vst.msk [vmem:[#allocation2 + $0xa8] sm:$0xff] %vm866, %v830
      %889 = vst.msk [vmem:[#allocation2 + $0xb0] sm:$0xff] %vm866, %v831
      %890 = vst.msk [vmem:[#allocation2 + $0xb8] sm:$0xff] %vm866, %v832
      %891 = vst.msk [vmem:[#allocation2 + $0xc0] sm:$0xff] %vm866, %v833
      %892 = vst.msk [vmem:[#allocation2 + $0xc8] sm:$0xff] %vm866, %v834
      %893 = vst.msk [vmem:[#allocation2 + $0xd0] sm:$0xff] %vm866, %v835
      %894 = vst.msk [vmem:[#allocation2 + $0xd8] sm:$0xff] %vm866, %v836
      %895 = vst.msk [vmem:[#allocation2 + $0xe0] sm:$0xff] %vm866, %v837
      %896 = vst.msk [vmem:[#allocation2 + $0xe8] sm:$0xff] %vm866, %v838
      %897 = vst.msk [vmem:[#allocation2 + $0xf0] sm:$0xff] %vm866, %v839
      %898 = vst.msk [vmem:[#allocation2 + $0xf8] sm:$0xff] %vm866, %v840
      %899 = vst.msk [vmem:[#allocation2 + $0x100] sm:$0xff] %vm866, %v841
      %900 = vst.msk [vmem:[#allocation2 + $0x108] sm:$0xff] %vm866, %v842
      %901 = vst.msk [vmem:[#allocation2 + $0x110] sm:$0xff] %vm866, %v843
      %902 = vst.msk [vmem:[#allocation2 + $0x118] sm:$0xff] %vm866, %v844
      %903 = vst.msk [vmem:[#allocation2 + $0x120] sm:$0xff] %vm866, %v845
      %904 = vst.msk [vmem:[#allocation2 + $0x128] sm:$0xff] %vm866, %v846
      %905 = vst.msk [vmem:[#allocation2 + $0x130] sm:$0xff] %vm866, %v847
      %906 = vst.msk [vmem:[#allocation2 + $0x138] sm:$0xff] %vm866, %v848
      %907 = vst.msk [vmem:[#allocation2 + $0x140] sm:$0xff] %vm866, %v849
      %908 = vst.msk [vmem:[#allocation2 + $0x148] sm:$0xff] %vm866, %v850
      %909 = vst.msk [vmem:[#allocation2 + $0x150] sm:$0xff] %vm866, %v851
      %910 = vst.msk [vmem:[#allocation2 + $0x158] sm:$0xff] %vm866, %v852
      %911 = vst.msk [vmem:[#allocation2 + $0x160] sm:$0xff] %vm866, %v853
      %912 = vst.msk [vmem:[#allocation2 + $0x168] sm:$0xff] %vm866, %v854
      %913 = vst.msk [vmem:[#allocation2 + $0x170] sm:$0xff] %vm866, %v855
      %914 = vst.msk [vmem:[#allocation2 + $0x178] sm:$0xff] %vm866, %v856
      %915 = vst.msk [vmem:[#allocation2 + $0x180] sm:$0xff] %vm866, %v857
      %916 = vst.msk [vmem:[#allocation2 + $0x188] sm:$0xff] %vm866, %v858
      %917 = vst.msk [vmem:[#allocation2 + $0x190] sm:$0xff] %vm866, %v859
      %918 = vst.msk [vmem:[#allocation2 + $0x198] sm:$0xff] %vm866, %v860
      %919 = vst.msk [vmem:[#allocation2 + $0x1a0] sm:$0xff] %vm866, %v861
      %920 = vst.msk [vmem:[#allocation2 + $0x1a8] sm:$0xff] %vm866, %v862
      %921 = vst.msk [vmem:[#allocation2 + $0x1b0] sm:$0xff] %vm866, %v863
      %922 = vst.msk [vmem:[#allocation2 + $0x1b8] sm:$0xff] %vm866, %v864
      %923 = vst.msk [vmem:[#allocation2 + $0x1c0] sm:$0xff] %vm866, %v865
      %v924 = vld [vmem:[#allocation2] sm:$0xff]
      %v925 = vld [vmem:[#allocation2 + $0x8] sm:$0xff]
      %v926 = vld [vmem:[#allocation2 + $0x10] sm:$0xff]
      %v927 = vld [vmem:[#allocation2 + $0x18] sm:$0xff]
      %v928 = vld [vmem:[#allocation2 + $0x20] sm:$0xff]
      %v929 = vld [vmem:[#allocation2 + $0x28] sm:$0xff]
      %v930 = vld [vmem:[#allocation2 + $0x30] sm:$0xff]
      %v931 = vld [vmem:[#allocation2 + $0x38] sm:$0xff]
      %v932 = vld [vmem:[#allocation2 + $0x40] sm:$0xff]
      %v933 = vld [vmem:[#allocation2 + $0x48] sm:$0xff]
      %v934 = vld [vmem:[#allocation2 + $0x50] sm:$0xff]
      %v935 = vld [vmem:[#allocation2 + $0x58] sm:$0xff]
      %v936 = vld [vmem:[#allocation2 + $0x60] sm:$0xff]
      %v937 = vld [vmem:[#allocation2 + $0x68] sm:$0xff]
      %v938 = vld [vmem:[#allocation2 + $0x70] sm:$0xff]
      %v939 = vld [vmem:[#allocation2 + $0x78] sm:$0xff]
      %v940 = vld [vmem:[#allocation2 + $0x80] sm:$0xff]
      %v941 = vld [vmem:[#allocation2 + $0x88] sm:$0xff]
      %v942 = vld [vmem:[#allocation2 + $0x90] sm:$0xff]
      %v943 = vld [vmem:[#allocation2 + $0x98] sm:$0xff]
      %v944 = vld [vmem:[#allocation2 + $0xa0] sm:$0xff]
      %v945 = vld [vmem:[#allocation2 + $0xa8] sm:$0xff]
      %v946 = vld [vmem:[#allocation2 + $0xb0] sm:$0xff]
      %v947 = vld [vmem:[#allocation2 + $0xb8] sm:$0xff]
      %v948 = vld [vmem:[#allocation2 + $0xc0] sm:$0xff]
      %v949 = vld [vmem:[#allocation2 + $0xc8] sm:$0xff]
      %v950 = vld [vmem:[#allocation2 + $0xd0] sm:$0xff]
      %v951 = vld [vmem:[#allocation2 + $0xd8] sm:$0xff]
      %v952 = vld [vmem:[#allocation2 + $0xe0] sm:$0xff]
      %v953 = vld [vmem:[#allocation2 + $0xe8] sm:$0xff]
      %v954 = vld [vmem:[#allocation2 + $0xf0] sm:$0xff]
      %v955 = vld [vmem:[#allocation2 + $0xf8] sm:$0xff]
      %v956 = vld [vmem:[#allocation2 + $0x100] sm:$0xff]
      %v957 = vld [vmem:[#allocation2 + $0x108] sm:$0xff]
      %v958 = vld [vmem:[#allocation2 + $0x110] sm:$0xff]
      %v959 = vld [vmem:[#allocation2 + $0x118] sm:$0xff]
      %v960 = vld [vmem:[#allocation2 + $0x120] sm:$0xff]
      %v961 = vld [vmem:[#allocation2 + $0x128] sm:$0xff]
      %v962 = vld [vmem:[#allocation2 + $0x130] sm:$0xff]
      %v963 = vld [vmem:[#allocation2 + $0x138] sm:$0xff]
      %v964 = vld [vmem:[#allocation2 + $0x140] sm:$0xff]
      %v965 = vld [vmem:[#allocation2 + $0x148] sm:$0xff]
      %v966 = vld [vmem:[#allocation2 + $0x150] sm:$0xff]
      %v967 = vld [vmem:[#allocation2 + $0x158] sm:$0xff]
      %v968 = vld [vmem:[#allocation2 + $0x160] sm:$0xff]
      %v969 = vld [vmem:[#allocation2 + $0x168] sm:$0xff]
      %v970 = vld [vmem:[#allocation2 + $0x170] sm:$0xff]
      %v971 = vld [vmem:[#allocation2 + $0x178] sm:$0xff]
      %972 = vst.msk [vmem:[#allocation3] sm:$0xff] %vm866, %v924
      %973 = vst.msk [vmem:[#allocation3 + $0x8] sm:$0xff] %vm866, %v925
      %974 = vst.msk [vmem:[#allocation3 + $0x10] sm:$0xff] %vm866, %v926
      %975 = vst.msk [vmem:[#allocation3 + $0x18] sm:$0xff] %vm866, %v927
      %976 = vst.msk [vmem:[#allocation3 + $0x20] sm:$0xff] %vm866, %v928
      %977 = vst.msk [vmem:[#allocation3 + $0x28] sm:$0xff] %vm866, %v929
      %978 = vst.msk [vmem:[#allocation3 + $0x30] sm:$0xff] %vm866, %v930
      %979 = vst.msk [vmem:[#allocation3 + $0x38] sm:$0xff] %vm866, %v931
      %980 = vst.msk [vmem:[#allocation3 + $0x40] sm:$0xff] %vm866, %v932
      %981 = vst.msk [vmem:[#allocation3 + $0x48] sm:$0xff] %vm866, %v933
      %982 = vst.msk [vmem:[#allocation3 + $0x50] sm:$0xff] %vm866, %v934
      %983 = vst.msk [vmem:[#allocation3 + $0x58] sm:$0xff] %vm866, %v935
      %984 = vst.msk [vmem:[#allocation3 + $0x60] sm:$0xff] %vm866, %v936
      %985 = vst.msk [vmem:[#allocation3 + $0x68] sm:$0xff] %vm866, %v937
      %986 = vst.msk [vmem:[#allocation3 + $0x70] sm:$0xff] %vm866, %v938
      %987 = vst.msk [vmem:[#allocation3 + $0x78] sm:$0xff] %vm866, %v939
      %988 = vst.msk [vmem:[#allocation3 + $0x80] sm:$0xff] %vm866, %v940
      %989 = vst.msk [vmem:[#allocation3 + $0x88] sm:$0xff] %vm866, %v941
      %990 = vst.msk [vmem:[#allocation3 + $0x90] sm:$0xff] %vm866, %v942
      %991 = vst.msk [vmem:[#allocation3 + $0x98] sm:$0xff] %vm866, %v943
      %992 = vst.msk [vmem:[#allocation3 + $0xa0] sm:$0xff] %vm866, %v944
      %993 = vst.msk [vmem:[#allocation3 + $0xa8] sm:$0xff] %vm866, %v945
      %994 = vst.msk [vmem:[#allocation3 + $0xb0] sm:$0xff] %vm866, %v946
      %995 = vst.msk [vmem:[#allocation3 + $0xb8] sm:$0xff] %vm866, %v947
      %996 = vst.msk [vmem:[#allocation3 + $0xc0] sm:$0xff] %vm866, %v948
      %997 = vst.msk [vmem:[#allocation3 + $0xc8] sm:$0xff] %vm866, %v949
      %998 = vst.msk [vmem:[#allocation3 + $0xd0] sm:$0xff] %vm866, %v950
      %999 = vst.msk [vmem:[#allocation3 + $0xd8] sm:$0xff] %vm866, %v951
      %1000 = vst.msk [vmem:[#allocation3 + $0xe0] sm:$0xff] %vm866, %v952
      %1001 = vst.msk [vmem:[#allocation3 + $0xe8] sm:$0xff] %vm866, %v953
      %1002 = vst.msk [vmem:[#allocation3 + $0xf0] sm:$0xff] %vm866, %v954
      %1003 = vst.msk [vmem:[#allocation3 + $0xf8] sm:$0xff] %vm866, %v955
      %1004 = vst.msk [vmem:[#allocation3 + $0x100] sm:$0xff] %vm866, %v956
      %1005 = vst.msk [vmem:[#allocation3 + $0x108] sm:$0xff] %vm866, %v957
      %1006 = vst.msk [vmem:[#allocation3 + $0x110] sm:$0xff] %vm866, %v958
      %1007 = vst.msk [vmem:[#allocation3 + $0x118] sm:$0xff] %vm866, %v959
      %1008 = vst.msk [vmem:[#allocation3 + $0x120] sm:$0xff] %vm866, %v960
      %1009 = vst.msk [vmem:[#allocation3 + $0x128] sm:$0xff] %vm866, %v961
      %1010 = vst.msk [vmem:[#allocation3 + $0x130] sm:$0xff] %vm866, %v962
      %1011 = vst.msk [vmem:[#allocation3 + $0x138] sm:$0xff] %vm866, %v963
      %1012 = vst.msk [vmem:[#allocation3 + $0x140] sm:$0xff] %vm866, %v964
      %1013 = vst.msk [vmem:[#allocation3 + $0x148] sm:$0xff] %vm866, %v965
      %1014 = vst.msk [vmem:[#allocation3 + $0x150] sm:$0xff] %vm866, %v966
      %1015 = vst.msk [vmem:[#allocation3 + $0x158] sm:$0xff] %vm866, %v967
      %1016 = vst.msk [vmem:[#allocation3 + $0x160] sm:$0xff] %vm866, %v968
      %1017 = vst.msk [vmem:[#allocation3 + $0x168] sm:$0xff] %vm866, %v969
      %1018 = vst.msk [vmem:[#allocation3 + $0x170] sm:$0xff] %vm866, %v970
      %1019 = vst.msk [vmem:[#allocation3 + $0x178] sm:$0xff] %vm866, %v971
      %v1020 = vld [vmem:[#allocation2 + $0x1] sm:$0xff]
      %v1021 = vld [vmem:[#allocation2 + $0x9] sm:$0xff]
      %v1022 = vld [vmem:[#allocation2 + $0x11] sm:$0xff]
      %v1023 = vld [vmem:[#allocation2 + $0x19] sm:$0xff]
      %v1024 = vld [vmem:[#allocation2 + $0x21] sm:$0xff]
      %v1025 = vld [vmem:[#allocation2 + $0x29] sm:$0xff]
      %v1026 = vld [vmem:[#allocation2 + $0x31] sm:$0xff]
      %v1027 = vld [vmem:[#allocation2 + $0x39] sm:$0xff]
      %v1028 = vld [vmem:[#allocation2 + $0x41] sm:$0xff]
      %v1029 = vld [vmem:[#allocation2 + $0x49] sm:$0xff]
      %v1030 = vld [vmem:[#allocation2 + $0x51] sm:$0xff]
      %v1031 = vld [vmem:[#allocation2 + $0x59] sm:$0xff]
      %v1032 = vld [vmem:[#allocation2 + $0x61] sm:$0xff]
      %v1033 = vld [vmem:[#allocation2 + $0x69] sm:$0xff]
      %v1034 = vld [vmem:[#allocation2 + $0x71] sm:$0xff]
      %v1035 = vld [vmem:[#allocation2 + $0x79] sm:$0xff]
      %v1036 = vld [vmem:[#allocation2 + $0x81] sm:$0xff]
      %v1037 = vld [vmem:[#allocation2 + $0x89] sm:$0xff]
      %v1038 = vld [vmem:[#allocation2 + $0x91] sm:$0xff]
      %v1039 = vld [vmem:[#allocation2 + $0x99] sm:$0xff]
      %v1040 = vld [vmem:[#allocation2 + $0xa1] sm:$0xff]
      %v1041 = vld [vmem:[#allocation2 + $0xa9] sm:$0xff]
      %v1042 = vld [vmem:[#allocation2 + $0xb1] sm:$0xff]
      %v1043 = vld [vmem:[#allocation2 + $0xb9] sm:$0xff]
      %v1044 = vld [vmem:[#allocation2 + $0xc1] sm:$0xff]
      %v1045 = vld [vmem:[#allocation2 + $0xc9] sm:$0xff]
      %v1046 = vld [vmem:[#allocation2 + $0xd1] sm:$0xff]
      %v1047 = vld [vmem:[#allocation2 + $0xd9] sm:$0xff]
      %v1048 = vld [vmem:[#allocation2 + $0xe1] sm:$0xff]
      %v1049 = vld [vmem:[#allocation2 + $0xe9] sm:$0xff]
      %v1050 = vld [vmem:[#allocation2 + $0xf1] sm:$0xff]
      %v1051 = vld [vmem:[#allocation2 + $0xf9] sm:$0xff]
      %v1052 = vld [vmem:[#allocation2 + $0x101] sm:$0xff]
      %v1053 = vld [vmem:[#allocation2 + $0x109] sm:$0xff]
      %v1054 = vld [vmem:[#allocation2 + $0x111] sm:$0xff]
      %v1055 = vld [vmem:[#allocation2 + $0x119] sm:$0xff]
      %v1056 = vld [vmem:[#allocation2 + $0x121] sm:$0xff]
      %v1057 = vld [vmem:[#allocation2 + $0x129] sm:$0xff]
      %v1058 = vld [vmem:[#allocation2 + $0x131] sm:$0xff]
      %v1059 = vld [vmem:[#allocation2 + $0x139] sm:$0xff]
      %v1060 = vld [vmem:[#allocation2 + $0x141] sm:$0xff]
      %v1061 = vld [vmem:[#allocation2 + $0x149] sm:$0xff]
      %v1062 = vld [vmem:[#allocation2 + $0x151] sm:$0xff]
      %v1063 = vld [vmem:[#allocation2 + $0x159] sm:$0xff]
      %v1064 = vld [vmem:[#allocation2 + $0x161] sm:$0xff]
      %v1065 = vld [vmem:[#allocation2 + $0x169] sm:$0xff]
      %v1066 = vld [vmem:[#allocation2 + $0x171] sm:$0xff]
      %v1067 = vld [vmem:[#allocation2 + $0x179] sm:$0xff]
      %1116 = vrot.lane.b32.xlu0 %v1020, 4
      %v1117 = vpop.permute.xlu0 %1116
      %1118 = vrot.lane.b32.xlu0 %v1021, 4
      %v1119 = vpop.permute.xlu0 %1118
      %1120 = vrot.lane.b32.xlu0 %v1022, 4
      %v1121 = vpop.permute.xlu0 %1120
      %1122 = vrot.lane.b32.xlu0 %v1023, 4
      %v1123 = vpop.permute.xlu0 %1122
      %1124 = vrot.lane.b32.xlu0 %v1024, 4
      %v1125 = vpop.permute.xlu0 %1124
      %1126 = vrot.lane.b32.xlu0 %v1025, 4
      %v1127 = vpop.permute.xlu0 %1126
      %1128 = vrot.lane.b32.xlu0 %v1026, 4
      %v1129 = vpop.permute.xlu0 %1128
      %1130 = vrot.lane.b32.xlu0 %v1027, 4
      %v1131 = vpop.permute.xlu0 %1130
      %1132 = vrot.lane.b32.xlu0 %v1028, 4
      %v1133 = vpop.permute.xlu0 %1132
      %1134 = vrot.lane.b32.xlu0 %v1029, 4
      %v1135 = vpop.permute.xlu0 %1134
      %1136 = vrot.lane.b32.xlu0 %v1030, 4
      %v1137 = vpop.permute.xlu0 %1136
      %1138 = vrot.lane.b32.xlu0 %v1031, 4
      %v1139 = vpop.permute.xlu0 %1138
      %1140 = vrot.lane.b32.xlu0 %v1032, 4
      %v1141 = vpop.permute.xlu0 %1140
      %1142 = vrot.lane.b32.xlu0 %v1033, 4
      %v1143 = vpop.permute.xlu0 %1142
      %1144 = vrot.lane.b32.xlu0 %v1034, 4
      %v1145 = vpop.permute.xlu0 %1144
      %1146 = vrot.lane.b32.xlu0 %v1035, 4
      %v1147 = vpop.permute.xlu0 %1146
      %1148 = vrot.lane.b32.xlu0 %v1036, 4
      %v1149 = vpop.permute.xlu0 %1148
      %1150 = vrot.lane.b32.xlu0 %v1037, 4
      %v1151 = vpop.permute.xlu0 %1150
      %1152 = vrot.lane.b32.xlu0 %v1038, 4
      %v1153 = vpop.permute.xlu0 %1152
      %1154 = vrot.lane.b32.xlu0 %v1039, 4
      %v1155 = vpop.permute.xlu0 %1154
      %1156 = vrot.lane.b32.xlu0 %v1040, 4
      %v1157 = vpop.permute.xlu0 %1156
      %1158 = vrot.lane.b32.xlu0 %v1041, 4
      %v1159 = vpop.permute.xlu0 %1158
      %1160 = vrot.lane.b32.xlu0 %v1042, 4
      %v1161 = vpop.permute.xlu0 %1160
      %1162 = vrot.lane.b32.xlu0 %v1043, 4
      %v1163 = vpop.permute.xlu0 %1162
      %1164 = vrot.lane.b32.xlu0 %v1044, 4
      %v1165 = vpop.permute.xlu0 %1164
      %1166 = vrot.lane.b32.xlu0 %v1045, 4
      %v1167 = vpop.permute.xlu0 %1166
      %1168 = vrot.lane.b32.xlu0 %v1046, 4
      %v1169 = vpop.permute.xlu0 %1168
      %1170 = vrot.lane.b32.xlu0 %v1047, 4
      %v1171 = vpop.permute.xlu0 %1170
      %1172 = vrot.lane.b32.xlu0 %v1048, 4
      %v1173 = vpop.permute.xlu0 %1172
      %1174 = vrot.lane.b32.xlu0 %v1049, 4
      %v1175 = vpop.permute.xlu0 %1174
      %1176 = vrot.lane.b32.xlu0 %v1050, 4
      %v1177 = vpop.permute.xlu0 %1176
      %1178 = vrot.lane.b32.xlu0 %v1051, 4
      %v1179 = vpop.permute.xlu0 %1178
      %1180 = vrot.lane.b32.xlu0 %v1052, 4
      %v1181 = vpop.permute.xlu0 %1180
      %1182 = vrot.lane.b32.xlu0 %v1053, 4
      %v1183 = vpop.permute.xlu0 %1182
      %1184 = vrot.lane.b32.xlu0 %v1054, 4
      %v1185 = vpop.permute.xlu0 %1184
      %1186 = vrot.lane.b32.xlu0 %v1055, 4
      %v1187 = vpop.permute.xlu0 %1186
      %1188 = vrot.lane.b32.xlu0 %v1056, 4
      %v1189 = vpop.permute.xlu0 %1188
      %1190 = vrot.lane.b32.xlu0 %v1057, 4
      %v1191 = vpop.permute.xlu0 %1190
      %1192 = vrot.lane.b32.xlu0 %v1058, 4
      %v1193 = vpop.permute.xlu0 %1192
      %1194 = vrot.lane.b32.xlu0 %v1059, 4
      %v1195 = vpop.permute.xlu0 %1194
      %1196 = vrot.lane.b32.xlu0 %v1060, 4
      %v1197 = vpop.permute.xlu0 %1196
      %1198 = vrot.lane.b32.xlu0 %v1061, 4
      %v1199 = vpop.permute.xlu0 %1198
      %1200 = vrot.lane.b32.xlu0 %v1062, 4
      %v1201 = vpop.permute.xlu0 %1200
      %1202 = vrot.lane.b32.xlu0 %v1063, 4
      %v1203 = vpop.permute.xlu0 %1202
      %1204 = vrot.lane.b32.xlu0 %v1064, 4
      %v1205 = vpop.permute.xlu0 %1204
      %1206 = vrot.lane.b32.xlu0 %v1065, 4
      %v1207 = vpop.permute.xlu0 %1206
      %1208 = vrot.lane.b32.xlu0 %v1066, 4
      %v1209 = vpop.permute.xlu0 %1208
      %1210 = vrot.lane.b32.xlu0 %v1067, 4
      %v1211 = vpop.permute.xlu0 %1210
      %vm1260 = vcmask 64544
      %1261 = vst.msk [vmem:[#allocation3] sm:$0xff] %vm1260, %v1117
      %1262 = vst.msk [vmem:[#allocation3 + $0x8] sm:$0xff] %vm1260, %v1119
      %1263 = vst.msk [vmem:[#allocation3 + $0x10] sm:$0xff] %vm1260, %v1121
      %1264 = vst.msk [vmem:[#allocation3 + $0x18] sm:$0xff] %vm1260, %v1123
      %1265 = vst.msk [vmem:[#allocation3 + $0x20] sm:$0xff] %vm1260, %v1125
      %1266 = vst.msk [vmem:[#allocation3 + $0x28] sm:$0xff] %vm1260, %v1127
      %1267 = vst.msk [vmem:[#allocation3 + $0x30] sm:$0xff] %vm1260, %v1129
      %1268 = vst.msk [vmem:[#allocation3 + $0x38] sm:$0xff] %vm1260, %v1131
      %1269 = vst.msk [vmem:[#allocation3 + $0x40] sm:$0xff] %vm1260, %v1133
      %1270 = vst.msk [vmem:[#allocation3 + $0x48] sm:$0xff] %vm1260, %v1135
      %1271 = vst.msk [vmem:[#allocation3 + $0x50] sm:$0xff] %vm1260, %v1137
      %1272 = vst.msk [vmem:[#allocation3 + $0x58] sm:$0xff] %vm1260, %v1139
      %1273 = vst.msk [vmem:[#allocation3 + $0x60] sm:$0xff] %vm1260, %v1141
      %1274 = vst.msk [vmem:[#allocation3 + $0x68] sm:$0xff] %vm1260, %v1143
      %1275 = vst.msk [vmem:[#allocation3 + $0x70] sm:$0xff] %vm1260, %v1145
      %1276 = vst.msk [vmem:[#allocation3 + $0x78] sm:$0xff] %vm1260, %v1147
      %1277 = vst.msk [vmem:[#allocation3 + $0x80] sm:$0xff] %vm1260, %v1149
      %1278 = vst.msk [vmem:[#allocation3 + $0x88] sm:$0xff] %vm1260, %v1151
      %1279 = vst.msk [vmem:[#allocation3 + $0x90] sm:$0xff] %vm1260, %v1153
      %1280 = vst.msk [vmem:[#allocation3 + $0x98] sm:$0xff] %vm1260, %v1155
      %1281 = vst.msk [vmem:[#allocation3 + $0xa0] sm:$0xff] %vm1260, %v1157
      %1282 = vst.msk [vmem:[#allocation3 + $0xa8] sm:$0xff] %vm1260, %v1159
      %1283 = vst.msk [vmem:[#allocation3 + $0xb0] sm:$0xff] %vm1260, %v1161
      %1284 = vst.msk [vmem:[#allocation3 + $0xb8] sm:$0xff] %vm1260, %v1163
      %1285 = vst.msk [vmem:[#allocation3 + $0xc0] sm:$0xff] %vm1260, %v1165
      %1286 = vst.msk [vmem:[#allocation3 + $0xc8] sm:$0xff] %vm1260, %v1167
      %1287 = vst.msk [vmem:[#allocation3 + $0xd0] sm:$0xff] %vm1260, %v1169
      %1288 = vst.msk [vmem:[#allocation3 + $0xd8] sm:$0xff] %vm1260, %v1171
      %1289 = vst.msk [vmem:[#allocation3 + $0xe0] sm:$0xff] %vm1260, %v1173
      %1290 = vst.msk [vmem:[#allocation3 + $0xe8] sm:$0xff] %vm1260, %v1175
      %1291 = vst.msk [vmem:[#allocation3 + $0xf0] sm:$0xff] %vm1260, %v1177
      %1292 = vst.msk [vmem:[#allocation3 + $0xf8] sm:$0xff] %vm1260, %v1179
      %1293 = vst.msk [vmem:[#allocation3 + $0x100] sm:$0xff] %vm1260, %v1181
      %1294 = vst.msk [vmem:[#allocation3 + $0x108] sm:$0xff] %vm1260, %v1183
      %1295 = vst.msk [vmem:[#allocation3 + $0x110] sm:$0xff] %vm1260, %v1185
      %1296 = vst.msk [vmem:[#allocation3 + $0x118] sm:$0xff] %vm1260, %v1187
      %1297 = vst.msk [vmem:[#allocation3 + $0x120] sm:$0xff] %vm1260, %v1189
      %1298 = vst.msk [vmem:[#allocation3 + $0x128] sm:$0xff] %vm1260, %v1191
      %1299 = vst.msk [vmem:[#allocation3 + $0x130] sm:$0xff] %vm1260, %v1193
      %1300 = vst.msk [vmem:[#allocation3 + $0x138] sm:$0xff] %vm1260, %v1195
      %1301 = vst.msk [vmem:[#allocation3 + $0x140] sm:$0xff] %vm1260, %v1197
      %1302 = vst.msk [vmem:[#allocation3 + $0x148] sm:$0xff] %vm1260, %v1199
      %1303 = vst.msk [vmem:[#allocation3 + $0x150] sm:$0xff] %vm1260, %v1201
      %1304 = vst.msk [vmem:[#allocation3 + $0x158] sm:$0xff] %vm1260, %v1203
      %1305 = vst.msk [vmem:[#allocation3 + $0x160] sm:$0xff] %vm1260, %v1205
      %1306 = vst.msk [vmem:[#allocation3 + $0x168] sm:$0xff] %vm1260, %v1207
      %1307 = vst.msk [vmem:[#allocation3 + $0x170] sm:$0xff] %vm1260, %v1209
      %1308 = vst.msk [vmem:[#allocation3 + $0x178] sm:$0xff] %vm1260, %v1211
      %v1309 = vld [vmem:[#allocation2 + $0x2] sm:$0xff]
      %v1310 = vld [vmem:[#allocation2 + $0xa] sm:$0xff]
      %v1311 = vld [vmem:[#allocation2 + $0x12] sm:$0xff]
      %v1312 = vld [vmem:[#allocation2 + $0x1a] sm:$0xff]
      %v1313 = vld [vmem:[#allocation2 + $0x22] sm:$0xff]
      %v1314 = vld [vmem:[#allocation2 + $0x2a] sm:$0xff]
      %v1315 = vld [vmem:[#allocation2 + $0x32] sm:$0xff]
      %v1316 = vld [vmem:[#allocation2 + $0x3a] sm:$0xff]
      %v1317 = vld [vmem:[#allocation2 + $0x42] sm:$0xff]
      %v1318 = vld [vmem:[#allocation2 + $0x4a] sm:$0xff]
      %v1319 = vld [vmem:[#allocation2 + $0x52] sm:$0xff]
      %v1320 = vld [vmem:[#allocation2 + $0x5a] sm:$0xff]
      %v1321 = vld [vmem:[#allocation2 + $0x62] sm:$0xff]
      %v1322 = vld [vmem:[#allocation2 + $0x6a] sm:$0xff]
      %v1323 = vld [vmem:[#allocation2 + $0x72] sm:$0xff]
      %v1324 = vld [vmem:[#allocation2 + $0x7a] sm:$0xff]
      %v1325 = vld [vmem:[#allocation2 + $0x82] sm:$0xff]
      %v1326 = vld [vmem:[#allocation2 + $0x8a] sm:$0xff]
      %v1327 = vld [vmem:[#allocation2 + $0x92] sm:$0xff]
      %v1328 = vld [vmem:[#allocation2 + $0x9a] sm:$0xff]
      %v1329 = vld [vmem:[#allocation2 + $0xa2] sm:$0xff]
      %v1330 = vld [vmem:[#allocation2 + $0xaa] sm:$0xff]
      %v1331 = vld [vmem:[#allocation2 + $0xb2] sm:$0xff]
      %v1332 = vld [vmem:[#allocation2 + $0xba] sm:$0xff]
      %v1333 = vld [vmem:[#allocation2 + $0xc2] sm:$0xff]
      %v1334 = vld [vmem:[#allocation2 + $0xca] sm:$0xff]
      %v1335 = vld [vmem:[#allocation2 + $0xd2] sm:$0xff]
      %v1336 = vld [vmem:[#allocation2 + $0xda] sm:$0xff]
      %v1337 = vld [vmem:[#allocation2 + $0xe2] sm:$0xff]
      %v1338 = vld [vmem:[#allocation2 + $0xea] sm:$0xff]
      %v1339 = vld [vmem:[#allocation2 + $0xf2] sm:$0xff]
      %v1340 = vld [vmem:[#allocation2 + $0xfa] sm:$0xff]
      %v1341 = vld [vmem:[#allocation2 + $0x102] sm:$0xff]
      %v1342 = vld [vmem:[#allocation2 + $0x10a] sm:$0xff]
      %v1343 = vld [vmem:[#allocation2 + $0x112] sm:$0xff]
      %v1344 = vld [vmem:[#allocation2 + $0x11a] sm:$0xff]
      %v1345 = vld [vmem:[#allocation2 + $0x122] sm:$0xff]
      %v1346 = vld [vmem:[#allocation2 + $0x12a] sm:$0xff]
      %v1347 = vld [vmem:[#allocation2 + $0x132] sm:$0xff]
      %v1348 = vld [vmem:[#allocation2 + $0x13a] sm:$0xff]
      %v1349 = vld [vmem:[#allocation2 + $0x142] sm:$0xff]
      %v1350 = vld [vmem:[#allocation2 + $0x14a] sm:$0xff]
      %v1351 = vld [vmem:[#allocation2 + $0x152] sm:$0xff]
      %v1352 = vld [vmem:[#allocation2 + $0x15a] sm:$0xff]
      %v1353 = vld [vmem:[#allocation2 + $0x162] sm:$0xff]
      %v1354 = vld [vmem:[#allocation2 + $0x16a] sm:$0xff]
      %v1355 = vld [vmem:[#allocation2 + $0x172] sm:$0xff]
      %v1356 = vld [vmem:[#allocation2 + $0x17a] sm:$0xff]
      %1405 = vrot.lane.b32.xlu0 %v1309, 8
      %v1406 = vpop.permute.xlu0 %1405
      %1407 = vrot.lane.b32.xlu0 %v1310, 8
      %v1408 = vpop.permute.xlu0 %1407
      %1409 = vrot.lane.b32.xlu0 %v1311, 8
      %v1410 = vpop.permute.xlu0 %1409
      %1411 = vrot.lane.b32.xlu0 %v1312, 8
      %v1412 = vpop.permute.xlu0 %1411
      %1413 = vrot.lane.b32.xlu0 %v1313, 8
      %v1414 = vpop.permute.xlu0 %1413
      %1415 = vrot.lane.b32.xlu0 %v1314, 8
      %v1416 = vpop.permute.xlu0 %1415
      %1417 = vrot.lane.b32.xlu0 %v1315, 8
      %v1418 = vpop.permute.xlu0 %1417
      %1419 = vrot.lane.b32.xlu0 %v1316, 8
      %v1420 = vpop.permute.xlu0 %1419
      %1421 = vrot.lane.b32.xlu0 %v1317, 8
      %v1422 = vpop.permute.xlu0 %1421
      %1423 = vrot.lane.b32.xlu0 %v1318, 8
      %v1424 = vpop.permute.xlu0 %1423
      %1425 = vrot.lane.b32.xlu0 %v1319, 8
      %v1426 = vpop.permute.xlu0 %1425
      %1427 = vrot.lane.b32.xlu0 %v1320, 8
      %v1428 = vpop.permute.xlu0 %1427
      %1429 = vrot.lane.b32.xlu0 %v1321, 8
      %v1430 = vpop.permute.xlu0 %1429
      %1431 = vrot.lane.b32.xlu0 %v1322, 8
      %v1432 = vpop.permute.xlu0 %1431
      %1433 = vrot.lane.b32.xlu0 %v1323, 8
      %v1434 = vpop.permute.xlu0 %1433
      %1435 = vrot.lane.b32.xlu0 %v1324, 8
      %v1436 = vpop.permute.xlu0 %1435
      %1437 = vrot.lane.b32.xlu0 %v1325, 8
      %v1438 = vpop.permute.xlu0 %1437
      %1439 = vrot.lane.b32.xlu0 %v1326, 8
      %v1440 = vpop.permute.xlu0 %1439
      %1441 = vrot.lane.b32.xlu0 %v1327, 8
      %v1442 = vpop.permute.xlu0 %1441
      %1443 = vrot.lane.b32.xlu0 %v1328, 8
      %v1444 = vpop.permute.xlu0 %1443
      %1445 = vrot.lane.b32.xlu0 %v1329, 8
      %v1446 = vpop.permute.xlu0 %1445
      %1447 = vrot.lane.b32.xlu0 %v1330, 8
      %v1448 = vpop.permute.xlu0 %1447
      %1449 = vrot.lane.b32.xlu0 %v1331, 8
      %v1450 = vpop.permute.xlu0 %1449
      %1451 = vrot.lane.b32.xlu0 %v1332, 8
      %v1452 = vpop.permute.xlu0 %1451
      %1453 = vrot.lane.b32.xlu0 %v1333, 8
      %v1454 = vpop.permute.xlu0 %1453
      %1455 = vrot.lane.b32.xlu0 %v1334, 8
      %v1456 = vpop.permute.xlu0 %1455
      %1457 = vrot.lane.b32.xlu0 %v1335, 8
      %v1458 = vpop.permute.xlu0 %1457
      %1459 = vrot.lane.b32.xlu0 %v1336, 8
      %v1460 = vpop.permute.xlu0 %1459
      %1461 = vrot.lane.b32.xlu0 %v1337, 8
      %v1462 = vpop.permute.xlu0 %1461
      %1463 = vrot.lane.b32.xlu0 %v1338, 8
      %v1464 = vpop.permute.xlu0 %1463
      %1465 = vrot.lane.b32.xlu0 %v1339, 8
      %v1466 = vpop.permute.xlu0 %1465
      %1467 = vrot.lane.b32.xlu0 %v1340, 8
      %v1468 = vpop.permute.xlu0 %1467
      %1469 = vrot.lane.b32.xlu0 %v1341, 8
      %v1470 = vpop.permute.xlu0 %1469
      %1471 = vrot.lane.b32.xlu0 %v1342, 8
      %v1472 = vpop.permute.xlu0 %1471
      %1473 = vrot.lane.b32.xlu0 %v1343, 8
      %v1474 = vpop.permute.xlu0 %1473
      %1475 = vrot.lane.b32.xlu0 %v1344, 8
      %v1476 = vpop.permute.xlu0 %1475
      %1477 = vrot.lane.b32.xlu0 %v1345, 8
      %v1478 = vpop.permute.xlu0 %1477
      %1479 = vrot.lane.b32.xlu0 %v1346, 8
      %v1480 = vpop.permute.xlu0 %1479
      %1481 = vrot.lane.b32.xlu0 %v1347, 8
      %v1482 = vpop.permute.xlu0 %1481
      %1483 = vrot.lane.b32.xlu0 %v1348, 8
      %v1484 = vpop.permute.xlu0 %1483
      %1485 = vrot.lane.b32.xlu0 %v1349, 8
      %v1486 = vpop.permute.xlu0 %1485
      %1487 = vrot.lane.b32.xlu0 %v1350, 8
      %v1488 = vpop.permute.xlu0 %1487
      %1489 = vrot.lane.b32.xlu0 %v1351, 8
      %v1490 = vpop.permute.xlu0 %1489
      %1491 = vrot.lane.b32.xlu0 %v1352, 8
      %v1492 = vpop.permute.xlu0 %1491
      %1493 = vrot.lane.b32.xlu0 %v1353, 8
      %v1494 = vpop.permute.xlu0 %1493
      %1495 = vrot.lane.b32.xlu0 %v1354, 8
      %v1496 = vpop.permute.xlu0 %1495
      %1497 = vrot.lane.b32.xlu0 %v1355, 8
      %v1498 = vpop.permute.xlu0 %1497
      %1499 = vrot.lane.b32.xlu0 %v1356, 8
      %v1500 = vpop.permute.xlu0 %1499
      %vm1549 = vcmask 97344
      %1550 = vst.msk [vmem:[#allocation3] sm:$0xff] %vm1549, %v1406
      %1551 = vst.msk [vmem:[#allocation3 + $0x8] sm:$0xff] %vm1549, %v1408
      %1552 = vst.msk [vmem:[#allocation3 + $0x10] sm:$0xff] %vm1549, %v1410
      %1553 = vst.msk [vmem:[#allocation3 + $0x18] sm:$0xff] %vm1549, %v1412
      %1554 = vst.msk [vmem:[#allocation3 + $0x20] sm:$0xff] %vm1549, %v1414
      %1555 = vst.msk [vmem:[#allocation3 + $0x28] sm:$0xff] %vm1549, %v1416
      %1556 = vst.msk [vmem:[#allocation3 + $0x30] sm:$0xff] %vm1549, %v1418
      %1557 = vst.msk [vmem:[#allocation3 + $0x38] sm:$0xff] %vm1549, %v1420
      %1558 = vst.msk [vmem:[#allocation3 + $0x40] sm:$0xff] %vm1549, %v1422
      %1559 = vst.msk [vmem:[#allocation3 + $0x48] sm:$0xff] %vm1549, %v1424
      %1560 = vst.msk [vmem:[#allocation3 + $0x50] sm:$0xff] %vm1549, %v1426
      %1561 = vst.msk [vmem:[#allocation3 + $0x58] sm:$0xff] %vm1549, %v1428
      %1562 = vst.msk [vmem:[#allocation3 + $0x60] sm:$0xff] %vm1549, %v1430
      %1563 = vst.msk [vmem:[#allocation3 + $0x68] sm:$0xff] %vm1549, %v1432
      %1564 = vst.msk [vmem:[#allocation3 + $0x70] sm:$0xff] %vm1549, %v1434
      %1565 = vst.msk [vmem:[#allocation3 + $0x78] sm:$0xff] %vm1549, %v1436
      %1566 = vst.msk [vmem:[#allocation3 + $0x80] sm:$0xff] %vm1549, %v1438
      %1567 = vst.msk [vmem:[#allocation3 + $0x88] sm:$0xff] %vm1549, %v1440
      %1568 = vst.msk [vmem:[#allocation3 + $0x90] sm:$0xff] %vm1549, %v1442
      %1569 = vst.msk [vmem:[#allocation3 + $0x98] sm:$0xff] %vm1549, %v1444
      %1570 = vst.msk [vmem:[#allocation3 + $0xa0] sm:$0xff] %vm1549, %v1446
      %1571 = vst.msk [vmem:[#allocation3 + $0xa8] sm:$0xff] %vm1549, %v1448
      %1572 = vst.msk [vmem:[#allocation3 + $0xb0] sm:$0xff] %vm1549, %v1450
      %1573 = vst.msk [vmem:[#allocation3 + $0xb8] sm:$0xff] %vm1549, %v1452
      %1574 = vst.msk [vmem:[#allocation3 + $0xc0] sm:$0xff] %vm1549, %v1454
      %1575 = vst.msk [vmem:[#allocation3 + $0xc8] sm:$0xff] %vm1549, %v1456
      %1576 = vst.msk [vmem:[#allocation3 + $0xd0] sm:$0xff] %vm1549, %v1458
      %1577 = vst.msk [vmem:[#allocation3 + $0xd8] sm:$0xff] %vm1549, %v1460
      %1578 = vst.msk [vmem:[#allocation3 + $0xe0] sm:$0xff] %vm1549, %v1462
      %1579 = vst.msk [vmem:[#allocation3 + $0xe8] sm:$0xff] %vm1549, %v1464
      %1580 = vst.msk [vmem:[#allocation3 + $0xf0] sm:$0xff] %vm1549, %v1466
      %1581 = vst.msk [vmem:[#allocation3 + $0xf8] sm:$0xff] %vm1549, %v1468
      %1582 = vst.msk [vmem:[#allocation3 + $0x100] sm:$0xff] %vm1549, %v1470
      %1583 = vst.msk [vmem:[#allocation3 + $0x108] sm:$0xff] %vm1549, %v1472
      %1584 = vst.msk [vmem:[#allocation3 + $0x110] sm:$0xff] %vm1549, %v1474
      %1585 = vst.msk [vmem:[#allocation3 + $0x118] sm:$0xff] %vm1549, %v1476
      %1586 = vst.msk [vmem:[#allocation3 + $0x120] sm:$0xff] %vm1549, %v1478
      %1587 = vst.msk [vmem:[#allocation3 + $0x128] sm:$0xff] %vm1549, %v1480
      %1588 = vst.msk [vmem:[#allocation3 + $0x130] sm:$0xff] %vm1549, %v1482
      %1589 = vst.msk [vmem:[#allocation3 + $0x138] sm:$0xff] %vm1549, %v1484
      %1590 = vst.msk [vmem:[#allocation3 + $0x140] sm:$0xff] %vm1549, %v1486
      %1591 = vst.msk [vmem:[#allocation3 + $0x148] sm:$0xff] %vm1549, %v1488
      %1592 = vst.msk [vmem:[#allocation3 + $0x150] sm:$0xff] %vm1549, %v1490
      %1593 = vst.msk [vmem:[#allocation3 + $0x158] sm:$0xff] %vm1549, %v1492
      %1594 = vst.msk [vmem:[#allocation3 + $0x160] sm:$0xff] %vm1549, %v1494
      %1595 = vst.msk [vmem:[#allocation3 + $0x168] sm:$0xff] %vm1549, %v1496
      %1596 = vst.msk [vmem:[#allocation3 + $0x170] sm:$0xff] %vm1549, %v1498
      %1597 = vst.msk [vmem:[#allocation3 + $0x178] sm:$0xff] %vm1549, %v1500
      %v1598 = vld [vmem:[#allocation2 + $0x18] sm:$0xff]
      %v1599 = vld [vmem:[#allocation2 + $0x20] sm:$0xff]
      %v1600 = vld [vmem:[#allocation2 + $0x28] sm:$0xff]
      %v1601 = vld [vmem:[#allocation2 + $0x30] sm:$0xff]
      %v1602 = vld [vmem:[#allocation2 + $0x38] sm:$0xff]
      %v1603 = vld [vmem:[#allocation2 + $0x40] sm:$0xff]
      %v1604 = vld [vmem:[#allocation2 + $0x48] sm:$0xff]
      %v1605 = vld [vmem:[#allocation2 + $0x50] sm:$0xff]
      %v1606 = vld [vmem:[#allocation2 + $0x58] sm:$0xff]
      %v1607 = vld [vmem:[#allocation2 + $0x60] sm:$0xff]
      %v1608 = vld [vmem:[#allocation2 + $0x68] sm:$0xff]
      %v1609 = vld [vmem:[#allocation2 + $0x70] sm:$0xff]
      %v1610 = vld [vmem:[#allocation2 + $0x78] sm:$0xff]
      %v1611 = vld [vmem:[#allocation2 + $0x80] sm:$0xff]
      %v1612 = vld [vmem:[#allocation2 + $0x88] sm:$0xff]
      %v1613 = vld [vmem:[#allocation2 + $0x90] sm:$0xff]
      %v1614 = vld [vmem:[#allocation2 + $0x98] sm:$0xff]
      %v1615 = vld [vmem:[#allocation2 + $0xa0] sm:$0xff]
      %v1616 = vld [vmem:[#allocation2 + $0xa8] sm:$0xff]
      %v1617 = vld [vmem:[#allocation2 + $0xb0] sm:$0xff]
      %v1618 = vld [vmem:[#allocation2 + $0xb8] sm:$0xff]
      %v1619 = vld [vmem:[#allocation2 + $0xc0] sm:$0xff]
      %v1620 = vld [vmem:[#allocation2 + $0xc8] sm:$0xff]
      %v1621 = vld [vmem:[#allocation2 + $0xd0] sm:$0xff]
      %v1622 = vld [vmem:[#allocation2 + $0xd8] sm:$0xff]
      %v1623 = vld [vmem:[#allocation2 + $0xe0] sm:$0xff]
      %v1624 = vld [vmem:[#allocation2 + $0xe8] sm:$0xff]
      %v1625 = vld [vmem:[#allocation2 + $0xf0] sm:$0xff]
      %v1626 = vld [vmem:[#allocation2 + $0xf8] sm:$0xff]
      %v1627 = vld [vmem:[#allocation2 + $0x100] sm:$0xff]
      %v1628 = vld [vmem:[#allocation2 + $0x108] sm:$0xff]
      %v1629 = vld [vmem:[#allocation2 + $0x110] sm:$0xff]
      %v1630 = vld [vmem:[#allocation2 + $0x118] sm:$0xff]
      %v1631 = vld [vmem:[#allocation2 + $0x120] sm:$0xff]
      %v1632 = vld [vmem:[#allocation2 + $0x128] sm:$0xff]
      %v1633 = vld [vmem:[#allocation2 + $0x130] sm:$0xff]
      %v1634 = vld [vmem:[#allocation2 + $0x138] sm:$0xff]
      %v1635 = vld [vmem:[#allocation2 + $0x140] sm:$0xff]
      %v1636 = vld [vmem:[#allocation2 + $0x148] sm:$0xff]
      %v1637 = vld [vmem:[#allocation2 + $0x150] sm:$0xff]
      %v1638 = vld [vmem:[#allocation2 + $0x158] sm:$0xff]
      %v1639 = vld [vmem:[#allocation2 + $0x160] sm:$0xff]
      %v1640 = vld [vmem:[#allocation2 + $0x168] sm:$0xff]
      %v1641 = vld [vmem:[#allocation2 + $0x170] sm:$0xff]
      %v1642 = vld [vmem:[#allocation2 + $0x178] sm:$0xff]
      %v1643 = vld [vmem:[#allocation2 + $0x180] sm:$0xff]
      %v1644 = vld [vmem:[#allocation2 + $0x188] sm:$0xff]
      %v1645 = vld [vmem:[#allocation2 + $0x190] sm:$0xff]
      %1694 = vrot.lane.b32.xlu0 %v1598, 12
      %v1695 = vpop.permute.xlu0 %1694
      %1696 = vrot.lane.b32.xlu0 %v1599, 12
      %v1697 = vpop.permute.xlu0 %1696
      %1698 = vrot.lane.b32.xlu0 %v1600, 12
      %v1699 = vpop.permute.xlu0 %1698
      %1700 = vrot.lane.b32.xlu0 %v1601, 12
      %v1701 = vpop.permute.xlu0 %1700
      %1702 = vrot.lane.b32.xlu0 %v1602, 12
      %v1703 = vpop.permute.xlu0 %1702
      %1704 = vrot.lane.b32.xlu0 %v1603, 12
      %v1705 = vpop.permute.xlu0 %1704
      %1706 = vrot.lane.b32.xlu0 %v1604, 12
      %v1707 = vpop.permute.xlu0 %1706
      %1708 = vrot.lane.b32.xlu0 %v1605, 12
      %v1709 = vpop.permute.xlu0 %1708
      %1710 = vrot.lane.b32.xlu0 %v1606, 12
      %v1711 = vpop.permute.xlu0 %1710
      %1712 = vrot.lane.b32.xlu0 %v1607, 12
      %v1713 = vpop.permute.xlu0 %1712
      %1714 = vrot.lane.b32.xlu0 %v1608, 12
      %v1715 = vpop.permute.xlu0 %1714
      %1716 = vrot.lane.b32.xlu0 %v1609, 12
      %v1717 = vpop.permute.xlu0 %1716
      %1718 = vrot.lane.b32.xlu0 %v1610, 12
      %v1719 = vpop.permute.xlu0 %1718
      %1720 = vrot.lane.b32.xlu0 %v1611, 12
      %v1721 = vpop.permute.xlu0 %1720
      %1722 = vrot.lane.b32.xlu0 %v1612, 12
      %v1723 = vpop.permute.xlu0 %1722
      %1724 = vrot.lane.b32.xlu0 %v1613, 12
      %v1725 = vpop.permute.xlu0 %1724
      %1726 = vrot.lane.b32.xlu0 %v1614, 12
      %v1727 = vpop.permute.xlu0 %1726
      %1728 = vrot.lane.b32.xlu0 %v1615, 12
      %v1729 = vpop.permute.xlu0 %1728
      %1730 = vrot.lane.b32.xlu0 %v1616, 12
      %v1731 = vpop.permute.xlu0 %1730
      %1732 = vrot.lane.b32.xlu0 %v1617, 12
      %v1733 = vpop.permute.xlu0 %1732
      %1734 = vrot.lane.b32.xlu0 %v1618, 12
      %v1735 = vpop.permute.xlu0 %1734
      %1736 = vrot.lane.b32.xlu0 %v1619, 12
      %v1737 = vpop.permute.xlu0 %1736
      %1738 = vrot.lane.b32.xlu0 %v1620, 12
      %v1739 = vpop.permute.xlu0 %1738
      %1740 = vrot.lane.b32.xlu0 %v1621, 12
      %v1741 = vpop.permute.xlu0 %1740
      %1742 = vrot.lane.b32.xlu0 %v1622, 12
      %v1743 = vpop.permute.xlu0 %1742
      %1744 = vrot.lane.b32.xlu0 %v1623, 12
      %v1745 = vpop.permute.xlu0 %1744
      %1746 = vrot.lane.b32.xlu0 %v1624, 12
      %v1747 = vpop.permute.xlu0 %1746
      %1748 = vrot.lane.b32.xlu0 %v1625, 12
      %v1749 = vpop.permute.xlu0 %1748
      %1750 = vrot.lane.b32.xlu0 %v1626, 12
      %v1751 = vpop.permute.xlu0 %1750
      %1752 = vrot.lane.b32.xlu0 %v1627, 12
      %v1753 = vpop.permute.xlu0 %1752
      %1754 = vrot.lane.b32.xlu0 %v1628, 12
      %v1755 = vpop.permute.xlu0 %1754
      %1756 = vrot.lane.b32.xlu0 %v1629, 12
      %v1757 = vpop.permute.xlu0 %1756
      %1758 = vrot.lane.b32.xlu0 %v1630, 12
      %v1759 = vpop.permute.xlu0 %1758
      %1760 = vrot.lane.b32.xlu0 %v1631, 12
      %v1761 = vpop.permute.xlu0 %1760
      %1762 = vrot.lane.b32.xlu0 %v1632, 12
      %v1763 = vpop.permute.xlu0 %1762
      %1764 = vrot.lane.b32.xlu0 %v1633, 12
      %v1765 = vpop.permute.xlu0 %1764
      %1766 = vrot.lane.b32.xlu0 %v1634, 12
      %v1767 = vpop.permute.xlu0 %1766
      %1768 = vrot.lane.b32.xlu0 %v1635, 12
      %v1769 = vpop.permute.xlu0 %1768
      %1770 = vrot.lane.b32.xlu0 %v1636, 12
      %v1771 = vpop.permute.xlu0 %1770
      %1772 = vrot.lane.b32.xlu0 %v1637, 12
      %v1773 = vpop.permute.xlu0 %1772
      %1774 = vrot.lane.b32.xlu0 %v1638, 12
      %v1775 = vpop.permute.xlu0 %1774
      %1776 = vrot.lane.b32.xlu0 %v1639, 12
      %v1777 = vpop.permute.xlu0 %1776
      %1778 = vrot.lane.b32.xlu0 %v1640, 12
      %v1779 = vpop.permute.xlu0 %1778
      %1780 = vrot.lane.b32.xlu0 %v1641, 12
      %v1781 = vpop.permute.xlu0 %1780
      %1782 = vrot.lane.b32.xlu0 %v1642, 12
      %v1783 = vpop.permute.xlu0 %1782
      %1784 = vrot.lane.b32.xlu0 %v1643, 12
      %v1785 = vpop.permute.xlu0 %1784
      %1786 = vrot.lane.b32.xlu0 %v1644, 12
      %v1787 = vpop.permute.xlu0 %1786
      %1788 = vrot.lane.b32.xlu0 %v1645, 12
      %v1789 = vpop.permute.xlu0 %1788
      %vm1838 = vcmask 130144
      %1839 = vst.msk [vmem:[#allocation3] sm:$0xff] %vm1838, %v1695
      %1840 = vst.msk [vmem:[#allocation3 + $0x8] sm:$0xff] %vm1838, %v1697
      %1841 = vst.msk [vmem:[#allocation3 + $0x10] sm:$0xff] %vm1838, %v1699
      %1842 = vst.msk [vmem:[#allocation3 + $0x18] sm:$0xff] %vm1838, %v1701
      %1843 = vst.msk [vmem:[#allocation3 + $0x20] sm:$0xff] %vm1838, %v1703
      %1844 = vst.msk [vmem:[#allocation3 + $0x28] sm:$0xff] %vm1838, %v1705
      %1845 = vst.msk [vmem:[#allocation3 + $0x30] sm:$0xff] %vm1838, %v1707
      %1846 = vst.msk [vmem:[#allocation3 + $0x38] sm:$0xff] %vm1838, %v1709
      %1847 = vst.msk [vmem:[#allocation3 + $0x40] sm:$0xff] %vm1838, %v1711
      %1848 = vst.msk [vmem:[#allocation3 + $0x48] sm:$0xff] %vm1838, %v1713
      %1849 = vst.msk [vmem:[#allocation3 + $0x50] sm:$0xff] %vm1838, %v1715
      %1850 = vst.msk [vmem:[#allocation3 + $0x58] sm:$0xff] %vm1838, %v1717
      %1851 = vst.msk [vmem:[#allocation3 + $0x60] sm:$0xff] %vm1838, %v1719
      %1852 = vst.msk [vmem:[#allocation3 + $0x68] sm:$0xff] %vm1838, %v1721
      %1853 = vst.msk [vmem:[#allocation3 + $0x70] sm:$0xff] %vm1838, %v1723
      %1854 = vst.msk [vmem:[#allocation3 + $0x78] sm:$0xff] %vm1838, %v1725
      %1855 = vst.msk [vmem:[#allocation3 + $0x80] sm:$0xff] %vm1838, %v1727
      %1856 = vst.msk [vmem:[#allocation3 + $0x88] sm:$0xff] %vm1838, %v1729
      %1857 = vst.msk [vmem:[#allocation3 + $0x90] sm:$0xff] %vm1838, %v1731
      %1858 = vst.msk [vmem:[#allocation3 + $0x98] sm:$0xff] %vm1838, %v1733
      %1859 = vst.msk [vmem:[#allocation3 + $0xa0] sm:$0xff] %vm1838, %v1735
      %1860 = vst.msk [vmem:[#allocation3 + $0xa8] sm:$0xff] %vm1838, %v1737
      %1861 = vst.msk [vmem:[#allocation3 + $0xb0] sm:$0xff] %vm1838, %v1739
      %1862 = vst.msk [vmem:[#allocation3 + $0xb8] sm:$0xff] %vm1838, %v1741
      %1863 = vst.msk [vmem:[#allocation3 + $0xc0] sm:$0xff] %vm1838, %v1743
      %1864 = vst.msk [vmem:[#allocation3 + $0xc8] sm:$0xff] %vm1838, %v1745
      %1865 = vst.msk [vmem:[#allocation3 + $0xd0] sm:$0xff] %vm1838, %v1747
      %1866 = vst.msk [vmem:[#allocation3 + $0xd8] sm:$0xff] %vm1838, %v1749
      %1867 = vst.msk [vmem:[#allocation3 + $0xe0] sm:$0xff] %vm1838, %v1751
      %1868 = vst.msk [vmem:[#allocation3 + $0xe8] sm:$0xff] %vm1838, %v1753
      %1869 = vst.msk [vmem:[#allocation3 + $0xf0] sm:$0xff] %vm1838, %v1755
      %1870 = vst.msk [vmem:[#allocation3 + $0xf8] sm:$0xff] %vm1838, %v1757
      %1871 = vst.msk [vmem:[#allocation3 + $0x100] sm:$0xff] %vm1838, %v1759
      %1872 = vst.msk [vmem:[#allocation3 + $0x108] sm:$0xff] %vm1838, %v1761
      %1873 = vst.msk [vmem:[#allocation3 + $0x110] sm:$0xff] %vm1838, %v1763
      %1874 = vst.msk [vmem:[#allocation3 + $0x118] sm:$0xff] %vm1838, %v1765
      %1875 = vst.msk [vmem:[#allocation3 + $0x120] sm:$0xff] %vm1838, %v1767
      %1876 = vst.msk [vmem:[#allocation3 + $0x128] sm:$0xff] %vm1838, %v1769
      %1877 = vst.msk [vmem:[#allocation3 + $0x130] sm:$0xff] %vm1838, %v1771
      %1878 = vst.msk [vmem:[#allocation3 + $0x138] sm:$0xff] %vm1838, %v1773
      %1879 = vst.msk [vmem:[#allocation3 + $0x140] sm:$0xff] %vm1838, %v1775
      %1880 = vst.msk [vmem:[#allocation3 + $0x148] sm:$0xff] %vm1838, %v1777
      %1881 = vst.msk [vmem:[#allocation3 + $0x150] sm:$0xff] %vm1838, %v1779
      %1882 = vst.msk [vmem:[#allocation3 + $0x158] sm:$0xff] %vm1838, %v1781
      %1883 = vst.msk [vmem:[#allocation3 + $0x160] sm:$0xff] %vm1838, %v1783
      %1884 = vst.msk [vmem:[#allocation3 + $0x168] sm:$0xff] %vm1838, %v1785
      %1885 = vst.msk [vmem:[#allocation3 + $0x170] sm:$0xff] %vm1838, %v1787
      %1886 = vst.msk [vmem:[#allocation3 + $0x178] sm:$0xff] %vm1838, %v1789
      %v1887 = vld [vmem:[#allocation2 + $0x19] sm:$0xff]
      %v1888 = vld [vmem:[#allocation2 + $0x21] sm:$0xff]
      %v1889 = vld [vmem:[#allocation2 + $0x29] sm:$0xff]
      %v1890 = vld [vmem:[#allocation2 + $0x31] sm:$0xff]
      %v1891 = vld [vmem:[#allocation2 + $0x39] sm:$0xff]
      %v1892 = vld [vmem:[#allocation2 + $0x41] sm:$0xff]
      %v1893 = vld [vmem:[#allocation2 + $0x49] sm:$0xff]
      %v1894 = vld [vmem:[#allocation2 + $0x51] sm:$0xff]
      %v1895 = vld [vmem:[#allocation2 + $0x59] sm:$0xff]
      %v1896 = vld [vmem:[#allocation2 + $0x61] sm:$0xff]
      %v1897 = vld [vmem:[#allocation2 + $0x69] sm:$0xff]
      %v1898 = vld [vmem:[#allocation2 + $0x71] sm:$0xff]
      %v1899 = vld [vmem:[#allocation2 + $0x79] sm:$0xff]
      %v1900 = vld [vmem:[#allocation2 + $0x81] sm:$0xff]
      %v1901 = vld [vmem:[#allocation2 + $0x89] sm:$0xff]
      %v1902 = vld [vmem:[#allocation2 + $0x91] sm:$0xff]
      %v1903 = vld [vmem:[#allocation2 + $0x99] sm:$0xff]
      %v1904 = vld [vmem:[#allocation2 + $0xa1] sm:$0xff]
      %v1905 = vld [vmem:[#allocation2 + $0xa9] sm:$0xff]
      %v1906 = vld [vmem:[#allocation2 + $0xb1] sm:$0xff]
      %v1907 = vld [vmem:[#allocation2 + $0xb9] sm:$0xff]
      %v1908 = vld [vmem:[#allocation2 + $0xc1] sm:$0xff]
      %v1909 = vld [vmem:[#allocation2 + $0xc9] sm:$0xff]
      %v1910 = vld [vmem:[#allocation2 + $0xd1] sm:$0xff]
      %v1911 = vld [vmem:[#allocation2 + $0xd9] sm:$0xff]
      %v1912 = vld [vmem:[#allocation2 + $0xe1] sm:$0xff]
      %v1913 = vld [vmem:[#allocation2 + $0xe9] sm:$0xff]
      %v1914 = vld [vmem:[#allocation2 + $0xf1] sm:$0xff]
      %v1915 = vld [vmem:[#allocation2 + $0xf9] sm:$0xff]
      %v1916 = vld [vmem:[#allocation2 + $0x101] sm:$0xff]
      %v1917 = vld [vmem:[#allocation2 + $0x109] sm:$0xff]
      %v1918 = vld [vmem:[#allocation2 + $0x111] sm:$0xff]
      %v1919 = vld [vmem:[#allocation2 + $0x119] sm:$0xff]
      %v1920 = vld [vmem:[#allocation2 + $0x121] sm:$0xff]
      %v1921 = vld [vmem:[#allocation2 + $0x129] sm:$0xff]
      %v1922 = vld [vmem:[#allocation2 + $0x131] sm:$0xff]
      %v1923 = vld [vmem:[#allocation2 + $0x139] sm:$0xff]
      %v1924 = vld [vmem:[#allocation2 + $0x141] sm:$0xff]
      %v1925 = vld [vmem:[#allocation2 + $0x149] sm:$0xff]
      %v1926 = vld [vmem:[#allocation2 + $0x151] sm:$0xff]
      %v1927 = vld [vmem:[#allocation2 + $0x159] sm:$0xff]
      %v1928 = vld [vmem:[#allocation2 + $0x161] sm:$0xff]
      %v1929 = vld [vmem:[#allocation2 + $0x169] sm:$0xff]
      %v1930 = vld [vmem:[#allocation2 + $0x171] sm:$0xff]
      %v1931 = vld [vmem:[#allocation2 + $0x179] sm:$0xff]
      %v1932 = vld [vmem:[#allocation2 + $0x181] sm:$0xff]
      %v1933 = vld [vmem:[#allocation2 + $0x189] sm:$0xff]
      %v1934 = vld [vmem:[#allocation2 + $0x191] sm:$0xff]
      %1983 = vrot.lane.b32.xlu0 %v1887, 16
      %v1984 = vpop.permute.xlu0 %1983
      %1985 = vrot.lane.b32.xlu0 %v1888, 16
      %v1986 = vpop.permute.xlu0 %1985
      %1987 = vrot.lane.b32.xlu0 %v1889, 16
      %v1988 = vpop.permute.xlu0 %1987
      %1989 = vrot.lane.b32.xlu0 %v1890, 16
      %v1990 = vpop.permute.xlu0 %1989
      %1991 = vrot.lane.b32.xlu0 %v1891, 16
      %v1992 = vpop.permute.xlu0 %1991
      %1993 = vrot.lane.b32.xlu0 %v1892, 16
      %v1994 = vpop.permute.xlu0 %1993
      %1995 = vrot.lane.b32.xlu0 %v1893, 16
      %v1996 = vpop.permute.xlu0 %1995
      %1997 = vrot.lane.b32.xlu0 %v1894, 16
      %v1998 = vpop.permute.xlu0 %1997
      %1999 = vrot.lane.b32.xlu0 %v1895, 16
      %v2000 = vpop.permute.xlu0 %1999
      %2001 = vrot.lane.b32.xlu0 %v1896, 16
      %v2002 = vpop.permute.xlu0 %2001
      %2003 = vrot.lane.b32.xlu0 %v1897, 16
      %v2004 = vpop.permute.xlu0 %2003
      %2005 = vrot.lane.b32.xlu0 %v1898, 16
      %v2006 = vpop.permute.xlu0 %2005
      %2007 = vrot.lane.b32.xlu0 %v1899, 16
      %v2008 = vpop.permute.xlu0 %2007
      %2009 = vrot.lane.b32.xlu0 %v1900, 16
      %v2010 = vpop.permute.xlu0 %2009
      %2011 = vrot.lane.b32.xlu0 %v1901, 16
      %v2012 = vpop.permute.xlu0 %2011
      %2013 = vrot.lane.b32.xlu0 %v1902, 16
      %v2014 = vpop.permute.xlu0 %2013
      %2015 = vrot.lane.b32.xlu0 %v1903, 16
      %v2016 = vpop.permute.xlu0 %2015
      %2017 = vrot.lane.b32.xlu0 %v1904, 16
      %v2018 = vpop.permute.xlu0 %2017
      %2019 = vrot.lane.b32.xlu0 %v1905, 16
      %v2020 = vpop.permute.xlu0 %2019
      %2021 = vrot.lane.b32.xlu0 %v1906, 16
      %v2022 = vpop.permute.xlu0 %2021
      %2023 = vrot.lane.b32.xlu0 %v1907, 16
      %v2024 = vpop.permute.xlu0 %2023
      %2025 = vrot.lane.b32.xlu0 %v1908, 16
      %v2026 = vpop.permute.xlu0 %2025
      %2027 = vrot.lane.b32.xlu0 %v1909, 16
      %v2028 = vpop.permute.xlu0 %2027
      %2029 = vrot.lane.b32.xlu0 %v1910, 16
      %v2030 = vpop.permute.xlu0 %2029
      %2031 = vrot.lane.b32.xlu0 %v1911, 16
      %v2032 = vpop.permute.xlu0 %2031
      %2033 = vrot.lane.b32.xlu0 %v1912, 16
      %v2034 = vpop.permute.xlu0 %2033
      %2035 = vrot.lane.b32.xlu0 %v1913, 16
      %v2036 = vpop.permute.xlu0 %2035
      %2037 = vrot.lane.b32.xlu0 %v1914, 16
      %v2038 = vpop.permute.xlu0 %2037
      %2039 = vrot.lane.b32.xlu0 %v1915, 16
      %v2040 = vpop.permute.xlu0 %2039
      %2041 = vrot.lane.b32.xlu0 %v1916, 16
      %v2042 = vpop.permute.xlu0 %2041
      %2043 = vrot.lane.b32.xlu0 %v1917, 16
      %v2044 = vpop.permute.xlu0 %2043
      %2045 = vrot.lane.b32.xlu0 %v1918, 16
      %v2046 = vpop.permute.xlu0 %2045
      %2047 = vrot.lane.b32.xlu0 %v1919, 16
      %v2048 = vpop.permute.xlu0 %2047
      %2049 = vrot.lane.b32.xlu0 %v1920, 16
      %v2050 = vpop.permute.xlu0 %2049
      %2051 = vrot.lane.b32.xlu0 %v1921, 16
      %v2052 = vpop.permute.xlu0 %2051
      %2053 = vrot.lane.b32.xlu0 %v1922, 16
      %v2054 = vpop.permute.xlu0 %2053
      %2055 = vrot.lane.b32.xlu0 %v1923, 16
      %v2056 = vpop.permute.xlu0 %2055
      %2057 = vrot.lane.b32.xlu0 %v1924, 16
      %v2058 = vpop.permute.xlu0 %2057
      %2059 = vrot.lane.b32.xlu0 %v1925, 16
      %v2060 = vpop.permute.xlu0 %2059
      %2061 = vrot.lane.b32.xlu0 %v1926, 16
      %v2062 = vpop.permute.xlu0 %2061
      %2063 = vrot.lane.b32.xlu0 %v1927, 16
      %v2064 = vpop.permute.xlu0 %2063
      %2065 = vrot.lane.b32.xlu0 %v1928, 16
      %v2066 = vpop.permute.xlu0 %2065
      %2067 = vrot.lane.b32.xlu0 %v1929, 16
      %v2068 = vpop.permute.xlu0 %2067
      %2069 = vrot.lane.b32.xlu0 %v1930, 16
      %v2070 = vpop.permute.xlu0 %2069
      %2071 = vrot.lane.b32.xlu0 %v1931, 16
      %v2072 = vpop.permute.xlu0 %2071
      %2073 = vrot.lane.b32.xlu0 %v1932, 16
      %v2074 = vpop.permute.xlu0 %2073
      %2075 = vrot.lane.b32.xlu0 %v1933, 16
      %v2076 = vpop.permute.xlu0 %2075
      %2077 = vrot.lane.b32.xlu0 %v1934, 16
      %v2078 = vpop.permute.xlu0 %2077
      %vm2127 = vcmask 162944
      %2128 = vst.msk [vmem:[#allocation3] sm:$0xff] %vm2127, %v1984
      %2129 = vst.msk [vmem:[#allocation3 + $0x8] sm:$0xff] %vm2127, %v1986
      %2130 = vst.msk [vmem:[#allocation3 + $0x10] sm:$0xff] %vm2127, %v1988
      %2131 = vst.msk [vmem:[#allocation3 + $0x18] sm:$0xff] %vm2127, %v1990
      %2132 = vst.msk [vmem:[#allocation3 + $0x20] sm:$0xff] %vm2127, %v1992
      %2133 = vst.msk [vmem:[#allocation3 + $0x28] sm:$0xff] %vm2127, %v1994
      %2134 = vst.msk [vmem:[#allocation3 + $0x30] sm:$0xff] %vm2127, %v1996
      %2135 = vst.msk [vmem:[#allocation3 + $0x38] sm:$0xff] %vm2127, %v1998
      %2136 = vst.msk [vmem:[#allocation3 + $0x40] sm:$0xff] %vm2127, %v2000
      %2137 = vst.msk [vmem:[#allocation3 + $0x48] sm:$0xff] %vm2127, %v2002
      %2138 = vst.msk [vmem:[#allocation3 + $0x50] sm:$0xff] %vm2127, %v2004
      %2139 = vst.msk [vmem:[#allocation3 + $0x58] sm:$0xff] %vm2127, %v2006
      %2140 = vst.msk [vmem:[#allocation3 + $0x60] sm:$0xff] %vm2127, %v2008
      %2141 = vst.msk [vmem:[#allocation3 + $0x68] sm:$0xff] %vm2127, %v2010
      %2142 = vst.msk [vmem:[#allocation3 + $0x70] sm:$0xff] %vm2127, %v2012
      %2143 = vst.msk [vmem:[#allocation3 + $0x78] sm:$0xff] %vm2127, %v2014
      %2144 = vst.msk [vmem:[#allocation3 + $0x80] sm:$0xff] %vm2127, %v2016
      %2145 = vst.msk [vmem:[#allocation3 + $0x88] sm:$0xff] %vm2127, %v2018
      %2146 = vst.msk [vmem:[#allocation3 + $0x90] sm:$0xff] %vm2127, %v2020
      %2147 = vst.msk [vmem:[#allocation3 + $0x98] sm:$0xff] %vm2127, %v2022
      %2148 = vst.msk [vmem:[#allocation3 + $0xa0] sm:$0xff] %vm2127, %v2024
      %2149 = vst.msk [vmem:[#allocation3 + $0xa8] sm:$0xff] %vm2127, %v2026
      %2150 = vst.msk [vmem:[#allocation3 + $0xb0] sm:$0xff] %vm2127, %v2028
      %2151 = vst.msk [vmem:[#allocation3 + $0xb8] sm:$0xff] %vm2127, %v2030
      %2152 = vst.msk [vmem:[#allocation3 + $0xc0] sm:$0xff] %vm2127, %v2032
      %2153 = vst.msk [vmem:[#allocation3 + $0xc8] sm:$0xff] %vm2127, %v2034
      %2154 = vst.msk [vmem:[#allocation3 + $0xd0] sm:$0xff] %vm2127, %v2036
      %2155 = vst.msk [vmem:[#allocation3 + $0xd8] sm:$0xff] %vm2127, %v2038
      %2156 = vst.msk [vmem:[#allocation3 + $0xe0] sm:$0xff] %vm2127, %v2040
      %2157 = vst.msk [vmem:[#allocation3 + $0xe8] sm:$0xff] %vm2127, %v2042
      %2158 = vst.msk [vmem:[#allocation3 + $0xf0] sm:$0xff] %vm2127, %v2044
      %2159 = vst.msk [vmem:[#allocation3 + $0xf8] sm:$0xff] %vm2127, %v2046
      %2160 = vst.msk [vmem:[#allocation3 + $0x100] sm:$0xff] %vm2127, %v2048
      %2161 = vst.msk [vmem:[#allocation3 + $0x108] sm:$0xff] %vm2127, %v2050
      %2162 = vst.msk [vmem:[#allocation3 + $0x110] sm:$0xff] %vm2127, %v2052
      %2163 = vst.msk [vmem:[#allocation3 + $0x118] sm:$0xff] %vm2127, %v2054
      %2164 = vst.msk [vmem:[#allocation3 + $0x120] sm:$0xff] %vm2127, %v2056
      %2165 = vst.msk [vmem:[#allocation3 + $0x128] sm:$0xff] %vm2127, %v2058
      %2166 = vst.msk [vmem:[#allocation3 + $0x130] sm:$0xff] %vm2127, %v2060
      %2167 = vst.msk [vmem:[#allocation3 + $0x138] sm:$0xff] %vm2127, %v2062
      %2168 = vst.msk [vmem:[#allocation3 + $0x140] sm:$0xff] %vm2127, %v2064
      %2169 = vst.msk [vmem:[#allocation3 + $0x148] sm:$0xff] %vm2127, %v2066
      %2170 = vst.msk [vmem:[#allocation3 + $0x150] sm:$0xff] %vm2127, %v2068
      %2171 = vst.msk [vmem:[#allocation3 + $0x158] sm:$0xff] %vm2127, %v2070
      %2172 = vst.msk [vmem:[#allocation3 + $0x160] sm:$0xff] %vm2127, %v2072
      %2173 = vst.msk [vmem:[#allocation3 + $0x168] sm:$0xff] %vm2127, %v2074
      %2174 = vst.msk [vmem:[#allocation3 + $0x170] sm:$0xff] %vm2127, %v2076
      %2175 = vst.msk [vmem:[#allocation3 + $0x178] sm:$0xff] %vm2127, %v2078
      %v2176 = vld [vmem:[#allocation2 + $0x1a] sm:$0xff]
      %v2177 = vld [vmem:[#allocation2 + $0x22] sm:$0xff]
      %v2178 = vld [vmem:[#allocation2 + $0x2a] sm:$0xff]
      %v2179 = vld [vmem:[#allocation2 + $0x32] sm:$0xff]
      %v2180 = vld [vmem:[#allocation2 + $0x3a] sm:$0xff]
      %v2181 = vld [vmem:[#allocation2 + $0x42] sm:$0xff]
      %v2182 = vld [vmem:[#allocation2 + $0x4a] sm:$0xff]
      %v2183 = vld [vmem:[#allocation2 + $0x52] sm:$0xff]
      %v2184 = vld [vmem:[#allocation2 + $0x5a] sm:$0xff]
      %v2185 = vld [vmem:[#allocation2 + $0x62] sm:$0xff]
      %v2186 = vld [vmem:[#allocation2 + $0x6a] sm:$0xff]
      %v2187 = vld [vmem:[#allocation2 + $0x72] sm:$0xff]
      %v2188 = vld [vmem:[#allocation2 + $0x7a] sm:$0xff]
      %v2189 = vld [vmem:[#allocation2 + $0x82] sm:$0xff]
      %v2190 = vld [vmem:[#allocation2 + $0x8a] sm:$0xff]
      %v2191 = vld [vmem:[#allocation2 + $0x92] sm:$0xff]
      %v2192 = vld [vmem:[#allocation2 + $0x9a] sm:$0xff]
      %v2193 = vld [vmem:[#allocation2 + $0xa2] sm:$0xff]
      %v2194 = vld [vmem:[#allocation2 + $0xaa] sm:$0xff]
      %v2195 = vld [vmem:[#allocation2 + $0xb2] sm:$0xff]
      %v2196 = vld [vmem:[#allocation2 + $0xba] sm:$0xff]
      %v2197 = vld [vmem:[#allocation2 + $0xc2] sm:$0xff]
      %v2198 = vld [vmem:[#allocation2 + $0xca] sm:$0xff]
      %v2199 = vld [vmem:[#allocation2 + $0xd2] sm:$0xff]
      %v2200 = vld [vmem:[#allocation2 + $0xda] sm:$0xff]
      %v2201 = vld [vmem:[#allocation2 + $0xe2] sm:$0xff]
      %v2202 = vld [vmem:[#allocation2 + $0xea] sm:$0xff]
      %v2203 = vld [vmem:[#allocation2 + $0xf2] sm:$0xff]
      %v2204 = vld [vmem:[#allocation2 + $0xfa] sm:$0xff]
      %v2205 = vld [vmem:[#allocation2 + $0x102] sm:$0xff]
      %v2206 = vld [vmem:[#allocation2 + $0x10a] sm:$0xff]
      %v2207 = vld [vmem:[#allocation2 + $0x112] sm:$0xff]
      %v2208 = vld [vmem:[#allocation2 + $0x11a] sm:$0xff]
      %v2209 = vld [vmem:[#allocation2 + $0x122] sm:$0xff]
      %v2210 = vld [vmem:[#allocation2 + $0x12a] sm:$0xff]
      %v2211 = vld [vmem:[#allocation2 + $0x132] sm:$0xff]
      %v2212 = vld [vmem:[#allocation2 + $0x13a] sm:$0xff]
      %v2213 = vld [vmem:[#allocation2 + $0x142] sm:$0xff]
      %v2214 = vld [vmem:[#allocation2 + $0x14a] sm:$0xff]
      %v2215 = vld [vmem:[#allocation2 + $0x152] sm:$0xff]
      %v2216 = vld [vmem:[#allocation2 + $0x15a] sm:$0xff]
      %v2217 = vld [vmem:[#allocation2 + $0x162] sm:$0xff]
      %v2218 = vld [vmem:[#allocation2 + $0x16a] sm:$0xff]
      %v2219 = vld [vmem:[#allocation2 + $0x172] sm:$0xff]
      %v2220 = vld [vmem:[#allocation2 + $0x17a] sm:$0xff]
      %v2221 = vld [vmem:[#allocation2 + $0x182] sm:$0xff]
      %v2222 = vld [vmem:[#allocation2 + $0x18a] sm:$0xff]
      %v2223 = vld [vmem:[#allocation2 + $0x192] sm:$0xff]
      %2272 = vrot.lane.b32.xlu0 %v2176, 20
      %v2273 = vpop.permute.xlu0 %2272
      %2274 = vrot.lane.b32.xlu0 %v2177, 20
      %v2275 = vpop.permute.xlu0 %2274
      %2276 = vrot.lane.b32.xlu0 %v2178, 20
      %v2277 = vpop.permute.xlu0 %2276
      %2278 = vrot.lane.b32.xlu0 %v2179, 20
      %v2279 = vpop.permute.xlu0 %2278
      %2280 = vrot.lane.b32.xlu0 %v2180, 20
      %v2281 = vpop.permute.xlu0 %2280
      %2282 = vrot.lane.b32.xlu0 %v2181, 20
      %v2283 = vpop.permute.xlu0 %2282
      %2284 = vrot.lane.b32.xlu0 %v2182, 20
      %v2285 = vpop.permute.xlu0 %2284
      %2286 = vrot.lane.b32.xlu0 %v2183, 20
      %v2287 = vpop.permute.xlu0 %2286
      %2288 = vrot.lane.b32.xlu0 %v2184, 20
      %v2289 = vpop.permute.xlu0 %2288
      %2290 = vrot.lane.b32.xlu0 %v2185, 20
      %v2291 = vpop.permute.xlu0 %2290
      %2292 = vrot.lane.b32.xlu0 %v2186, 20
      %v2293 = vpop.permute.xlu0 %2292
      %2294 = vrot.lane.b32.xlu0 %v2187, 20
      %v2295 = vpop.permute.xlu0 %2294
      %2296 = vrot.lane.b32.xlu0 %v2188, 20
      %v2297 = vpop.permute.xlu0 %2296
      %2298 = vrot.lane.b32.xlu0 %v2189, 20
      %v2299 = vpop.permute.xlu0 %2298
      %2300 = vrot.lane.b32.xlu0 %v2190, 20
      %v2301 = vpop.permute.xlu0 %2300
      %2302 = vrot.lane.b32.xlu0 %v2191, 20
      %v2303 = vpop.permute.xlu0 %2302
      %2304 = vrot.lane.b32.xlu0 %v2192, 20
      %v2305 = vpop.permute.xlu0 %2304
      %2306 = vrot.lane.b32.xlu0 %v2193, 20
      %v2307 = vpop.permute.xlu0 %2306
      %2308 = vrot.lane.b32.xlu0 %v2194, 20
      %v2309 = vpop.permute.xlu0 %2308
      %2310 = vrot.lane.b32.xlu0 %v2195, 20
      %v2311 = vpop.permute.xlu0 %2310
      %2312 = vrot.lane.b32.xlu0 %v2196, 20
      %v2313 = vpop.permute.xlu0 %2312
      %2314 = vrot.lane.b32.xlu0 %v2197, 20
      %v2315 = vpop.permute.xlu0 %2314
      %2316 = vrot.lane.b32.xlu0 %v2198, 20
      %v2317 = vpop.permute.xlu0 %2316
      %2318 = vrot.lane.b32.xlu0 %v2199, 20
      %v2319 = vpop.permute.xlu0 %2318
      %2320 = vrot.lane.b32.xlu0 %v2200, 20
      %v2321 = vpop.permute.xlu0 %2320
      %2322 = vrot.lane.b32.xlu0 %v2201, 20
      %v2323 = vpop.permute.xlu0 %2322
      %2324 = vrot.lane.b32.xlu0 %v2202, 20
      %v2325 = vpop.permute.xlu0 %2324
      %2326 = vrot.lane.b32.xlu0 %v2203, 20
      %v2327 = vpop.permute.xlu0 %2326
      %2328 = vrot.lane.b32.xlu0 %v2204, 20
      %v2329 = vpop.permute.xlu0 %2328
      %2330 = vrot.lane.b32.xlu0 %v2205, 20
      %v2331 = vpop.permute.xlu0 %2330
      %2332 = vrot.lane.b32.xlu0 %v2206, 20
      %v2333 = vpop.permute.xlu0 %2332
      %2334 = vrot.lane.b32.xlu0 %v2207, 20
      %v2335 = vpop.permute.xlu0 %2334
      %2336 = vrot.lane.b32.xlu0 %v2208, 20
      %v2337 = vpop.permute.xlu0 %2336
      %2338 = vrot.lane.b32.xlu0 %v2209, 20
      %v2339 = vpop.permute.xlu0 %2338
      %2340 = vrot.lane.b32.xlu0 %v2210, 20
      %v2341 = vpop.permute.xlu0 %2340
      %2342 = vrot.lane.b32.xlu0 %v2211, 20
      %v2343 = vpop.permute.xlu0 %2342
      %2344 = vrot.lane.b32.xlu0 %v2212, 20
      %v2345 = vpop.permute.xlu0 %2344
      %2346 = vrot.lane.b32.xlu0 %v2213, 20
      %v2347 = vpop.permute.xlu0 %2346
      %2348 = vrot.lane.b32.xlu0 %v2214, 20
      %v2349 = vpop.permute.xlu0 %2348
      %2350 = vrot.lane.b32.xlu0 %v2215, 20
      %v2351 = vpop.permute.xlu0 %2350
      %2352 = vrot.lane.b32.xlu0 %v2216, 20
      %v2353 = vpop.permute.xlu0 %2352
      %2354 = vrot.lane.b32.xlu0 %v2217, 20
      %v2355 = vpop.permute.xlu0 %2354
      %2356 = vrot.lane.b32.xlu0 %v2218, 20
      %v2357 = vpop.permute.xlu0 %2356
      %2358 = vrot.lane.b32.xlu0 %v2219, 20
      %v2359 = vpop.permute.xlu0 %2358
      %2360 = vrot.lane.b32.xlu0 %v2220, 20
      %v2361 = vpop.permute.xlu0 %2360
      %2362 = vrot.lane.b32.xlu0 %v2221, 20
      %v2363 = vpop.permute.xlu0 %2362
      %2364 = vrot.lane.b32.xlu0 %v2222, 20
      %v2365 = vpop.permute.xlu0 %2364
      %2366 = vrot.lane.b32.xlu0 %v2223, 20
      %v2367 = vpop.permute.xlu0 %2366
      %vm2416 = vcmask 195744
      %2417 = vst.msk [vmem:[#allocation3] sm:$0xff] %vm2416, %v2273
      %2418 = vst.msk [vmem:[#allocation3 + $0x8] sm:$0xff] %vm2416, %v2275
      %2419 = vst.msk [vmem:[#allocation3 + $0x10] sm:$0xff] %vm2416, %v2277
      %2420 = vst.msk [vmem:[#allocation3 + $0x18] sm:$0xff] %vm2416, %v2279
      %2421 = vst.msk [vmem:[#allocation3 + $0x20] sm:$0xff] %vm2416, %v2281
      %2422 = vst.msk [vmem:[#allocation3 + $0x28] sm:$0xff] %vm2416, %v2283
      %2423 = vst.msk [vmem:[#allocation3 + $0x30] sm:$0xff] %vm2416, %v2285
      %2424 = vst.msk [vmem:[#allocation3 + $0x38] sm:$0xff] %vm2416, %v2287
      %2425 = vst.msk [vmem:[#allocation3 + $0x40] sm:$0xff] %vm2416, %v2289
      %2426 = vst.msk [vmem:[#allocation3 + $0x48] sm:$0xff] %vm2416, %v2291
      %2427 = vst.msk [vmem:[#allocation3 + $0x50] sm:$0xff] %vm2416, %v2293
      %2428 = vst.msk [vmem:[#allocation3 + $0x58] sm:$0xff] %vm2416, %v2295
      %2429 = vst.msk [vmem:[#allocation3 + $0x60] sm:$0xff] %vm2416, %v2297
      %2430 = vst.msk [vmem:[#allocation3 + $0x68] sm:$0xff] %vm2416, %v2299
      %2431 = vst.msk [vmem:[#allocation3 + $0x70] sm:$0xff] %vm2416, %v2301
      %2432 = vst.msk [vmem:[#allocation3 + $0x78] sm:$0xff] %vm2416, %v2303
      %2433 = vst.msk [vmem:[#allocation3 + $0x80] sm:$0xff] %vm2416, %v2305
      %2434 = vst.msk [vmem:[#allocation3 + $0x88] sm:$0xff] %vm2416, %v2307
      %2435 = vst.msk [vmem:[#allocation3 + $0x90] sm:$0xff] %vm2416, %v2309
      %2436 = vst.msk [vmem:[#allocation3 + $0x98] sm:$0xff] %vm2416, %v2311
      %2437 = vst.msk [vmem:[#allocation3 + $0xa0] sm:$0xff] %vm2416, %v2313
      %2438 = vst.msk [vmem:[#allocation3 + $0xa8] sm:$0xff] %vm2416, %v2315
      %2439 = vst.msk [vmem:[#allocation3 + $0xb0] sm:$0xff] %vm2416, %v2317
      %2440 = vst.msk [vmem:[#allocation3 + $0xb8] sm:$0xff] %vm2416, %v2319
      %2441 = vst.msk [vmem:[#allocation3 + $0xc0] sm:$0xff] %vm2416, %v2321
      %2442 = vst.msk [vmem:[#allocation3 + $0xc8] sm:$0xff] %vm2416, %v2323
      %2443 = vst.msk [vmem:[#allocation3 + $0xd0] sm:$0xff] %vm2416, %v2325
      %2444 = vst.msk [vmem:[#allocation3 + $0xd8] sm:$0xff] %vm2416, %v2327
      %2445 = vst.msk [vmem:[#allocation3 + $0xe0] sm:$0xff] %vm2416, %v2329
      %2446 = vst.msk [vmem:[#allocation3 + $0xe8] sm:$0xff] %vm2416, %v2331
      %2447 = vst.msk [vmem:[#allocation3 + $0xf0] sm:$0xff] %vm2416, %v2333
      %2448 = vst.msk [vmem:[#allocation3 + $0xf8] sm:$0xff] %vm2416, %v2335
      %2449 = vst.msk [vmem:[#allocation3 + $0x100] sm:$0xff] %vm2416, %v2337
      %2450 = vst.msk [vmem:[#allocation3 + $0x108] sm:$0xff] %vm2416, %v2339
      %2451 = vst.msk [vmem:[#allocation3 + $0x110] sm:$0xff] %vm2416, %v2341
      %2452 = vst.msk [vmem:[#allocation3 + $0x118] sm:$0xff] %vm2416, %v2343
      %2453 = vst.msk [vmem:[#allocation3 + $0x120] sm:$0xff] %vm2416, %v2345
      %2454 = vst.msk [vmem:[#allocation3 + $0x128] sm:$0xff] %vm2416, %v2347
      %2455 = vst.msk [vmem:[#allocation3 + $0x130] sm:$0xff] %vm2416, %v2349
      %2456 = vst.msk [vmem:[#allocation3 + $0x138] sm:$0xff] %vm2416, %v2351
      %2457 = vst.msk [vmem:[#allocation3 + $0x140] sm:$0xff] %vm2416, %v2353
      %2458 = vst.msk [vmem:[#allocation3 + $0x148] sm:$0xff] %vm2416, %v2355
      %2459 = vst.msk [vmem:[#allocation3 + $0x150] sm:$0xff] %vm2416, %v2357
      %2460 = vst.msk [vmem:[#allocation3 + $0x158] sm:$0xff] %vm2416, %v2359
      %2461 = vst.msk [vmem:[#allocation3 + $0x160] sm:$0xff] %vm2416, %v2361
      %2462 = vst.msk [vmem:[#allocation3 + $0x168] sm:$0xff] %vm2416, %v2363
      %2463 = vst.msk [vmem:[#allocation3 + $0x170] sm:$0xff] %vm2416, %v2365
      %2464 = vst.msk [vmem:[#allocation3 + $0x178] sm:$0xff] %vm2416, %v2367
      %v2465 = vld [vmem:[#allocation2 + $0x30] sm:$0xff]
      %v2466 = vld [vmem:[#allocation2 + $0x38] sm:$0xff]
      %v2467 = vld [vmem:[#allocation2 + $0x40] sm:$0xff]
      %v2468 = vld [vmem:[#allocation2 + $0x48] sm:$0xff]
      %v2469 = vld [vmem:[#allocation2 + $0x50] sm:$0xff]
      %v2470 = vld [vmem:[#allocation2 + $0x58] sm:$0xff]
      %v2471 = vld [vmem:[#allocation2 + $0x60] sm:$0xff]
      %v2472 = vld [vmem:[#allocation2 + $0x68] sm:$0xff]
      %v2473 = vld [vmem:[#allocation2 + $0x70] sm:$0xff]
      %v2474 = vld [vmem:[#allocation2 + $0x78] sm:$0xff]
      %v2475 = vld [vmem:[#allocation2 + $0x80] sm:$0xff]
      %v2476 = vld [vmem:[#allocation2 + $0x88] sm:$0xff]
      %v2477 = vld [vmem:[#allocation2 + $0x90] sm:$0xff]
      %v2478 = vld [vmem:[#allocation2 + $0x98] sm:$0xff]
      %v2479 = vld [vmem:[#allocation2 + $0xa0] sm:$0xff]
      %v2480 = vld [vmem:[#allocation2 + $0xa8] sm:$0xff]
      %v2481 = vld [vmem:[#allocation2 + $0xb0] sm:$0xff]
      %v2482 = vld [vmem:[#allocation2 + $0xb8] sm:$0xff]
      %v2483 = vld [vmem:[#allocation2 + $0xc0] sm:$0xff]
      %v2484 = vld [vmem:[#allocation2 + $0xc8] sm:$0xff]
      %v2485 = vld [vmem:[#allocation2 + $0xd0] sm:$0xff]
      %v2486 = vld [vmem:[#allocation2 + $0xd8] sm:$0xff]
      %v2487 = vld [vmem:[#allocation2 + $0xe0] sm:$0xff]
      %v2488 = vld [vmem:[#allocation2 + $0xe8] sm:$0xff]
      %v2489 = vld [vmem:[#allocation2 + $0xf0] sm:$0xff]
      %v2490 = vld [vmem:[#allocation2 + $0xf8] sm:$0xff]
      %v2491 = vld [vmem:[#allocation2 + $0x100] sm:$0xff]
      %v2492 = vld [vmem:[#allocation2 + $0x108] sm:$0xff]
      %v2493 = vld [vmem:[#allocation2 + $0x110] sm:$0xff]
      %v2494 = vld [vmem:[#allocation2 + $0x118] sm:$0xff]
      %v2495 = vld [vmem:[#allocation2 + $0x120] sm:$0xff]
      %v2496 = vld [vmem:[#allocation2 + $0x128] sm:$0xff]
      %v2497 = vld [vmem:[#allocation2 + $0x130] sm:$0xff]
      %v2498 = vld [vmem:[#allocation2 + $0x138] sm:$0xff]
      %v2499 = vld [vmem:[#allocation2 + $0x140] sm:$0xff]
      %v2500 = vld [vmem:[#allocation2 + $0x148] sm:$0xff]
      %v2501 = vld [vmem:[#allocation2 + $0x150] sm:$0xff]
      %v2502 = vld [vmem:[#allocation2 + $0x158] sm:$0xff]
      %v2503 = vld [vmem:[#allocation2 + $0x160] sm:$0xff]
      %v2504 = vld [vmem:[#allocation2 + $0x168] sm:$0xff]
      %v2505 = vld [vmem:[#allocation2 + $0x170] sm:$0xff]
      %v2506 = vld [vmem:[#allocation2 + $0x178] sm:$0xff]
      %v2507 = vld [vmem:[#allocation2 + $0x180] sm:$0xff]
      %v2508 = vld [vmem:[#allocation2 + $0x188] sm:$0xff]
      %v2509 = vld [vmem:[#allocation2 + $0x190] sm:$0xff]
      %v2510 = vld [vmem:[#allocation2 + $0x198] sm:$0xff]
      %v2511 = vld [vmem:[#allocation2 + $0x1a0] sm:$0xff]
      %v2512 = vld [vmem:[#allocation2 + $0x1a8] sm:$0xff]
      %2561 = vrot.lane.b32.xlu0 %v2465, 24
      %v2562 = vpop.permute.xlu0 %2561
      %2563 = vrot.lane.b32.xlu0 %v2466, 24
      %v2564 = vpop.permute.xlu0 %2563
      %2565 = vrot.lane.b32.xlu0 %v2467, 24
      %v2566 = vpop.permute.xlu0 %2565
      %2567 = vrot.lane.b32.xlu0 %v2468, 24
      %v2568 = vpop.permute.xlu0 %2567
      %2569 = vrot.lane.b32.xlu0 %v2469, 24
      %v2570 = vpop.permute.xlu0 %2569
      %2571 = vrot.lane.b32.xlu0 %v2470, 24
      %v2572 = vpop.permute.xlu0 %2571
      %2573 = vrot.lane.b32.xlu0 %v2471, 24
      %v2574 = vpop.permute.xlu0 %2573
      %2575 = vrot.lane.b32.xlu0 %v2472, 24
      %v2576 = vpop.permute.xlu0 %2575
      %2577 = vrot.lane.b32.xlu0 %v2473, 24
      %v2578 = vpop.permute.xlu0 %2577
      %2579 = vrot.lane.b32.xlu0 %v2474, 24
      %v2580 = vpop.permute.xlu0 %2579
      %2581 = vrot.lane.b32.xlu0 %v2475, 24
      %v2582 = vpop.permute.xlu0 %2581
      %2583 = vrot.lane.b32.xlu0 %v2476, 24
      %v2584 = vpop.permute.xlu0 %2583
      %2585 = vrot.lane.b32.xlu0 %v2477, 24
      %v2586 = vpop.permute.xlu0 %2585
      %2587 = vrot.lane.b32.xlu0 %v2478, 24
      %v2588 = vpop.permute.xlu0 %2587
      %2589 = vrot.lane.b32.xlu0 %v2479, 24
      %v2590 = vpop.permute.xlu0 %2589
      %2591 = vrot.lane.b32.xlu0 %v2480, 24
      %v2592 = vpop.permute.xlu0 %2591
      %2593 = vrot.lane.b32.xlu0 %v2481, 24
      %v2594 = vpop.permute.xlu0 %2593
      %2595 = vrot.lane.b32.xlu0 %v2482, 24
      %v2596 = vpop.permute.xlu0 %2595
      %2597 = vrot.lane.b32.xlu0 %v2483, 24
      %v2598 = vpop.permute.xlu0 %2597
      %2599 = vrot.lane.b32.xlu0 %v2484, 24
      %v2600 = vpop.permute.xlu0 %2599
      %2601 = vrot.lane.b32.xlu0 %v2485, 24
      %v2602 = vpop.permute.xlu0 %2601
      %2603 = vrot.lane.b32.xlu0 %v2486, 24
      %v2604 = vpop.permute.xlu0 %2603
      %2605 = vrot.lane.b32.xlu0 %v2487, 24
      %v2606 = vpop.permute.xlu0 %2605
      %2607 = vrot.lane.b32.xlu0 %v2488, 24
      %v2608 = vpop.permute.xlu0 %2607
      %2609 = vrot.lane.b32.xlu0 %v2489, 24
      %v2610 = vpop.permute.xlu0 %2609
      %2611 = vrot.lane.b32.xlu0 %v2490, 24
      %v2612 = vpop.permute.xlu0 %2611
      %2613 = vrot.lane.b32.xlu0 %v2491, 24
      %v2614 = vpop.permute.xlu0 %2613
      %2615 = vrot.lane.b32.xlu0 %v2492, 24
      %v2616 = vpop.permute.xlu0 %2615
      %2617 = vrot.lane.b32.xlu0 %v2493, 24
      %v2618 = vpop.permute.xlu0 %2617
      %2619 = vrot.lane.b32.xlu0 %v2494, 24
      %v2620 = vpop.permute.xlu0 %2619
      %2621 = vrot.lane.b32.xlu0 %v2495, 24
      %v2622 = vpop.permute.xlu0 %2621
      %2623 = vrot.lane.b32.xlu0 %v2496, 24
      %v2624 = vpop.permute.xlu0 %2623
      %2625 = vrot.lane.b32.xlu0 %v2497, 24
      %v2626 = vpop.permute.xlu0 %2625
      %2627 = vrot.lane.b32.xlu0 %v2498, 24
      %v2628 = vpop.permute.xlu0 %2627
      %2629 = vrot.lane.b32.xlu0 %v2499, 24
      %v2630 = vpop.permute.xlu0 %2629
      %2631 = vrot.lane.b32.xlu0 %v2500, 24
      %v2632 = vpop.permute.xlu0 %2631
      %2633 = vrot.lane.b32.xlu0 %v2501, 24
      %v2634 = vpop.permute.xlu0 %2633
      %2635 = vrot.lane.b32.xlu0 %v2502, 24
      %v2636 = vpop.permute.xlu0 %2635
      %2637 = vrot.lane.b32.xlu0 %v2503, 24
      %v2638 = vpop.permute.xlu0 %2637
      %2639 = vrot.lane.b32.xlu0 %v2504, 24
      %v2640 = vpop.permute.xlu0 %2639
      %2641 = vrot.lane.b32.xlu0 %v2505, 24
      %v2642 = vpop.permute.xlu0 %2641
      %2643 = vrot.lane.b32.xlu0 %v2506, 24
      %v2644 = vpop.permute.xlu0 %2643
      %2645 = vrot.lane.b32.xlu0 %v2507, 24
      %v2646 = vpop.permute.xlu0 %2645
      %2647 = vrot.lane.b32.xlu0 %v2508, 24
      %v2648 = vpop.permute.xlu0 %2647
      %2649 = vrot.lane.b32.xlu0 %v2509, 24
      %v2650 = vpop.permute.xlu0 %2649
      %2651 = vrot.lane.b32.xlu0 %v2510, 24
      %v2652 = vpop.permute.xlu0 %2651
      %2653 = vrot.lane.b32.xlu0 %v2511, 24
      %v2654 = vpop.permute.xlu0 %2653
      %2655 = vrot.lane.b32.xlu0 %v2512, 24
      %v2656 = vpop.permute.xlu0 %2655
      %vm2705 = vcmask 228544
      %2706 = vst.msk [vmem:[#allocation3] sm:$0xff] %vm2705, %v2562
      %2707 = vst.msk [vmem:[#allocation3 + $0x8] sm:$0xff] %vm2705, %v2564
      %2708 = vst.msk [vmem:[#allocation3 + $0x10] sm:$0xff] %vm2705, %v2566
      %2709 = vst.msk [vmem:[#allocation3 + $0x18] sm:$0xff] %vm2705, %v2568
      %2710 = vst.msk [vmem:[#allocation3 + $0x20] sm:$0xff] %vm2705, %v2570
      %2711 = vst.msk [vmem:[#allocation3 + $0x28] sm:$0xff] %vm2705, %v2572
      %2712 = vst.msk [vmem:[#allocation3 + $0x30] sm:$0xff] %vm2705, %v2574
      %2713 = vst.msk [vmem:[#allocation3 + $0x38] sm:$0xff] %vm2705, %v2576
      %2714 = vst.msk [vmem:[#allocation3 + $0x40] sm:$0xff] %vm2705, %v2578
      %2715 = vst.msk [vmem:[#allocation3 + $0x48] sm:$0xff] %vm2705, %v2580
      %2716 = vst.msk [vmem:[#allocation3 + $0x50] sm:$0xff] %vm2705, %v2582
      %2717 = vst.msk [vmem:[#allocation3 + $0x58] sm:$0xff] %vm2705, %v2584
      %2718 = vst.msk [vmem:[#allocation3 + $0x60] sm:$0xff] %vm2705, %v2586
      %2719 = vst.msk [vmem:[#allocation3 + $0x68] sm:$0xff] %vm2705, %v2588
      %2720 = vst.msk [vmem:[#allocation3 + $0x70] sm:$0xff] %vm2705, %v2590
      %2721 = vst.msk [vmem:[#allocation3 + $0x78] sm:$0xff] %vm2705, %v2592
      %2722 = vst.msk [vmem:[#allocation3 + $0x80] sm:$0xff] %vm2705, %v2594
      %2723 = vst.msk [vmem:[#allocation3 + $0x88] sm:$0xff] %vm2705, %v2596
      %2724 = vst.msk [vmem:[#allocation3 + $0x90] sm:$0xff] %vm2705, %v2598
      %2725 = vst.msk [vmem:[#allocation3 + $0x98] sm:$0xff] %vm2705, %v2600
      %2726 = vst.msk [vmem:[#allocation3 + $0xa0] sm:$0xff] %vm2705, %v2602
      %2727 = vst.msk [vmem:[#allocation3 + $0xa8] sm:$0xff] %vm2705, %v2604
      %2728 = vst.msk [vmem:[#allocation3 + $0xb0] sm:$0xff] %vm2705, %v2606
      %2729 = vst.msk [vmem:[#allocation3 + $0xb8] sm:$0xff] %vm2705, %v2608
      %2730 = vst.msk [vmem:[#allocation3 + $0xc0] sm:$0xff] %vm2705, %v2610
      %2731 = vst.msk [vmem:[#allocation3 + $0xc8] sm:$0xff] %vm2705, %v2612
      %2732 = vst.msk [vmem:[#allocation3 + $0xd0] sm:$0xff] %vm2705, %v2614
      %2733 = vst.msk [vmem:[#allocation3 + $0xd8] sm:$0xff] %vm2705, %v2616
      %2734 = vst.msk [vmem:[#allocation3 + $0xe0] sm:$0xff] %vm2705, %v2618
      %2735 = vst.msk [vmem:[#allocation3 + $0xe8] sm:$0xff] %vm2705, %v2620
      %2736 = vst.msk [vmem:[#allocation3 + $0xf0] sm:$0xff] %vm2705, %v2622
      %2737 = vst.msk [vmem:[#allocation3 + $0xf8] sm:$0xff] %vm2705, %v2624
      %2738 = vst.msk [vmem:[#allocation3 + $0x100] sm:$0xff] %vm2705, %v2626
      %2739 = vst.msk [vmem:[#allocation3 + $0x108] sm:$0xff] %vm2705, %v2628
      %2740 = vst.msk [vmem:[#allocation3 + $0x110] sm:$0xff] %vm2705, %v2630
      %2741 = vst.msk [vmem:[#allocation3 + $0x118] sm:$0xff] %vm2705, %v2632
      %2742 = vst.msk [vmem:[#allocation3 + $0x120] sm:$0xff] %vm2705, %v2634
      %2743 = vst.msk [vmem:[#allocation3 + $0x128] sm:$0xff] %vm2705, %v2636
      %2744 = vst.msk [vmem:[#allocation3 + $0x130] sm:$0xff] %vm2705, %v2638
      %2745 = vst.msk [vmem:[#allocation3 + $0x138] sm:$0xff] %vm2705, %v2640
      %2746 = vst.msk [vmem:[#allocation3 + $0x140] sm:$0xff] %vm2705, %v2642
      %2747 = vst.msk [vmem:[#allocation3 + $0x148] sm:$0xff] %vm2705, %v2644
      %2748 = vst.msk [vmem:[#allocation3 + $0x150] sm:$0xff] %vm2705, %v2646
      %2749 = vst.msk [vmem:[#allocation3 + $0x158] sm:$0xff] %vm2705, %v2648
      %2750 = vst.msk [vmem:[#allocation3 + $0x160] sm:$0xff] %vm2705, %v2650
      %2751 = vst.msk [vmem:[#allocation3 + $0x168] sm:$0xff] %vm2705, %v2652
      %2752 = vst.msk [vmem:[#allocation3 + $0x170] sm:$0xff] %vm2705, %v2654
      %2753 = vst.msk [vmem:[#allocation3 + $0x178] sm:$0xff] %vm2705, %v2656
      %v2754 = vld [vmem:[#allocation2 + $0x31] sm:$0xff]
      %v2755 = vld [vmem:[#allocation2 + $0x39] sm:$0xff]
      %v2756 = vld [vmem:[#allocation2 + $0x41] sm:$0xff]
      %v2757 = vld [vmem:[#allocation2 + $0x49] sm:$0xff]
      %v2758 = vld [vmem:[#allocation2 + $0x51] sm:$0xff]
      %v2759 = vld [vmem:[#allocation2 + $0x59] sm:$0xff]
      %v2760 = vld [vmem:[#allocation2 + $0x61] sm:$0xff]
      %v2761 = vld [vmem:[#allocation2 + $0x69] sm:$0xff]
      %v2762 = vld [vmem:[#allocation2 + $0x71] sm:$0xff]
      %v2763 = vld [vmem:[#allocation2 + $0x79] sm:$0xff]
      %v2764 = vld [vmem:[#allocation2 + $0x81] sm:$0xff]
      %v2765 = vld [vmem:[#allocation2 + $0x89] sm:$0xff]
      %v2766 = vld [vmem:[#allocation2 + $0x91] sm:$0xff]
      %v2767 = vld [vmem:[#allocation2 + $0x99] sm:$0xff]
      %v2768 = vld [vmem:[#allocation2 + $0xa1] sm:$0xff]
      %v2769 = vld [vmem:[#allocation2 + $0xa9] sm:$0xff]
      %v2770 = vld [vmem:[#allocation2 + $0xb1] sm:$0xff]
      %v2771 = vld [vmem:[#allocation2 + $0xb9] sm:$0xff]
      %v2772 = vld [vmem:[#allocation2 + $0xc1] sm:$0xff]
      %v2773 = vld [vmem:[#allocation2 + $0xc9] sm:$0xff]
      %v2774 = vld [vmem:[#allocation2 + $0xd1] sm:$0xff]
      %v2775 = vld [vmem:[#allocation2 + $0xd9] sm:$0xff]
      %v2776 = vld [vmem:[#allocation2 + $0xe1] sm:$0xff]
      %v2777 = vld [vmem:[#allocation2 + $0xe9] sm:$0xff]
      %v2778 = vld [vmem:[#allocation2 + $0xf1] sm:$0xff]
      %v2779 = vld [vmem:[#allocation2 + $0xf9] sm:$0xff]
      %v2780 = vld [vmem:[#allocation2 + $0x101] sm:$0xff]
      %v2781 = vld [vmem:[#allocation2 + $0x109] sm:$0xff]
      %v2782 = vld [vmem:[#allocation2 + $0x111] sm:$0xff]
      %v2783 = vld [vmem:[#allocation2 + $0x119] sm:$0xff]
      %v2784 = vld [vmem:[#allocation2 + $0x121] sm:$0xff]
      %v2785 = vld [vmem:[#allocation2 + $0x129] sm:$0xff]
      %v2786 = vld [vmem:[#allocation2 + $0x131] sm:$0xff]
      %v2787 = vld [vmem:[#allocation2 + $0x139] sm:$0xff]
      %v2788 = vld [vmem:[#allocation2 + $0x141] sm:$0xff]
      %v2789 = vld [vmem:[#allocation2 + $0x149] sm:$0xff]
      %v2790 = vld [vmem:[#allocation2 + $0x151] sm:$0xff]
      %v2791 = vld [vmem:[#allocation2 + $0x159] sm:$0xff]
      %v2792 = vld [vmem:[#allocation2 + $0x161] sm:$0xff]
      %v2793 = vld [vmem:[#allocation2 + $0x169] sm:$0xff]
      %v2794 = vld [vmem:[#allocation2 + $0x171] sm:$0xff]
      %v2795 = vld [vmem:[#allocation2 + $0x179] sm:$0xff]
      %v2796 = vld [vmem:[#allocation2 + $0x181] sm:$0xff]
      %v2797 = vld [vmem:[#allocation2 + $0x189] sm:$0xff]
      %v2798 = vld [vmem:[#allocation2 + $0x191] sm:$0xff]
      %v2799 = vld [vmem:[#allocation2 + $0x199] sm:$0xff]
      %v2800 = vld [vmem:[#allocation2 + $0x1a1] sm:$0xff]
      %v2801 = vld [vmem:[#allocation2 + $0x1a9] sm:$0xff]
      %2850 = vrot.lane.b32.xlu0 %v2754, 28
      %v2851 = vpop.permute.xlu0 %2850
      %2852 = vrot.lane.b32.xlu0 %v2755, 28
      %v2853 = vpop.permute.xlu0 %2852
      %2854 = vrot.lane.b32.xlu0 %v2756, 28
      %v2855 = vpop.permute.xlu0 %2854
      %2856 = vrot.lane.b32.xlu0 %v2757, 28
      %v2857 = vpop.permute.xlu0 %2856
      %2858 = vrot.lane.b32.xlu0 %v2758, 28
      %v2859 = vpop.permute.xlu0 %2858
      %2860 = vrot.lane.b32.xlu0 %v2759, 28
      %v2861 = vpop.permute.xlu0 %2860
      %2862 = vrot.lane.b32.xlu0 %v2760, 28
      %v2863 = vpop.permute.xlu0 %2862
      %2864 = vrot.lane.b32.xlu0 %v2761, 28
      %v2865 = vpop.permute.xlu0 %2864
      %2866 = vrot.lane.b32.xlu0 %v2762, 28
      %v2867 = vpop.permute.xlu0 %2866
      %2868 = vrot.lane.b32.xlu0 %v2763, 28
      %v2869 = vpop.permute.xlu0 %2868
      %2870 = vrot.lane.b32.xlu0 %v2764, 28
      %v2871 = vpop.permute.xlu0 %2870
      %2872 = vrot.lane.b32.xlu0 %v2765, 28
      %v2873 = vpop.permute.xlu0 %2872
      %2874 = vrot.lane.b32.xlu0 %v2766, 28
      %v2875 = vpop.permute.xlu0 %2874
      %2876 = vrot.lane.b32.xlu0 %v2767, 28
      %v2877 = vpop.permute.xlu0 %2876
      %2878 = vrot.lane.b32.xlu0 %v2768, 28
      %v2879 = vpop.permute.xlu0 %2878
      %2880 = vrot.lane.b32.xlu0 %v2769, 28
      %v2881 = vpop.permute.xlu0 %2880
      %2882 = vrot.lane.b32.xlu0 %v2770, 28
      %v2883 = vpop.permute.xlu0 %2882
      %2884 = vrot.lane.b32.xlu0 %v2771, 28
      %v2885 = vpop.permute.xlu0 %2884
      %2886 = vrot.lane.b32.xlu0 %v2772, 28
      %v2887 = vpop.permute.xlu0 %2886
      %2888 = vrot.lane.b32.xlu0 %v2773, 28
      %v2889 = vpop.permute.xlu0 %2888
      %2890 = vrot.lane.b32.xlu0 %v2774, 28
      %v2891 = vpop.permute.xlu0 %2890
      %2892 = vrot.lane.b32.xlu0 %v2775, 28
      %v2893 = vpop.permute.xlu0 %2892
      %2894 = vrot.lane.b32.xlu0 %v2776, 28
      %v2895 = vpop.permute.xlu0 %2894
      %2896 = vrot.lane.b32.xlu0 %v2777, 28
      %v2897 = vpop.permute.xlu0 %2896
      %2898 = vrot.lane.b32.xlu0 %v2778, 28
      %v2899 = vpop.permute.xlu0 %2898
      %2900 = vrot.lane.b32.xlu0 %v2779, 28
      %v2901 = vpop.permute.xlu0 %2900
      %2902 = vrot.lane.b32.xlu0 %v2780, 28
      %v2903 = vpop.permute.xlu0 %2902
      %2904 = vrot.lane.b32.xlu0 %v2781, 28
      %v2905 = vpop.permute.xlu0 %2904
      %2906 = vrot.lane.b32.xlu0 %v2782, 28
      %v2907 = vpop.permute.xlu0 %2906
      %2908 = vrot.lane.b32.xlu0 %v2783, 28
      %v2909 = vpop.permute.xlu0 %2908
      %2910 = vrot.lane.b32.xlu0 %v2784, 28
      %v2911 = vpop.permute.xlu0 %2910
      %2912 = vrot.lane.b32.xlu0 %v2785, 28
      %v2913 = vpop.permute.xlu0 %2912
      %2914 = vrot.lane.b32.xlu0 %v2786, 28
      %v2915 = vpop.permute.xlu0 %2914
      %2916 = vrot.lane.b32.xlu0 %v2787, 28
      %v2917 = vpop.permute.xlu0 %2916
      %2918 = vrot.lane.b32.xlu0 %v2788, 28
      %v2919 = vpop.permute.xlu0 %2918
      %2920 = vrot.lane.b32.xlu0 %v2789, 28
      %v2921 = vpop.permute.xlu0 %2920
      %2922 = vrot.lane.b32.xlu0 %v2790, 28
      %v2923 = vpop.permute.xlu0 %2922
      %2924 = vrot.lane.b32.xlu0 %v2791, 28
      %v2925 = vpop.permute.xlu0 %2924
      %2926 = vrot.lane.b32.xlu0 %v2792, 28
      %v2927 = vpop.permute.xlu0 %2926
      %2928 = vrot.lane.b32.xlu0 %v2793, 28
      %v2929 = vpop.permute.xlu0 %2928
      %2930 = vrot.lane.b32.xlu0 %v2794, 28
      %v2931 = vpop.permute.xlu0 %2930
      %2932 = vrot.lane.b32.xlu0 %v2795, 28
      %v2933 = vpop.permute.xlu0 %2932
      %2934 = vrot.lane.b32.xlu0 %v2796, 28
      %v2935 = vpop.permute.xlu0 %2934
      %2936 = vrot.lane.b32.xlu0 %v2797, 28
      %v2937 = vpop.permute.xlu0 %2936
      %2938 = vrot.lane.b32.xlu0 %v2798, 28
      %v2939 = vpop.permute.xlu0 %2938
      %2940 = vrot.lane.b32.xlu0 %v2799, 28
      %v2941 = vpop.permute.xlu0 %2940
      %2942 = vrot.lane.b32.xlu0 %v2800, 28
      %v2943 = vpop.permute.xlu0 %2942
      %2944 = vrot.lane.b32.xlu0 %v2801, 28
      %v2945 = vpop.permute.xlu0 %2944
      %vm2994 = vcmask 261344
      %2995 = vst.msk [vmem:[#allocation3] sm:$0xff] %vm2994, %v2851
      %2996 = vst.msk [vmem:[#allocation3 + $0x8] sm:$0xff] %vm2994, %v2853
      %2997 = vst.msk [vmem:[#allocation3 + $0x10] sm:$0xff] %vm2994, %v2855
      %2998 = vst.msk [vmem:[#allocation3 + $0x18] sm:$0xff] %vm2994, %v2857
      %2999 = vst.msk [vmem:[#allocation3 + $0x20] sm:$0xff] %vm2994, %v2859
      %3000 = vst.msk [vmem:[#allocation3 + $0x28] sm:$0xff] %vm2994, %v2861
      %3001 = vst.msk [vmem:[#allocation3 + $0x30] sm:$0xff] %vm2994, %v2863
      %3002 = vst.msk [vmem:[#allocation3 + $0x38] sm:$0xff] %vm2994, %v2865
      %3003 = vst.msk [vmem:[#allocation3 + $0x40] sm:$0xff] %vm2994, %v2867
      %3004 = vst.msk [vmem:[#allocation3 + $0x48] sm:$0xff] %vm2994, %v2869
      %3005 = vst.msk [vmem:[#allocation3 + $0x50] sm:$0xff] %vm2994, %v2871
      %3006 = vst.msk [vmem:[#allocation3 + $0x58] sm:$0xff] %vm2994, %v2873
      %3007 = vst.msk [vmem:[#allocation3 + $0x60] sm:$0xff] %vm2994, %v2875
      %3008 = vst.msk [vmem:[#allocation3 + $0x68] sm:$0xff] %vm2994, %v2877
      %3009 = vst.msk [vmem:[#allocation3 + $0x70] sm:$0xff] %vm2994, %v2879
      %3010 = vst.msk [vmem:[#allocation3 + $0x78] sm:$0xff] %vm2994, %v2881
      %3011 = vst.msk [vmem:[#allocation3 + $0x80] sm:$0xff] %vm2994, %v2883
      %3012 = vst.msk [vmem:[#allocation3 + $0x88] sm:$0xff] %vm2994, %v2885
      %3013 = vst.msk [vmem:[#allocation3 + $0x90] sm:$0xff] %vm2994, %v2887
      %3014 = vst.msk [vmem:[#allocation3 + $0x98] sm:$0xff] %vm2994, %v2889
      %3015 = vst.msk [vmem:[#allocation3 + $0xa0] sm:$0xff] %vm2994, %v2891
      %3016 = vst.msk [vmem:[#allocation3 + $0xa8] sm:$0xff] %vm2994, %v2893
      %3017 = vst.msk [vmem:[#allocation3 + $0xb0] sm:$0xff] %vm2994, %v2895
      %3018 = vst.msk [vmem:[#allocation3 + $0xb8] sm:$0xff] %vm2994, %v2897
      %3019 = vst.msk [vmem:[#allocation3 + $0xc0] sm:$0xff] %vm2994, %v2899
      %3020 = vst.msk [vmem:[#allocation3 + $0xc8] sm:$0xff] %vm2994, %v2901
      %3021 = vst.msk [vmem:[#allocation3 + $0xd0] sm:$0xff] %vm2994, %v2903
      %3022 = vst.msk [vmem:[#allocation3 + $0xd8] sm:$0xff] %vm2994, %v2905
      %3023 = vst.msk [vmem:[#allocation3 + $0xe0] sm:$0xff] %vm2994, %v2907
      %3024 = vst.msk [vmem:[#allocation3 + $0xe8] sm:$0xff] %vm2994, %v2909
      %3025 = vst.msk [vmem:[#allocation3 + $0xf0] sm:$0xff] %vm2994, %v2911
      %3026 = vst.msk [vmem:[#allocation3 + $0xf8] sm:$0xff] %vm2994, %v2913
      %3027 = vst.msk [vmem:[#allocation3 + $0x100] sm:$0xff] %vm2994, %v2915
      %3028 = vst.msk [vmem:[#allocation3 + $0x108] sm:$0xff] %vm2994, %v2917
      %3029 = vst.msk [vmem:[#allocation3 + $0x110] sm:$0xff] %vm2994, %v2919
      %3030 = vst.msk [vmem:[#allocation3 + $0x118] sm:$0xff] %vm2994, %v2921
      %3031 = vst.msk [vmem:[#allocation3 + $0x120] sm:$0xff] %vm2994, %v2923
      %3032 = vst.msk [vmem:[#allocation3 + $0x128] sm:$0xff] %vm2994, %v2925
      %3033 = vst.msk [vmem:[#allocation3 + $0x130] sm:$0xff] %vm2994, %v2927
      %3034 = vst.msk [vmem:[#allocation3 + $0x138] sm:$0xff] %vm2994, %v2929
      %3035 = vst.msk [vmem:[#allocation3 + $0x140] sm:$0xff] %vm2994, %v2931
      %3036 = vst.msk [vmem:[#allocation3 + $0x148] sm:$0xff] %vm2994, %v2933
      %3037 = vst.msk [vmem:[#allocation3 + $0x150] sm:$0xff] %vm2994, %v2935
      %3038 = vst.msk [vmem:[#allocation3 + $0x158] sm:$0xff] %vm2994, %v2937
      %3039 = vst.msk [vmem:[#allocation3 + $0x160] sm:$0xff] %vm2994, %v2939
      %3040 = vst.msk [vmem:[#allocation3 + $0x168] sm:$0xff] %vm2994, %v2941
      %3041 = vst.msk [vmem:[#allocation3 + $0x170] sm:$0xff] %vm2994, %v2943
      %3042 = vst.msk [vmem:[#allocation3 + $0x178] sm:$0xff] %vm2994, %v2945
      %v3043 = vld [vmem:[#allocation2 + $0x32] sm:$0xff]
      %v3044 = vld [vmem:[#allocation2 + $0x3a] sm:$0xff]
      %v3045 = vld [vmem:[#allocation2 + $0x42] sm:$0xff]
      %v3046 = vld [vmem:[#allocation2 + $0x4a] sm:$0xff]
      %v3047 = vld [vmem:[#allocation2 + $0x52] sm:$0xff]
      %v3048 = vld [vmem:[#allocation2 + $0x5a] sm:$0xff]
      %v3049 = vld [vmem:[#allocation2 + $0x62] sm:$0xff]
      %v3050 = vld [vmem:[#allocation2 + $0x6a] sm:$0xff]
      %v3051 = vld [vmem:[#allocation2 + $0x72] sm:$0xff]
      %v3052 = vld [vmem:[#allocation2 + $0x7a] sm:$0xff]
      %v3053 = vld [vmem:[#allocation2 + $0x82] sm:$0xff]
      %v3054 = vld [vmem:[#allocation2 + $0x8a] sm:$0xff]
      %v3055 = vld [vmem:[#allocation2 + $0x92] sm:$0xff]
      %v3056 = vld [vmem:[#allocation2 + $0x9a] sm:$0xff]
      %v3057 = vld [vmem:[#allocation2 + $0xa2] sm:$0xff]
      %v3058 = vld [vmem:[#allocation2 + $0xaa] sm:$0xff]
      %v3059 = vld [vmem:[#allocation2 + $0xb2] sm:$0xff]
      %v3060 = vld [vmem:[#allocation2 + $0xba] sm:$0xff]
      %v3061 = vld [vmem:[#allocation2 + $0xc2] sm:$0xff]
      %v3062 = vld [vmem:[#allocation2 + $0xca] sm:$0xff]
      %v3063 = vld [vmem:[#allocation2 + $0xd2] sm:$0xff]
      %v3064 = vld [vmem:[#allocation2 + $0xda] sm:$0xff]
      %v3065 = vld [vmem:[#allocation2 + $0xe2] sm:$0xff]
      %v3066 = vld [vmem:[#allocation2 + $0xea] sm:$0xff]
      %v3067 = vld [vmem:[#allocation2 + $0xf2] sm:$0xff]
      %v3068 = vld [vmem:[#allocation2 + $0xfa] sm:$0xff]
      %v3069 = vld [vmem:[#allocation2 + $0x102] sm:$0xff]
      %v3070 = vld [vmem:[#allocation2 + $0x10a] sm:$0xff]
      %v3071 = vld [vmem:[#allocation2 + $0x112] sm:$0xff]
      %v3072 = vld [vmem:[#allocation2 + $0x11a] sm:$0xff]
      %v3073 = vld [vmem:[#allocation2 + $0x122] sm:$0xff]
      %v3074 = vld [vmem:[#allocation2 + $0x12a] sm:$0xff]
      %v3075 = vld [vmem:[#allocation2 + $0x132] sm:$0xff]
      %v3076 = vld [vmem:[#allocation2 + $0x13a] sm:$0xff]
      %v3077 = vld [vmem:[#allocation2 + $0x142] sm:$0xff]
      %v3078 = vld [vmem:[#allocation2 + $0x14a] sm:$0xff]
      %v3079 = vld [vmem:[#allocation2 + $0x152] sm:$0xff]
      %v3080 = vld [vmem:[#allocation2 + $0x15a] sm:$0xff]
      %v3081 = vld [vmem:[#allocation2 + $0x162] sm:$0xff]
      %v3082 = vld [vmem:[#allocation2 + $0x16a] sm:$0xff]
      %v3083 = vld [vmem:[#allocation2 + $0x172] sm:$0xff]
      %v3084 = vld [vmem:[#allocation2 + $0x17a] sm:$0xff]
      %v3085 = vld [vmem:[#allocation2 + $0x182] sm:$0xff]
      %v3086 = vld [vmem:[#allocation2 + $0x18a] sm:$0xff]
      %v3087 = vld [vmem:[#allocation2 + $0x192] sm:$0xff]
      %v3088 = vld [vmem:[#allocation2 + $0x19a] sm:$0xff]
      %v3089 = vld [vmem:[#allocation2 + $0x1a2] sm:$0xff]
      %v3090 = vld [vmem:[#allocation2 + $0x1aa] sm:$0xff]
      %3139 = vrot.lane.b32.xlu0 %v3043, 32
      %v3140 = vpop.permute.xlu0 %3139
      %3141 = vrot.lane.b32.xlu0 %v3044, 32
      %v3142 = vpop.permute.xlu0 %3141
      %3143 = vrot.lane.b32.xlu0 %v3045, 32
      %v3144 = vpop.permute.xlu0 %3143
      %3145 = vrot.lane.b32.xlu0 %v3046, 32
      %v3146 = vpop.permute.xlu0 %3145
      %3147 = vrot.lane.b32.xlu0 %v3047, 32
      %v3148 = vpop.permute.xlu0 %3147
      %3149 = vrot.lane.b32.xlu0 %v3048, 32
      %v3150 = vpop.permute.xlu0 %3149
      %3151 = vrot.lane.b32.xlu0 %v3049, 32
      %v3152 = vpop.permute.xlu0 %3151
      %3153 = vrot.lane.b32.xlu0 %v3050, 32
      %v3154 = vpop.permute.xlu0 %3153
      %3155 = vrot.lane.b32.xlu0 %v3051, 32
      %v3156 = vpop.permute.xlu0 %3155
      %3157 = vrot.lane.b32.xlu0 %v3052, 32
      %v3158 = vpop.permute.xlu0 %3157
      %3159 = vrot.lane.b32.xlu0 %v3053, 32
      %v3160 = vpop.permute.xlu0 %3159
      %3161 = vrot.lane.b32.xlu0 %v3054, 32
      %v3162 = vpop.permute.xlu0 %3161
      %3163 = vrot.lane.b32.xlu0 %v3055, 32
      %v3164 = vpop.permute.xlu0 %3163
      %3165 = vrot.lane.b32.xlu0 %v3056, 32
      %v3166 = vpop.permute.xlu0 %3165
      %3167 = vrot.lane.b32.xlu0 %v3057, 32
      %v3168 = vpop.permute.xlu0 %3167
      %3169 = vrot.lane.b32.xlu0 %v3058, 32
      %v3170 = vpop.permute.xlu0 %3169
      %3171 = vrot.lane.b32.xlu0 %v3059, 32
      %v3172 = vpop.permute.xlu0 %3171
      %3173 = vrot.lane.b32.xlu0 %v3060, 32
      %v3174 = vpop.permute.xlu0 %3173
      %3175 = vrot.lane.b32.xlu0 %v3061, 32
      %v3176 = vpop.permute.xlu0 %3175
      %3177 = vrot.lane.b32.xlu0 %v3062, 32
      %v3178 = vpop.permute.xlu0 %3177
      %3179 = vrot.lane.b32.xlu0 %v3063, 32
      %v3180 = vpop.permute.xlu0 %3179
      %3181 = vrot.lane.b32.xlu0 %v3064, 32
      %v3182 = vpop.permute.xlu0 %3181
      %3183 = vrot.lane.b32.xlu0 %v3065, 32
      %v3184 = vpop.permute.xlu0 %3183
      %3185 = vrot.lane.b32.xlu0 %v3066, 32
      %v3186 = vpop.permute.xlu0 %3185
      %3187 = vrot.lane.b32.xlu0 %v3067, 32
      %v3188 = vpop.permute.xlu0 %3187
      %3189 = vrot.lane.b32.xlu0 %v3068, 32
      %v3190 = vpop.permute.xlu0 %3189
      %3191 = vrot.lane.b32.xlu0 %v3069, 32
      %v3192 = vpop.permute.xlu0 %3191
      %3193 = vrot.lane.b32.xlu0 %v3070, 32
      %v3194 = vpop.permute.xlu0 %3193
      %3195 = vrot.lane.b32.xlu0 %v3071, 32
      %v3196 = vpop.permute.xlu0 %3195
      %3197 = vrot.lane.b32.xlu0 %v3072, 32
      %v3198 = vpop.permute.xlu0 %3197
      %3199 = vrot.lane.b32.xlu0 %v3073, 32
      %v3200 = vpop.permute.xlu0 %3199
      %3201 = vrot.lane.b32.xlu0 %v3074, 32
      %v3202 = vpop.permute.xlu0 %3201
      %3203 = vrot.lane.b32.xlu0 %v3075, 32
      %v3204 = vpop.permute.xlu0 %3203
      %3205 = vrot.lane.b32.xlu0 %v3076, 32
      %v3206 = vpop.permute.xlu0 %3205
      %3207 = vrot.lane.b32.xlu0 %v3077, 32
      %v3208 = vpop.permute.xlu0 %3207
      %3209 = vrot.lane.b32.xlu0 %v3078, 32
      %v3210 = vpop.permute.xlu0 %3209
      %3211 = vrot.lane.b32.xlu0 %v3079, 32
      %v3212 = vpop.permute.xlu0 %3211
      %3213 = vrot.lane.b32.xlu0 %v3080, 32
      %v3214 = vpop.permute.xlu0 %3213
      %3215 = vrot.lane.b32.xlu0 %v3081, 32
      %v3216 = vpop.permute.xlu0 %3215
      %3217 = vrot.lane.b32.xlu0 %v3082, 32
      %v3218 = vpop.permute.xlu0 %3217
      %3219 = vrot.lane.b32.xlu0 %v3083, 32
      %v3220 = vpop.permute.xlu0 %3219
      %3221 = vrot.lane.b32.xlu0 %v3084, 32
      %v3222 = vpop.permute.xlu0 %3221
      %3223 = vrot.lane.b32.xlu0 %v3085, 32
      %v3224 = vpop.permute.xlu0 %3223
      %3225 = vrot.lane.b32.xlu0 %v3086, 32
      %v3226 = vpop.permute.xlu0 %3225
      %3227 = vrot.lane.b32.xlu0 %v3087, 32
      %v3228 = vpop.permute.xlu0 %3227
      %3229 = vrot.lane.b32.xlu0 %v3088, 32
      %v3230 = vpop.permute.xlu0 %3229
      %3231 = vrot.lane.b32.xlu0 %v3089, 32
      %v3232 = vpop.permute.xlu0 %3231
      %3233 = vrot.lane.b32.xlu0 %v3090, 32
      %v3234 = vpop.permute.xlu0 %3233
      %vm3283 = vcmask 294144
      %3284 = vst.msk [vmem:[#allocation3] sm:$0xff] %vm3283, %v3140
      %3285 = vst.msk [vmem:[#allocation3 + $0x8] sm:$0xff] %vm3283, %v3142
      %3286 = vst.msk [vmem:[#allocation3 + $0x10] sm:$0xff] %vm3283, %v3144
      %3287 = vst.msk [vmem:[#allocation3 + $0x18] sm:$0xff] %vm3283, %v3146
      %3288 = vst.msk [vmem:[#allocation3 + $0x20] sm:$0xff] %vm3283, %v3148
      %3289 = vst.msk [vmem:[#allocation3 + $0x28] sm:$0xff] %vm3283, %v3150
      %3290 = vst.msk [vmem:[#allocation3 + $0x30] sm:$0xff] %vm3283, %v3152
      %3291 = vst.msk [vmem:[#allocation3 + $0x38] sm:$0xff] %vm3283, %v3154
      %3292 = vst.msk [vmem:[#allocation3 + $0x40] sm:$0xff] %vm3283, %v3156
      %3293 = vst.msk [vmem:[#allocation3 + $0x48] sm:$0xff] %vm3283, %v3158
      %3294 = vst.msk [vmem:[#allocation3 + $0x50] sm:$0xff] %vm3283, %v3160
      %3295 = vst.msk [vmem:[#allocation3 + $0x58] sm:$0xff] %vm3283, %v3162
      %3296 = vst.msk [vmem:[#allocation3 + $0x60] sm:$0xff] %vm3283, %v3164
      %3297 = vst.msk [vmem:[#allocation3 + $0x68] sm:$0xff] %vm3283, %v3166
      %3298 = vst.msk [vmem:[#allocation3 + $0x70] sm:$0xff] %vm3283, %v3168
      %3299 = vst.msk [vmem:[#allocation3 + $0x78] sm:$0xff] %vm3283, %v3170
      %3300 = vst.msk [vmem:[#allocation3 + $0x80] sm:$0xff] %vm3283, %v3172
      %3301 = vst.msk [vmem:[#allocation3 + $0x88] sm:$0xff] %vm3283, %v3174
      %3302 = vst.msk [vmem:[#allocation3 + $0x90] sm:$0xff] %vm3283, %v3176
      %3303 = vst.msk [vmem:[#allocation3 + $0x98] sm:$0xff] %vm3283, %v3178
      %3304 = vst.msk [vmem:[#allocation3 + $0xa0] sm:$0xff] %vm3283, %v3180
      %3305 = vst.msk [vmem:[#allocation3 + $0xa8] sm:$0xff] %vm3283, %v3182
      %3306 = vst.msk [vmem:[#allocation3 + $0xb0] sm:$0xff] %vm3283, %v3184
      %3307 = vst.msk [vmem:[#allocation3 + $0xb8] sm:$0xff] %vm3283, %v3186
      %3308 = vst.msk [vmem:[#allocation3 + $0xc0] sm:$0xff] %vm3283, %v3188
      %3309 = vst.msk [vmem:[#allocation3 + $0xc8] sm:$0xff] %vm3283, %v3190
      %3310 = vst.msk [vmem:[#allocation3 + $0xd0] sm:$0xff] %vm3283, %v3192
      %3311 = vst.msk [vmem:[#allocation3 + $0xd8] sm:$0xff] %vm3283, %v3194
      %3312 = vst.msk [vmem:[#allocation3 + $0xe0] sm:$0xff] %vm3283, %v3196
      %3313 = vst.msk [vmem:[#allocation3 + $0xe8] sm:$0xff] %vm3283, %v3198
      %3314 = vst.msk [vmem:[#allocation3 + $0xf0] sm:$0xff] %vm3283, %v3200
      %3315 = vst.msk [vmem:[#allocation3 + $0xf8] sm:$0xff] %vm3283, %v3202
      %3316 = vst.msk [vmem:[#allocation3 + $0x100] sm:$0xff] %vm3283, %v3204
      %3317 = vst.msk [vmem:[#allocation3 + $0x108] sm:$0xff] %vm3283, %v3206
      %3318 = vst.msk [vmem:[#allocation3 + $0x110] sm:$0xff] %vm3283, %v3208
      %3319 = vst.msk [vmem:[#allocation3 + $0x118] sm:$0xff] %vm3283, %v3210
      %3320 = vst.msk [vmem:[#allocation3 + $0x120] sm:$0xff] %vm3283, %v3212
      %3321 = vst.msk [vmem:[#allocation3 + $0x128] sm:$0xff] %vm3283, %v3214
      %3322 = vst.msk [vmem:[#allocation3 + $0x130] sm:$0xff] %vm3283, %v3216
      %3323 = vst.msk [vmem:[#allocation3 + $0x138] sm:$0xff] %vm3283, %v3218
      %3324 = vst.msk [vmem:[#allocation3 + $0x140] sm:$0xff] %vm3283, %v3220
      %3325 = vst.msk [vmem:[#allocation3 + $0x148] sm:$0xff] %vm3283, %v3222
      %3326 = vst.msk [vmem:[#allocation3 + $0x150] sm:$0xff] %vm3283, %v3224
      %3327 = vst.msk [vmem:[#allocation3 + $0x158] sm:$0xff] %vm3283, %v3226
      %3328 = vst.msk [vmem:[#allocation3 + $0x160] sm:$0xff] %vm3283, %v3228
      %3329 = vst.msk [vmem:[#allocation3 + $0x168] sm:$0xff] %vm3283, %v3230
      %3330 = vst.msk [vmem:[#allocation3 + $0x170] sm:$0xff] %vm3283, %v3232
      %3331 = vst.msk [vmem:[#allocation3 + $0x178] sm:$0xff] %vm3283, %v3234
      %v3332 = vld [vmem:[#allocation3] sm:$0xff]
      %v3333 = vld [vmem:[#allocation3 + $0x8] sm:$0xff]
      %v3334 = vld [vmem:[#allocation3 + $0x10] sm:$0xff]
      %v3335 = vld [vmem:[#allocation3 + $0x18] sm:$0xff]
      %v3336 = vld [vmem:[#allocation3 + $0x20] sm:$0xff]
      %v3337 = vld [vmem:[#allocation3 + $0x28] sm:$0xff]
      %v3338 = vld [vmem:[#allocation3 + $0x30] sm:$0xff]
      %v3339 = vld [vmem:[#allocation3 + $0x38] sm:$0xff]
      %v3340 = vld [vmem:[#allocation3 + $0x40] sm:$0xff]
      %v3341 = vld [vmem:[#allocation3 + $0x48] sm:$0xff]
      %v3342 = vld [vmem:[#allocation3 + $0x50] sm:$0xff]
      %v3343 = vld [vmem:[#allocation3 + $0x58] sm:$0xff]
      %v3344 = vld [vmem:[#allocation3 + $0x60] sm:$0xff]
      %v3345 = vld [vmem:[#allocation3 + $0x68] sm:$0xff]
      %v3346 = vld [vmem:[#allocation3 + $0x70] sm:$0xff]
      %v3347 = vld [vmem:[#allocation3 + $0x78] sm:$0xff]
      %v3348 = vld [vmem:[#allocation3 + $0x80] sm:$0xff]
      %v3349 = vld [vmem:[#allocation3 + $0x88] sm:$0xff]
      %v3350 = vld [vmem:[#allocation3 + $0x90] sm:$0xff]
      %v3351 = vld [vmem:[#allocation3 + $0x98] sm:$0xff]
      %v3352 = vld [vmem:[#allocation3 + $0xa0] sm:$0xff]
      %v3353 = vld [vmem:[#allocation3 + $0xa8] sm:$0xff]
      %v3354 = vld [vmem:[#allocation3 + $0xb0] sm:$0xff]
      %v3355 = vld [vmem:[#allocation3 + $0xb8] sm:$0xff]
      %v3356 = vld [vmem:[#allocation3 + $0xc0] sm:$0xff]
      %v3357 = vld [vmem:[#allocation3 + $0xc8] sm:$0xff]
      %v3358 = vld [vmem:[#allocation3 + $0xd0] sm:$0xff]
      %v3359 = vld [vmem:[#allocation3 + $0xd8] sm:$0xff]
      %v3360 = vld [vmem:[#allocation3 + $0xe0] sm:$0xff]
      %v3361 = vld [vmem:[#allocation3 + $0xe8] sm:$0xff]
      %v3362 = vld [vmem:[#allocation3 + $0xf0] sm:$0xff]
      %v3363 = vld [vmem:[#allocation3 + $0xf8] sm:$0xff]
      %v3364 = vld [vmem:[#allocation3 + $0x100] sm:$0xff]
      %v3365 = vld [vmem:[#allocation3 + $0x108] sm:$0xff]
      %v3366 = vld [vmem:[#allocation3 + $0x110] sm:$0xff]
      %v3367 = vld [vmem:[#allocation3 + $0x118] sm:$0xff]
      %v3368 = vld [vmem:[#allocation3 + $0x120] sm:$0xff]
      %v3369 = vld [vmem:[#allocation3 + $0x128] sm:$0xff]
      %v3370 = vld [vmem:[#allocation3 + $0x130] sm:$0xff]
      %v3371 = vld [vmem:[#allocation3 + $0x138] sm:$0xff]
      %v3372 = vld [vmem:[#allocation3 + $0x140] sm:$0xff]
      %v3373 = vld [vmem:[#allocation3 + $0x148] sm:$0xff]
      %v3374 = vld [vmem:[#allocation3 + $0x150] sm:$0xff]
      %v3375 = vld [vmem:[#allocation3 + $0x158] sm:$0xff]
      %v3376 = vld [vmem:[#allocation3 + $0x160] sm:$0xff]
      %v3377 = vld [vmem:[#allocation3 + $0x168] sm:$0xff]
      %v3378 = vld [vmem:[#allocation3 + $0x170] sm:$0xff]
      %v3379 = vld [vmem:[#allocation3 + $0x178] sm:$0xff]
      %v3380 = vld [vmem:[%s4] sm:$0xff]
      %v3381 = vld [vmem:[%s4 + $0x8] sm:$0xff]
      %v3382 = vld [vmem:[%s4 + $0x10] sm:$0xff]
      %v3383 = vld [vmem:[%s4 + $0x18] sm:$0xff]
      %v3384 = vld [vmem:[%s4 + $0x20] sm:$0xf]
      %vm3385 = vcmask 293888
      %v3387 = vsel %vm3385, %v3332, 0
      %v3390 = vsel %vm3385, %v3333, 0
      %v3393 = vsel %vm3385, %v3334, 0
      %v3396 = vsel %vm3385, %v3335, 0
      %v3399 = vsel %vm3385, %v3336, 0
      %v3402 = vsel %vm3385, %v3337, 0
      %v3405 = vsel %vm3385, %v3338, 0
      %v3408 = vsel %vm3385, %v3339, 0
      %v3411 = vsel %vm3385, %v3340, 0
      %v3414 = vsel %vm3385, %v3341, 0
      %v3417 = vsel %vm3385, %v3342, 0
      %v3420 = vsel %vm3385, %v3343, 0
      %v3423 = vsel %vm3385, %v3344, 0
      %v3426 = vsel %vm3385, %v3345, 0
      %v3429 = vsel %vm3385, %v3346, 0
      %v3432 = vsel %vm3385, %v3347, 0
      %v3435 = vsel %vm3385, %v3348, 0
      %v3438 = vsel %vm3385, %v3349, 0
      %v3441 = vsel %vm3385, %v3350, 0
      %v3444 = vsel %vm3385, %v3351, 0
      %v3447 = vsel %vm3385, %v3352, 0
      %v3450 = vsel %vm3385, %v3353, 0
      %v3453 = vsel %vm3385, %v3354, 0
      %v3456 = vsel %vm3385, %v3355, 0
      %v3459 = vsel %vm3385, %v3356, 0
      %v3462 = vsel %vm3385, %v3357, 0
      %v3465 = vsel %vm3385, %v3358, 0
      %v3468 = vsel %vm3385, %v3359, 0
      %v3471 = vsel %vm3385, %v3360, 0
      %v3474 = vsel %vm3385, %v3361, 0
      %v3477 = vsel %vm3385, %v3362, 0
      %v3480 = vsel %vm3385, %v3363, 0
      %v3483 = vsel %vm3385, %v3364, 0
      %v3486 = vsel %vm3385, %v3365, 0
      %v3489 = vsel %vm3385, %v3366, 0
      %v3492 = vsel %vm3385, %v3367, 0
      %v3495 = vsel %vm3385, %v3368, 0
      %v3498 = vsel %vm3385, %v3369, 0
      %v3501 = vsel %vm3385, %v3370, 0
      %v3504 = vsel %vm3385, %v3371, 0
      %v3507 = vsel %vm3385, %v3372, 0
      %v3510 = vsel %vm3385, %v3373, 0
      %v3513 = vsel %vm3385, %v3374, 0
      %v3516 = vsel %vm3385, %v3375, 0
      %v3519 = vsel %vm3385, %v3376, 0
      %v3522 = vsel %vm3385, %v3377, 0
      %v3525 = vsel %vm3385, %v3378, 0
      %v3528 = vsel %vm3385, %v3379, 0
      %vm3530 = vcmask 1043456
      %v3532 = vsel %vm3530, %v3384, 0
      %3534 = vmatprep.subr.mxu0 0.0
      %3535 = vmatpush1.msra.mxu0 0.0
      %3536 = vmatprep.subr.mxu0 0.0
      %3537 = vmatpush1.msra.mxu0 0.0
      %3538 = vmatprep.subr.mxu0 0.0
      %3539 = vmatpush1.msra.mxu0 0.0
      %3540 = vmatprep.subr.mxu0 0.0
      %3541 = vmatpush1.msra.mxu0 0.0
      %3542 = vmatprep.subr.mxu0 0.0
      %3543 = vmatpush1.msra.mxu0 0.0
      %3544 = vmatprep.subr.mxu0 0.0
      %3545 = vmatpush1.msra.mxu0 0.0
      %3546 = vmatprep.subr.mxu0 0.0
      %3547 = vmatpush1.msra.mxu0 0.0
      %3548 = vmatprep.subr.mxu0 0.0
      %3549 = vmatpush1.msra.mxu0 0.0
      %3550 = vmatprep.subr.mxu0 0.0
      %3551 = vmatpush1.msra.mxu0 0.0
      %3552 = vmatprep.subr.mxu0 0.0
      %3553 = vmatpush1.msra.mxu0 0.0
      %3554 = vmatprep.subr.mxu0 0.0
      %3555 = vmatpush1.msra.mxu0 0.0
      %3556 = vmatprep.subr.mxu0 0.0
      %3557 = vmatpush1.msra.mxu0 %v3532
      %3558 = vmatprep.subr.mxu0 0.0
      %3559 = vmatpush1.msra.mxu0 %v3383
      %3560 = vmatprep.subr.mxu0 0.0
      %3561 = vmatpush1.msra.mxu0 %v3382
      %3562 = vmatprep.subr.mxu0 0.0
      %3563 = vmatpush1.msra.mxu0 %v3381
      %3564 = vmatprep.subr.mxu0 0.0
      %3565 = vmatpush1.msra.mxu0 %v3380
      %3566 = vmatprep.subr.mxu0 0.0
      %3567 = vmatpush2.msra.mxu0 0.0
      %3568 = vmatprep.subr.mxu0 0.0
      %3569 = vmatpush2.msra.mxu0 0.0
      %3570 = vmatprep.subr.mxu0 0.0
      %3571 = vmatpush2.msra.mxu0 0.0
      %3572 = vmatprep.subr.mxu0 0.0
      %3573 = vmatpush2.msra.mxu0 0.0
      %3574 = vmatprep.subr.mxu0 0.0
      %3575 = vmatpush2.msra.mxu0 0.0
      %3576 = vmatprep.subr.mxu0 0.0
      %3577 = vmatpush2.msra.mxu0 0.0
      %3578 = vmatprep.subr.mxu0 0.0
      %3579 = vmatpush2.msra.mxu0 0.0
      %3580 = vmatprep.subr.mxu0 0.0
      %3581 = vmatpush2.msra.mxu0 0.0
      %3582 = vmatprep.subr.mxu0 0.0
      %3583 = vmatpush2.msra.mxu0 0.0
      %3584 = vmatprep.subr.mxu0 0.0
      %3585 = vmatpush2.msra.mxu0 0.0
      %3586 = vmatprep.subr.mxu0 0.0
      %3587 = vmatpush2.msra.mxu0 0.0
      %3588 = vmatprep.subr.mxu0 0.0
      %3589 = vmatpush2.msra.mxu0 0.0
      %3590 = vmatprep.subr.mxu0 0.0
      %3591 = vmatpush2.msra.mxu0 0.0
      %3592 = vmatprep.subr.mxu0 0.0
      %3593 = vmatpush2.msra.mxu0 0.0
      %3594 = vmatprep.subr.mxu0 0.0
      %3595 = vmatpush2.msra.mxu0 0.0
      %3596 = vmatprep.subr.mxu0 0.0
      %3597 = vmatpush2.msra.mxu0 0.0
      %3598 = vmatprep.mubr.f32.mxu0 0.0
      %3599 = vmatmul.mubr.f32.gmra.mxu0 %v3387
      %v3600 = vpop.f32.mrf.mxu0
      %v3601 = vadd.f32 0.0, %v3600
      %v3602 = vpop.f32.mrf.mxu0
      %3603 = vmatprep.mubr.f32.mxu0 0.0
      %3604 = vmatmul.mubr.f32.gmra.mxu0 %v3390
      %v3605 = vpop.f32.mrf.mxu0
      %v3606 = vadd.f32 0.0, %v3605
      %v3607 = vpop.f32.mrf.mxu0
      %3608 = vmatprep.mubr.f32.mxu0 0.0
      %3609 = vmatmul.mubr.f32.gmra.mxu0 %v3393
      %v3610 = vpop.f32.mrf.mxu0
      %v3611 = vadd.f32 0.0, %v3610
      %v3612 = vpop.f32.mrf.mxu0
      %3613 = vmatprep.mubr.f32.mxu0 0.0
      %3614 = vmatmul.mubr.f32.gmra.mxu0 %v3396
      %v3615 = vpop.f32.mrf.mxu0
      %v3616 = vadd.f32 0.0, %v3615
      %v3617 = vpop.f32.mrf.mxu0
      %3618 = vmatprep.mubr.f32.mxu0 0.0
      %3619 = vmatmul.mubr.f32.gmra.mxu0 %v3399
      %v3620 = vpop.f32.mrf.mxu0
      %v3621 = vadd.f32 0.0, %v3620
      %v3622 = vpop.f32.mrf.mxu0
      %3623 = vmatprep.mubr.f32.mxu0 0.0
      %3624 = vmatmul.mubr.f32.gmra.mxu0 %v3402
      %v3625 = vpop.f32.mrf.mxu0
      %v3626 = vadd.f32 0.0, %v3625
      %v3627 = vpop.f32.mrf.mxu0
      %3628 = vmatprep.mubr.f32.mxu0 0.0
      %3629 = vmatmul.mubr.f32.gmra.mxu0 %v3405
      %v3630 = vpop.f32.mrf.mxu0
      %v3631 = vadd.f32 0.0, %v3630
      %v3632 = vpop.f32.mrf.mxu0
      %3633 = vmatprep.mubr.f32.mxu0 0.0
      %3634 = vmatmul.mubr.f32.gmra.mxu0 %v3408
      %v3635 = vpop.f32.mrf.mxu0
      %v3636 = vadd.f32 0.0, %v3635
      %v3637 = vpop.f32.mrf.mxu0
      %3638 = vmatprep.mubr.f32.mxu0 0.0
      %3639 = vmatmul.mubr.f32.gmra.mxu0 %v3411
      %v3640 = vpop.f32.mrf.mxu0
      %v3641 = vadd.f32 0.0, %v3640
      %v3642 = vpop.f32.mrf.mxu0
      %3643 = vmatprep.mubr.f32.mxu0 0.0
      %3644 = vmatmul.mubr.f32.gmra.mxu0 %v3414
      %v3645 = vpop.f32.mrf.mxu0
      %v3646 = vadd.f32 0.0, %v3645
      %v3647 = vpop.f32.mrf.mxu0
      %3648 = vmatprep.mubr.f32.mxu0 0.0
      %3649 = vmatmul.mubr.f32.gmra.mxu0 %v3417
      %v3650 = vpop.f32.mrf.mxu0
      %v3651 = vadd.f32 0.0, %v3650
      %v3652 = vpop.f32.mrf.mxu0
      %3653 = vmatprep.mubr.f32.mxu0 0.0
      %3654 = vmatmul.mubr.f32.gmra.mxu0 %v3420
      %v3655 = vpop.f32.mrf.mxu0
      %v3656 = vadd.f32 0.0, %v3655
      %v3657 = vpop.f32.mrf.mxu0
      %3658 = vmatprep.mubr.f32.mxu0 0.0
      %3659 = vmatmul.mubr.f32.gmra.mxu0 %v3423
      %v3660 = vpop.f32.mrf.mxu0
      %v3661 = vadd.f32 0.0, %v3660
      %v3662 = vpop.f32.mrf.mxu0
      %3663 = vmatprep.mubr.f32.mxu0 0.0
      %3664 = vmatmul.mubr.f32.gmra.mxu0 %v3426
      %v3665 = vpop.f32.mrf.mxu0
      %v3666 = vadd.f32 0.0, %v3665
      %v3667 = vpop.f32.mrf.mxu0
      %3668 = vmatprep.mubr.f32.mxu0 0.0
      %3669 = vmatmul.mubr.f32.gmra.mxu0 %v3429
      %v3670 = vpop.f32.mrf.mxu0
      %v3671 = vadd.f32 0.0, %v3670
      %v3672 = vpop.f32.mrf.mxu0
      %3673 = vmatprep.mubr.f32.mxu0 0.0
      %3674 = vmatmul.mubr.f32.gmra.mxu0 %v3432
      %v3675 = vpop.f32.mrf.mxu0
      %v3676 = vadd.f32 0.0, %v3675
      %v3677 = vpop.f32.mrf.mxu0
      %3678 = vmatprep.mubr.f32.mxu0 0.0
      %3679 = vmatmul.mubr.f32.gmra.mxu0 %v3435
      %v3680 = vpop.f32.mrf.mxu0
      %v3681 = vadd.f32 0.0, %v3680
      %v3682 = vpop.f32.mrf.mxu0
      %3683 = vmatprep.mubr.f32.mxu0 0.0
      %3684 = vmatmul.mubr.f32.gmra.mxu0 %v3438
      %v3685 = vpop.f32.mrf.mxu0
      %v3686 = vadd.f32 0.0, %v3685
      %v3687 = vpop.f32.mrf.mxu0
      %3688 = vmatprep.mubr.f32.mxu0 0.0
      %3689 = vmatmul.mubr.f32.gmra.mxu0 %v3441
      %v3690 = vpop.f32.mrf.mxu0
      %v3691 = vadd.f32 0.0, %v3690
      %v3692 = vpop.f32.mrf.mxu0
      %3693 = vmatprep.mubr.f32.mxu0 0.0
      %3694 = vmatmul.mubr.f32.gmra.mxu0 %v3444
      %v3695 = vpop.f32.mrf.mxu0
      %v3696 = vadd.f32 0.0, %v3695
      %v3697 = vpop.f32.mrf.mxu0
      %3698 = vmatprep.mubr.f32.mxu0 0.0
      %3699 = vmatmul.mubr.f32.gmra.mxu0 %v3447
      %v3700 = vpop.f32.mrf.mxu0
      %v3701 = vadd.f32 0.0, %v3700
      %v3702 = vpop.f32.mrf.mxu0
      %3703 = vmatprep.mubr.f32.mxu0 0.0
      %3704 = vmatmul.mubr.f32.gmra.mxu0 %v3450
      %v3705 = vpop.f32.mrf.mxu0
      %v3706 = vadd.f32 0.0, %v3705
      %v3707 = vpop.f32.mrf.mxu0
      %3708 = vmatprep.mubr.f32.mxu0 0.0
      %3709 = vmatmul.mubr.f32.gmra.mxu0 %v3453
      %v3710 = vpop.f32.mrf.mxu0
      %v3711 = vadd.f32 0.0, %v3710
      %v3712 = vpop.f32.mrf.mxu0
      %3713 = vmatprep.mubr.f32.mxu0 0.0
      %3714 = vmatmul.mubr.f32.gmra.mxu0 %v3456
      %v3715 = vpop.f32.mrf.mxu0
      %v3716 = vadd.f32 0.0, %v3715
      %v3717 = vpop.f32.mrf.mxu0
      %3718 = vmatprep.mubr.f32.mxu0 0.0
      %3719 = vmatmul.mubr.f32.gmra.mxu0 %v3459
      %v3720 = vpop.f32.mrf.mxu0
      %v3721 = vadd.f32 0.0, %v3720
      %v3722 = vpop.f32.mrf.mxu0
      %3723 = vmatprep.mubr.f32.mxu0 0.0
      %3724 = vmatmul.mubr.f32.gmra.mxu0 %v3462
      %v3725 = vpop.f32.mrf.mxu0
      %v3726 = vadd.f32 0.0, %v3725
      %v3727 = vpop.f32.mrf.mxu0
      %3728 = vmatprep.mubr.f32.mxu0 0.0
      %3729 = vmatmul.mubr.f32.gmra.mxu0 %v3465
      %v3730 = vpop.f32.mrf.mxu0
      %v3731 = vadd.f32 0.0, %v3730
      %v3732 = vpop.f32.mrf.mxu0
      %3733 = vmatprep.mubr.f32.mxu0 0.0
      %3734 = vmatmul.mubr.f32.gmra.mxu0 %v3468
      %v3735 = vpop.f32.mrf.mxu0
      %v3736 = vadd.f32 0.0, %v3735
      %v3737 = vpop.f32.mrf.mxu0
      %3738 = vmatprep.mubr.f32.mxu0 0.0
      %3739 = vmatmul.mubr.f32.gmra.mxu0 %v3471
      %v3740 = vpop.f32.mrf.mxu0
      %v3741 = vadd.f32 0.0, %v3740
      %v3742 = vpop.f32.mrf.mxu0
      %3743 = vmatprep.mubr.f32.mxu0 0.0
      %3744 = vmatmul.mubr.f32.gmra.mxu0 %v3474
      %v3745 = vpop.f32.mrf.mxu0
      %v3746 = vadd.f32 0.0, %v3745
      %v3747 = vpop.f32.mrf.mxu0
      %3748 = vmatprep.mubr.f32.mxu0 0.0
      %3749 = vmatmul.mubr.f32.gmra.mxu0 %v3477
      %v3750 = vpop.f32.mrf.mxu0
      %v3751 = vadd.f32 0.0, %v3750
      %v3752 = vpop.f32.mrf.mxu0
      %3753 = vmatprep.mubr.f32.mxu0 0.0
      %3754 = vmatmul.mubr.f32.gmra.mxu0 %v3480
      %v3755 = vpop.f32.mrf.mxu0
      %v3756 = vadd.f32 0.0, %v3755
      %v3757 = vpop.f32.mrf.mxu0
      %3758 = vmatprep.mubr.f32.mxu0 0.0
      %3759 = vmatmul.mubr.f32.gmra.mxu0 %v3483
      %v3760 = vpop.f32.mrf.mxu0
      %v3761 = vadd.f32 0.0, %v3760
      %v3762 = vpop.f32.mrf.mxu0
      %3763 = vmatprep.mubr.f32.mxu0 0.0
      %3764 = vmatmul.mubr.f32.gmra.mxu0 %v3486
      %v3765 = vpop.f32.mrf.mxu0
      %v3766 = vadd.f32 0.0, %v3765
      %v3767 = vpop.f32.mrf.mxu0
      %3768 = vmatprep.mubr.f32.mxu0 0.0
      %3769 = vmatmul.mubr.f32.gmra.mxu0 %v3489
      %v3770 = vpop.f32.mrf.mxu0
      %v3771 = vadd.f32 0.0, %v3770
      %v3772 = vpop.f32.mrf.mxu0
      %3773 = vmatprep.mubr.f32.mxu0 0.0
      %3774 = vmatmul.mubr.f32.gmra.mxu0 %v3492
      %v3775 = vpop.f32.mrf.mxu0
      %v3776 = vadd.f32 0.0, %v3775
      %v3777 = vpop.f32.mrf.mxu0
      %3778 = vmatprep.mubr.f32.mxu0 0.0
      %3779 = vmatmul.mubr.f32.gmra.mxu0 %v3495
      %v3780 = vpop.f32.mrf.mxu0
      %v3781 = vadd.f32 0.0, %v3780
      %v3782 = vpop.f32.mrf.mxu0
      %3783 = vmatprep.mubr.f32.mxu0 0.0
      %3784 = vmatmul.mubr.f32.gmra.mxu0 %v3498
      %v3785 = vpop.f32.mrf.mxu0
      %v3786 = vadd.f32 0.0, %v3785
      %v3787 = vpop.f32.mrf.mxu0
      %3788 = vmatprep.mubr.f32.mxu0 0.0
      %3789 = vmatmul.mubr.f32.gmra.mxu0 %v3501
      %v3790 = vpop.f32.mrf.mxu0
      %v3791 = vadd.f32 0.0, %v3790
      %v3792 = vpop.f32.mrf.mxu0
      %3793 = vmatprep.mubr.f32.mxu0 0.0
      %3794 = vmatmul.mubr.f32.gmra.mxu0 %v3504
      %v3795 = vpop.f32.mrf.mxu0
      %v3796 = vadd.f32 0.0, %v3795
      %v3797 = vpop.f32.mrf.mxu0
      %3798 = vmatprep.mubr.f32.mxu0 0.0
      %3799 = vmatmul.mubr.f32.gmra.mxu0 %v3507
      %v3800 = vpop.f32.mrf.mxu0
      %v3801 = vadd.f32 0.0, %v3800
      %v3802 = vpop.f32.mrf.mxu0
      %3803 = vmatprep.mubr.f32.mxu0 0.0
      %3804 = vmatmul.mubr.f32.gmra.mxu0 %v3510
      %v3805 = vpop.f32.mrf.mxu0
      %v3806 = vadd.f32 0.0, %v3805
      %v3807 = vpop.f32.mrf.mxu0
      %3808 = vmatprep.mubr.f32.mxu0 0.0
      %3809 = vmatmul.mubr.f32.gmra.mxu0 %v3513
      %v3810 = vpop.f32.mrf.mxu0
      %v3811 = vadd.f32 0.0, %v3810
      %v3812 = vpop.f32.mrf.mxu0
      %3813 = vmatprep.mubr.f32.mxu0 0.0
      %3814 = vmatmul.mubr.f32.gmra.mxu0 %v3516
      %v3815 = vpop.f32.mrf.mxu0
      %v3816 = vadd.f32 0.0, %v3815
      %v3817 = vpop.f32.mrf.mxu0
      %3818 = vmatprep.mubr.f32.mxu0 0.0
      %3819 = vmatmul.mubr.f32.gmra.mxu0 %v3519
      %v3820 = vpop.f32.mrf.mxu0
      %v3821 = vadd.f32 0.0, %v3820
      %v3822 = vpop.f32.mrf.mxu0
      %3823 = vmatprep.mubr.f32.mxu0 0.0
      %3824 = vmatmul.mubr.f32.gmra.mxu0 %v3522
      %v3825 = vpop.f32.mrf.mxu0
      %v3826 = vadd.f32 0.0, %v3825
      %v3827 = vpop.f32.mrf.mxu0
      %3828 = vmatprep.mubr.f32.mxu0 0.0
      %3829 = vmatmul.mubr.f32.gmra.mxu0 %v3525
      %v3830 = vpop.f32.mrf.mxu0
      %v3831 = vadd.f32 0.0, %v3830
      %v3832 = vpop.f32.mrf.mxu0
      %3833 = vmatprep.mubr.f32.mxu0 0.0
      %3834 = vmatmul.mubr.f32.gmra.mxu0 %v3528
      %v3835 = vpop.f32.mrf.mxu0
      %v3836 = vadd.f32 0.0, %v3835
      %v3837 = vpop.f32.mrf.mxu0
      %3838 = vdwg.mxu0
      %3839 = vst [vmem:[%s224] sm:$0xff] %v3601
      %3840 = vst [vmem:[%s224 + $0x8] sm:$0xff] %v3606
      %3841 = vst [vmem:[%s224 + $0x10] sm:$0xff] %v3611
      %3842 = vst [vmem:[%s224 + $0x18] sm:$0xff] %v3616
      %3843 = vst [vmem:[%s224 + $0x20] sm:$0xff] %v3621
      %3844 = vst [vmem:[%s224 + $0x28] sm:$0xff] %v3626
      %3845 = vst [vmem:[%s224 + $0x30] sm:$0xff] %v3631
      %3846 = vst [vmem:[%s224 + $0x38] sm:$0xff] %v3636
      %3847 = vst [vmem:[%s224 + $0x40] sm:$0xff] %v3641
      %3848 = vst [vmem:[%s224 + $0x48] sm:$0xff] %v3646
      %3849 = vst [vmem:[%s224 + $0x50] sm:$0xff] %v3651
      %3850 = vst [vmem:[%s224 + $0x58] sm:$0xff] %v3656
      %3851 = vst [vmem:[%s224 + $0x60] sm:$0xff] %v3661
      %3852 = vst [vmem:[%s224 + $0x68] sm:$0xff] %v3666
      %3853 = vst [vmem:[%s224 + $0x70] sm:$0xff] %v3671
      %3854 = vst [vmem:[%s224 + $0x78] sm:$0xff] %v3676
      %3855 = vst [vmem:[%s224 + $0x80] sm:$0xff] %v3681
      %3856 = vst [vmem:[%s224 + $0x88] sm:$0xff] %v3686
      %3857 = vst [vmem:[%s224 + $0x90] sm:$0xff] %v3691
      %3858 = vst [vmem:[%s224 + $0x98] sm:$0xff] %v3696
      %3859 = vst [vmem:[%s224 + $0xa0] sm:$0xff] %v3701
      %3860 = vst [vmem:[%s224 + $0xa8] sm:$0xff] %v3706
      %3861 = vst [vmem:[%s224 + $0xb0] sm:$0xff] %v3711
      %3862 = vst [vmem:[%s224 + $0xb8] sm:$0xff] %v3716
      %3863 = vst [vmem:[%s224 + $0xc0] sm:$0xff] %v3721
      %3864 = vst [vmem:[%s224 + $0xc8] sm:$0xff] %v3726
      %3865 = vst [vmem:[%s224 + $0xd0] sm:$0xff] %v3731
      %3866 = vst [vmem:[%s224 + $0xd8] sm:$0xff] %v3736
      %3867 = vst [vmem:[%s224 + $0xe0] sm:$0xff] %v3741
      %3868 = vst [vmem:[%s224 + $0xe8] sm:$0xff] %v3746
      %3869 = vst [vmem:[%s224 + $0xf0] sm:$0xff] %v3751
      %3870 = vst [vmem:[%s224 + $0xf8] sm:$0xff] %v3756
      %3871 = vst [vmem:[%s224 + $0x100] sm:$0xff] %v3761
      %3872 = vst [vmem:[%s224 + $0x108] sm:$0xff] %v3766
      %3873 = vst [vmem:[%s224 + $0x110] sm:$0xff] %v3771
      %3874 = vst [vmem:[%s224 + $0x118] sm:$0xff] %v3776
      %3875 = vst [vmem:[%s224 + $0x120] sm:$0xff] %v3781
      %3876 = vst [vmem:[%s224 + $0x128] sm:$0xff] %v3786
      %3877 = vst [vmem:[%s224 + $0x130] sm:$0xff] %v3791
      %3878 = vst [vmem:[%s224 + $0x138] sm:$0xff] %v3796
      %3879 = vst [vmem:[%s224 + $0x140] sm:$0xff] %v3801
      %3880 = vst [vmem:[%s224 + $0x148] sm:$0xff] %v3806
      %3881 = vst [vmem:[%s224 + $0x150] sm:$0xff] %v3811
      %3882 = vst [vmem:[%s224 + $0x158] sm:$0xff] %v3816
      %3883 = vst [vmem:[%s224 + $0x160] sm:$0xff] %v3821
      %3884 = vst [vmem:[%s224 + $0x168] sm:$0xff] %v3826
      %3885 = vst [vmem:[%s224 + $0x170] sm:$0xff] %v3831
      %3886 = vst [vmem:[%s224 + $0x178] sm:$0xff] %v3836
      %p3887 = scmp.lt.s32.totalorder %s16, 1
      %s3888 = scalar_select %p3887, %s16, 1
      %s3889 = smul.addr %s3888, 48
      %s3890 = smul.addr %s3889, 8
      %s3891 = scalar_lea.vmem %s5, %s3890
      // Predicated region
      $region41: #{basic_block_forward.3} parent=39 // pred_check
        %p3892 = pneg %p144
      $region42: #{basic_block_forward.3} parent=39 // pred_check_branch
        %3894 = sbr.rel (%p3892) target = $region44
      $region43: #{basic_block_forward.3} parent=39 // pred_region
        _
      $region44: #{basic_block_forward.3} parent=39 // pred_fallthru
        _
    $region40: #{basic_block_forward.3} parent=5 // pred_fallthru
      _
    %p3895 = scmp.le.s32.totalorder 2, %s11
    // Predicated region
    $region45: #{basic_block_forward.3} parent=5 // pred_check
      %p3896 = pneg %p3895
    $region46: #{basic_block_forward.3} parent=5 // pred_check_branch
      %3898 = sbr.rel (%p3896) target = $region48
    $region47: #{basic_block_forward.3} parent=5 // pred_region
      %s3899 = ssub.s32 %s11, 2
      // Predicated region
      $region49: #{basic_block_forward.3} parent=47 // pred_check
        %p3900 = pneg %p150
      $region50: #{basic_block_forward.3} parent=47 // pred_check_branch
        %3902 = sbr.rel (%p3900) target = $region52
      $region51: #{basic_block_forward.3} parent=47 // pred_region
        %p3903 = scmp.lt.s32.totalorder %s17, 1
        %s3904 = scalar_select %p3903, %s17, 1
        %s3905 = smul.addr %s3904, 48
        %s3906 = smul.addr %s3905, 8
        %s3907 = scalar_lea.vmem %s5, %s3906
      $region52: #{basic_block_forward.3} parent=47 // pred_fallthru
        _
    $region48: #{basic_block_forward.3} parent=5 // pred_fallthru
      _
  $region6: #{basic_block_forward.3} parent=0 // loop_footer
    %s15 = sadd.s32 1, %s11
  $region7: #{basic_block_forward.3} parent=0 // loop_footer_branch
    %10 = sbr.rel target = $region3
  $region8: #{basic_block_forward.3} parent=0 // loop_exit
    _

</llo_original>
